<compile_context>
chip_gen: v7x
topology: tpu7x:2x2x1
jax: 0.10.0
libtpu: 0.0.40
codegen_flags: <defaults>
</compile_context>

<pallas_src>
import functools

import jax
import jax.numpy as jnp
from jax.experimental import pallas as pl
from jax.experimental.pallas import tpu as pltpu

_LANE = 128


def _round_up(n, m):
    return ((n + m - 1) // m) * m


# ---------------------------- Pallas kernels ----------------------------

def _conv_bn_relu_kernel(p_ref, w_ref, b_ref, o_ref):
    # p_ref: (TM, Kpad) bf16 im2col patch rows (batch folded into M, K padded
    #        to a lane multiple).  w_ref: (Kpad, 128) bf16 conv weights with the
    #        eval-BN scale folded in and Cout zero-padded to 128 lanes.
    # b_ref: (1, 128) f32 folded BN shift.  o_ref: (TM, 128) bf16 (lane-dense).
    acc = jnp.dot(p_ref[...], w_ref[...], preferred_element_type=jnp.float32)
    o_ref[...] = jnp.maximum(acc + b_ref[...], 0.0).astype(o_ref.dtype)


def conv_bn_relu(patches, w_mat, shift, *, tm):
    # patches: (M, Kpad) with M = B*Ho*Wo already zero-padded to a multiple of tm.
    M, Kpad = patches.shape
    Coutp = w_mat.shape[1]
    assert M % tm == 0 and Kpad % _LANE == 0 and Coutp == _LANE
    return pl.pallas_call(
        _conv_bn_relu_kernel,
        out_shape=jax.ShapeDtypeStruct((M, Coutp), jnp.bfloat16),
        grid_spec=pltpu.PrefetchScalarGridSpec(
            num_scalar_prefetch=0,
            grid=(M // tm,),
            in_specs=[
                pl.BlockSpec((tm, Kpad), lambda m: (m, 0)),
                pl.BlockSpec((Kpad, Coutp), lambda m: (0, 0)),
                pl.BlockSpec((1, Coutp), lambda m: (0, 0)),
            ],
            out_specs=pl.BlockSpec((tm, Coutp), lambda m: (m, 0)),
        ),
        compiler_params=pltpu.CompilerParams(
            dimension_semantics=("parallel",)),
    )(patches, w_mat, shift)


def _classifier_kernel(x_ref, w_ref, b_ref, o_ref):
    # Accumulate directly into the resident output block (its block index is
    # constant over the reduction axis), no VMEM scratch needed.
    k = pl.program_id(0)

    @pl.when(k == 0)
    def _():
        o_ref[...] = jnp.broadcast_to(b_ref[...], o_ref.shape)

    o_ref[...] += jnp.dot(x_ref[...], w_ref[...],
                          preferred_element_type=jnp.float32)


def classifier(x_flat, w_col, b_col):
    # x_flat: (B, K) bf16; w_col: (K, 128) bf16 collapsed fc1@fc2; b_col: (1, 128) f32.
    B, K = x_flat.shape
    Cpad = w_col.shape[1]
    tk = 4096 if K % 4096 == 0 else K          # pure weight streaming; big tiles
    assert K % tk == 0 and Cpad == _LANE
    return pl.pallas_call(
        _classifier_kernel,
        out_shape=jax.ShapeDtypeStruct((B, Cpad), jnp.float32),
        grid_spec=pltpu.PrefetchScalarGridSpec(
            num_scalar_prefetch=0,
            grid=(K // tk,),
            in_specs=[
                pl.BlockSpec((B, tk), lambda k: (0, k)),
                pl.BlockSpec((tk, Cpad), lambda k: (k, 0)),
                pl.BlockSpec((1, Cpad), lambda k: (0, 0)),
            ],
            out_specs=pl.BlockSpec((B, Cpad), lambda k: (0, 0)),
        ),
        compiler_params=pltpu.CompilerParams(
            dimension_semantics=("arbitrary",)),
    )(x_flat, w_col, b_col)


# ------------------------------ JAX glue ------------------------------

def _im2col(x, kh, kw, stride, pad):
    """x: (B,H,W,C) NHWC -> patches (B*Ho*Wo, kh*kw*C); K index = (i*kw+j)*C+c."""
    B, H, W, C = x.shape
    xp = jnp.pad(x, ((0, 0), (pad, pad), (pad, pad), (0, 0)))
    Ho = (H + 2 * pad - kh) // stride + 1
    Wo = (W + 2 * pad - kw) // stride + 1
    taps = []
    for i in range(kh):
        for j in range(kw):
            taps.append(xp[:, i:i + stride * Ho:stride,
                           j:j + stride * Wo:stride, :])
    p = jnp.stack(taps, axis=3).reshape(B * Ho * Wo, kh * kw * C)
    return p, Ho, Wo


def _conv_w_to_mat(w_oihw):
    # PyTorch (Cout, Cin, KH, KW) -> (KH*KW*Cin, Cout), matching im2col ordering.
    Cout, Cin, KH, KW = w_oihw.shape
    return jnp.transpose(w_oihw, (2, 3, 1, 0)).reshape(KH * KW * Cin, Cout)


def _pick_tm(M, tm_max=512):
    """Largest reasonable M tile, but always >=2 grid steps so ('parallel',)
    can shard across v7x's 2 TensorCores even at tiny batch."""
    if M <= 16:
        return _round_up(M, 8)
    if M >= 2 * tm_max:
        return tm_max
    return _round_up((M + 1) // 2, 8)


def prepare_inference_params(params, eps=1e-5):
    """One-time prep: fold eval-mode BN into the conv weights (then cast to bf16,
    lane-pad Cout to 128 and K to a lane multiple); collapse fc1+fc2."""
    prep = {}
    for name in ("conv1", "conv2", "conv3"):
        p = params[name]
        inv = p["gamma"] / jnp.sqrt(p["var"] + eps)
        # y = inv*(conv(x)+b-mean)+beta  ==  x @ (W*inv) + (beta+(b-mean)*inv)
        w_mat = _conv_w_to_mat(p["w"]) * inv[None, :]
        shift = p["beta"] + (p["b"] - p["mean"]) * inv
        K, Cout = w_mat.shape
        Kpad = _round_up(K, _LANE)
        w_mat = jnp.pad(w_mat, ((0, Kpad - K), (0, _LANE - Cout)))
        shift = jnp.pad(shift, (0, _LANE - Cout))
        prep[name] = {"w": w_mat.astype(jnp.bfloat16),
                      "shift": shift[None, :].astype(jnp.float32)}

    # Classifier: Linear(8192->1024) -> Dropout (identity at eval) -> Linear(1024->C)
    # has no nonlinearity in between, so it collapses to a single affine map.
    # TODO(synk): training-mode Dropout(0.7) / BatchNorm batch statistics not implemented.
    w1 = params["fc1"]["w"].T            # (8192, 1024)
    b1 = params["fc1"]["b"]              # (1024,)
    w2 = params["fc2"]["w"].T            # (1024, C)
    b2 = params["fc2"]["b"]              # (C,)
    wc = w1 @ w2                         # (8192, C), folded in f32
    bc = b1 @ w2 + b2                    # (C,)
    C = wc.shape[1]
    # Reorder rows from PyTorch's NCHW flatten index (c*64 + h*8 + w) to our
    # NHWC flatten index ((h*8 + w)*128 + c) so no transpose is needed after conv3.
    wc = wc.reshape(128, 8, 8, C).transpose(1, 2, 0, 3).reshape(128 * 8 * 8, C)
    # Pad the class dim to a full 128-lane width for dense DMA / unmasked stores.
    wc = jnp.pad(wc, ((0, 0), (0, _LANE - C)))
    bc = jnp.pad(bc, (0, _LANE - C))
    prep["cls"] = {"w": wc.astype(jnp.bfloat16),
                   "b": bc[None, :].astype(jnp.float32)}
    return prep


@functools.partial(jax.jit, static_argnames=("image_width", "num_classes"))
def cnn2d_nopooling_forward(prep, x, statistic, *, image_width=60, num_classes=12):
    # `statistic` is accepted for API parity; the PyTorch forward ignores it.
    del statistic
    B = x.shape[0]
    # x.view(B,1,W,W) in NCHW with C=1 is the same buffer as NHWC (B,W,W,1).
    h = x.reshape(B, image_width, image_width, 1).astype(jnp.bfloat16)

    for name, k, s, pad, cout in (("conv1", 5, 2, 1, 32),
                                  ("conv2", 3, 2, 1, 64),
                                  ("conv3", 3, 2, 1, 128)):
        # TODO(synk): im2col patch extraction stays in XLA; fusing it into the
        # Pallas kernel (strided VMEM taps) would remove the kh*kw HBM read
        # amplification, which matters at large batch.
        p, Ho, Wo = _im2col(h, k, k, s, pad)
        M, K = p.shape
        Kpad = prep[name]["w"].shape[0]
        tm = _pick_tm(M)
        Mpad = _round_up(M, tm)
        p = jnp.pad(p, ((0, Mpad - M), (0, Kpad - K)))
        y = conv_bn_relu(p, prep[name]["w"], prep[name]["shift"], tm=tm)
        h = y[:M, :cout].reshape(B, Ho, Wo, cout)

    # NHWC flatten; the collapsed classifier weights were pre-permuted to match,
    # so no transpose is needed here.
    feat = h.reshape(B, -1)                       # (B, 128*8*8), bf16
    out = classifier(feat, prep["cls"]["w"], prep["cls"]["b"])
    return out[:, :num_classes]


def init_params(key, num_classes=12):
    ks = jax.random.split(key, 5)

    def conv_p(k, cout, cin, ksz):
        kw, kb = jax.random.split(k)
        return {
            "w": 0.05 * jax.random.normal(kw, (cout, cin, ksz, ksz), jnp.float32),
            "b": 0.05 * jax.random.normal(kb, (cout,), jnp.float32),
            "gamma": jnp.ones((cout,), jnp.float32),      # BatchNorm defaults
            "beta": jnp.zeros((cout,), jnp.float32),
            "mean": jnp.zeros((cout,), jnp.float32),
            "var": jnp.ones((cout,), jnp.float32),
        }

    def lin_p(k, out_f, in_f):
        kw, kb = jax.random.split(k)
        return {"w": 0.02 * jax.random.normal(kw, (out_f, in_f), jnp.float32),
                "b": 0.02 * jax.random.normal(kb, (out_f,), jnp.float32)}

    return {
        "conv1": conv_p(ks[0], 32, 1, 5),
        "conv2": conv_p(ks[1], 64, 32, 3),
        "conv3": conv_p(ks[2], 128, 64, 3),
        "fc1": lin_p(ks[3], 1024, 128 * 8 * 8),
        "fc2": lin_p(ks[4], num_classes, 1024),
    }


if __name__ == "__main__":
    B, image_width, num_classes = 2, 60, 12
    key = jax.random.PRNGKey(0)
    k_x, k_s, k_p = jax.random.split(key, 3)
    x = jax.random.uniform(k_x, (B, image_width * image_width), jnp.float32)
    statistic = jax.random.uniform(k_s, (B, 26), jnp.float32)
    params = init_params(k_p, num_classes=num_classes)

    # One-time parameter prep (BN fold + fc1/fc2 collapse + lane padding + bf16 cast).
    prep = jax.tree_util.tree_map(jax.block_until_ready,
                                  prepare_inference_params(params))

    out = cnn2d_nopooling_forward(prep, x, statistic,
                                  image_width=image_width,
                                  num_classes=num_classes)
    out = jax.block_until_ready(out)
    assert out.shape == (B, num_classes)
    assert bool(jnp.all(jnp.isfinite(out)))
    print("KERNEL_OK")
</pallas_src>

<mosaic_0001>
module attributes {stable_mosaic.version = 11 : i64} {
  func.func @_conv_bn_relu_kernel(%arg0: i32, %arg1: memref<512x128xbf16, #tpu.memory_space<vmem>>, %arg2: memref<128x128xbf16, #tpu.memory_space<vmem>>, %arg3: memref<1x128xf32, #tpu.memory_space<vmem>>, %arg4: memref<512x128xbf16, #tpu.memory_space<vmem>>) attributes {dimension_semantics = [#tpu.dimension_semantics<parallel>], iteration_bounds = array<i64: 4>, scalar_prefetch = 0 : i64, scratch_operands = 0 : i64, tpu.core_type = #tpu.core_type<tc>, window_params = [{transform_indices = @transform_0, window_bounds = array<i64: 512, 128>}, {pipeline_mode = #tpu.pipeline_mode<synchronous>, transform_indices = @transform_1, window_bounds = array<i64: 128, 128>}, {pipeline_mode = #tpu.pipeline_mode<synchronous>, transform_indices = @transform_2, window_bounds = array<i64: 1, 128>}, {transform_indices = @transform_3, window_bounds = array<i64: 512, 128>}]} {
    %c0 = arith.constant 0 : index
    %c0_0 = arith.constant 0 : index
    %0 = vector.load %arg1[%c0, %c0_0] : memref<512x128xbf16, #tpu.memory_space<vmem>>, vector<512x128xbf16>
    %c0_1 = arith.constant 0 : index
    %c0_2 = arith.constant 0 : index
    %1 = vector.load %arg2[%c0_1, %c0_2] : memref<128x128xbf16, #tpu.memory_space<vmem>>, vector<128x128xbf16>
    %cst = arith.constant dense<0.000000e+00> : vector<512x128xf32>
    %2 = tpu.matmul %0, %1, %cst {dimension_numbers = #tpu.dot_dimension_numbers<[1], [0], [0], [1], [0, 0, 1, 1], [], []>} : vector<512x128xbf16>, vector<128x128xbf16>, vector<512x128xf32> -> vector<512x128xf32>
    %c0_3 = arith.constant 0 : index
    %c0_4 = arith.constant 0 : index
    %3 = vector.load %arg3[%c0_3, %c0_4] : memref<1x128xf32, #tpu.memory_space<vmem>>, vector<1x128xf32>
    %4 = vector.broadcast %3 : vector<1x128xf32> to vector<512x128xf32>
    %5 = arith.addf %2, %4 : vector<512x128xf32>
    %cst_5 = arith.constant 0.000000e+00 : f32
    %6 = vector.broadcast %cst_5 : f32 to vector<512x128xf32>
    %7 = arith.maximumf %5, %6 : vector<512x128xf32>
    %8 = arith.truncf %7 : vector<512x128xf32> to vector<512x128xbf16>
    %c0_6 = arith.constant 0 : index
    %c0_7 = arith.constant 0 : index
    %9 = vector.load %arg4[%c0_6, %c0_7] : memref<512x128xbf16, #tpu.memory_space<vmem>>, vector<512x128xbf16>
    tpu.vector_store %arg4[%c0_6, %c0_7], %8 {strides = array<i32>} : memref<512x128xbf16, #tpu.memory_space<vmem>>, vector<512x128xbf16>,
    return
  }
  func.func @transform_0(%arg0: i32) -> (i32, i32) {
    %c0_i32 = arith.constant 0 : i32
    %c0_i32_0 = arith.constant 0 : i32
    return %arg0, %c0_i32 : i32, i32
  }
  func.func @transform_1(%arg0: i32) -> (i32, i32) {
    %c0_i32 = arith.constant 0 : i32
    %c0_i32_0 = arith.constant 0 : i32
    %c0_i32_1 = arith.constant 0 : i32
    return %c0_i32, %c0_i32_0 : i32, i32
  }
  func.func @transform_2(%arg0: i32) -> (i32, i32) {
    %c0_i32 = arith.constant 0 : i32
    %c0_i32_0 = arith.constant 0 : i32
    %c0_i32_1 = arith.constant 0 : i32
    return %c0_i32, %c0_i32_0 : i32, i32
  }
  func.func @transform_3(%arg0: i32) -> (i32, i32) {
    %c0_i32 = arith.constant 0 : i32
    %c0_i32_0 = arith.constant 0 : i32
    return %arg0, %c0_i32 : i32, i32
  }
}

module attributes {stable_mosaic.version = 11 : i64} {
  func.func @_conv_bn_relu_kernel(%arg0: i32, %arg1: memref<232x384xbf16, #tpu.memory_space<vmem>>, %arg2: memref<384x128xbf16, #tpu.memory_space<vmem>>, %arg3: memref<1x128xf32, #tpu.memory_space<vmem>>, %arg4: memref<232x128xbf16, #tpu.memory_space<vmem>>) attributes {dimension_semantics = [#tpu.dimension_semantics<parallel>], iteration_bounds = array<i64: 2>, scalar_prefetch = 0 : i64, scratch_operands = 0 : i64, tpu.core_type = #tpu.core_type<tc>, window_params = [{transform_indices = @transform_0, window_bounds = array<i64: 232, 384>}, {pipeline_mode = #tpu.pipeline_mode<synchronous>, transform_indices = @transform_1, window_bounds = array<i64: 384, 128>}, {pipeline_mode = #tpu.pipeline_mode<synchronous>, transform_indices = @transform_2, window_bounds = array<i64: 1, 128>}, {transform_indices = @transform_3, window_bounds = array<i64: 232, 128>}]} {
    %c0 = arith.constant 0 : index
    %c0_0 = arith.constant 0 : index
    %0 = vector.load %arg1[%c0, %c0_0] : memref<232x384xbf16, #tpu.memory_space<vmem>>, vector<232x384xbf16>
    %c0_1 = arith.constant 0 : index
    %c0_2 = arith.constant 0 : index
    %1 = vector.load %arg2[%c0_1, %c0_2] : memref<384x128xbf16, #tpu.memory_space<vmem>>, vector<384x128xbf16>
    %cst = arith.constant dense<0.000000e+00> : vector<232x128xf32>
    %2 = tpu.matmul %0, %1, %cst {dimension_numbers = #tpu.dot_dimension_numbers<[1], [0], [0], [1], [0, 0, 1, 1], [], []>} : vector<232x384xbf16>, vector<384x128xbf16>, vector<232x128xf32> -> vector<232x128xf32>
    %c0_3 = arith.constant 0 : index
    %c0_4 = arith.constant 0 : index
    %3 = vector.load %arg3[%c0_3, %c0_4] : memref<1x128xf32, #tpu.memory_space<vmem>>, vector<1x128xf32>
    %4 = vector.broadcast %3 : vector<1x128xf32> to vector<232x128xf32>
    %5 = arith.addf %2, %4 : vector<232x128xf32>
    %cst_5 = arith.constant 0.000000e+00 : f32
    %6 = vector.broadcast %cst_5 : f32 to vector<232x128xf32>
    %7 = arith.maximumf %5, %6 : vector<232x128xf32>
    %8 = arith.truncf %7 : vector<232x128xf32> to vector<232x128xbf16>
    %c0_6 = arith.constant 0 : index
    %c0_7 = arith.constant 0 : index
    %9 = vector.load %arg4[%c0_6, %c0_7] : memref<232x128xbf16, #tpu.memory_space<vmem>>, vector<232x128xbf16>
    tpu.vector_store %arg4[%c0_6, %c0_7], %8 {strides = array<i32>} : memref<232x128xbf16, #tpu.memory_space<vmem>>, vector<232x128xbf16>,
    return
  }
  func.func @transform_0(%arg0: i32) -> (i32, i32) {
    %c0_i32 = arith.constant 0 : i32
    %c0_i32_0 = arith.constant 0 : i32
    return %arg0, %c0_i32 : i32, i32
  }
  func.func @transform_1(%arg0: i32) -> (i32, i32) {
    %c0_i32 = arith.constant 0 : i32
    %c0_i32_0 = arith.constant 0 : i32
    %c0_i32_1 = arith.constant 0 : i32
    return %c0_i32, %c0_i32_0 : i32, i32
  }
  func.func @transform_2(%arg0: i32) -> (i32, i32) {
    %c0_i32 = arith.constant 0 : i32
    %c0_i32_0 = arith.constant 0 : i32
    %c0_i32_1 = arith.constant 0 : i32
    return %c0_i32, %c0_i32_0 : i32, i32
  }
  func.func @transform_3(%arg0: i32) -> (i32, i32) {
    %c0_i32 = arith.constant 0 : i32
    %c0_i32_0 = arith.constant 0 : i32
    return %arg0, %c0_i32 : i32, i32
  }
}

module attributes {stable_mosaic.version = 11 : i64} {
  func.func @_conv_bn_relu_kernel(%arg0: i32, %arg1: memref<64x640xbf16, #tpu.memory_space<vmem>>, %arg2: memref<640x128xbf16, #tpu.memory_space<vmem>>, %arg3: memref<1x128xf32, #tpu.memory_space<vmem>>, %arg4: memref<64x128xbf16, #tpu.memory_space<vmem>>) attributes {dimension_semantics = [#tpu.dimension_semantics<parallel>], iteration_bounds = array<i64: 2>, scalar_prefetch = 0 : i64, scratch_operands = 0 : i64, tpu.core_type = #tpu.core_type<tc>, window_params = [{transform_indices = @transform_0, window_bounds = array<i64: 64, 640>}, {pipeline_mode = #tpu.pipeline_mode<synchronous>, transform_indices = @transform_1, window_bounds = array<i64: 640, 128>}, {pipeline_mode = #tpu.pipeline_mode<synchronous>, transform_indices = @transform_2, window_bounds = array<i64: 1, 128>}, {transform_indices = @transform_3, window_bounds = array<i64: 64, 128>}]} {
    %c0 = arith.constant 0 : index
    %c0_0 = arith.constant 0 : index
    %0 = vector.load %arg1[%c0, %c0_0] : memref<64x640xbf16, #tpu.memory_space<vmem>>, vector<64x640xbf16>
    %c0_1 = arith.constant 0 : index
    %c0_2 = arith.constant 0 : index
    %1 = vector.load %arg2[%c0_1, %c0_2] : memref<640x128xbf16, #tpu.memory_space<vmem>>, vector<640x128xbf16>
    %cst = arith.constant dense<0.000000e+00> : vector<64x128xf32>
    %2 = tpu.matmul %0, %1, %cst {dimension_numbers = #tpu.dot_dimension_numbers<[1], [0], [0], [1], [0, 0, 1, 1], [], []>} : vector<64x640xbf16>, vector<640x128xbf16>, vector<64x128xf32> -> vector<64x128xf32>
    %c0_3 = arith.constant 0 : index
    %c0_4 = arith.constant 0 : index
    %3 = vector.load %arg3[%c0_3, %c0_4] : memref<1x128xf32, #tpu.memory_space<vmem>>, vector<1x128xf32>
    %4 = vector.broadcast %3 : vector<1x128xf32> to vector<64x128xf32>
    %5 = arith.addf %2, %4 : vector<64x128xf32>
    %cst_5 = arith.constant 0.000000e+00 : f32
    %6 = vector.broadcast %cst_5 : f32 to vector<64x128xf32>
    %7 = arith.maximumf %5, %6 : vector<64x128xf32>
    %8 = arith.truncf %7 : vector<64x128xf32> to vector<64x128xbf16>
    %c0_6 = arith.constant 0 : index
    %c0_7 = arith.constant 0 : index
    %9 = vector.load %arg4[%c0_6, %c0_7] : memref<64x128xbf16, #tpu.memory_space<vmem>>, vector<64x128xbf16>
    tpu.vector_store %arg4[%c0_6, %c0_7], %8 {strides = array<i32>} : memref<64x128xbf16, #tpu.memory_space<vmem>>, vector<64x128xbf16>,
    return
  }
  func.func @transform_0(%arg0: i32) -> (i32, i32) {
    %c0_i32 = arith.constant 0 : i32
    %c0_i32_0 = arith.constant 0 : i32
    return %arg0, %c0_i32 : i32, i32
  }
  func.func @transform_1(%arg0: i32) -> (i32, i32) {
    %c0_i32 = arith.constant 0 : i32
    %c0_i32_0 = arith.constant 0 : i32
    %c0_i32_1 = arith.constant 0 : i32
    return %c0_i32, %c0_i32_0 : i32, i32
  }
  func.func @transform_2(%arg0: i32) -> (i32, i32) {
    %c0_i32 = arith.constant 0 : i32
    %c0_i32_0 = arith.constant 0 : i32
    %c0_i32_1 = arith.constant 0 : i32
    return %c0_i32, %c0_i32_0 : i32, i32
  }
  func.func @transform_3(%arg0: i32) -> (i32, i32) {
    %c0_i32 = arith.constant 0 : i32
    %c0_i32_0 = arith.constant 0 : i32
    return %arg0, %c0_i32 : i32, i32
  }
}

module attributes {stable_mosaic.version = 11 : i64} {
  func.func @_classifier_kernel(%arg0: i32, %arg1: memref<2x4096xbf16, #tpu.memory_space<vmem>>, %arg2: memref<4096x128xbf16, #tpu.memory_space<vmem>>, %arg3: memref<1x128xf32, #tpu.memory_space<vmem>>, %arg4: memref<2x128xf32, #tpu.memory_space<vmem>>) attributes {dimension_semantics = [#tpu.dimension_semantics<arbitrary>], iteration_bounds = array<i64: 2>, scalar_prefetch = 0 : i64, scratch_operands = 0 : i64, tpu.core_type = #tpu.core_type<tc>, window_params = [{transform_indices = @transform_0, window_bounds = array<i64: 2, 4096>}, {transform_indices = @transform_1, window_bounds = array<i64: 4096, 128>}, {pipeline_mode = #tpu.pipeline_mode<synchronous>, transform_indices = @transform_2, window_bounds = array<i64: 1, 128>}, {pipeline_mode = #tpu.pipeline_mode<synchronous>, transform_indices = @transform_3, window_bounds = array<i64: 2, 128>}]} {
    %c0_i32 = arith.constant 0 : i32
    %0 = arith.cmpi eq, %arg0, %c0_i32 : i32
    %1 = arith.extui %0 : i1 to i32
    %c0_i32_0 = arith.constant 0 : i32
    %2 = arith.cmpi ne, %1, %c0_i32_0 : i32
    scf.if %2 {
      %c0_8 = arith.constant 0 : index
      %c0_9 = arith.constant 0 : index
      %9 = vector.load %arg3[%c0_8, %c0_9] : memref<1x128xf32, #tpu.memory_space<vmem>>, vector<1x128xf32>
      %10 = vector.shape_cast %9 : vector<1x128xf32> to vector<1x128xf32>
      %11 = vector.broadcast %10 : vector<1x128xf32> to vector<2x128xf32>
      %c0_10 = arith.constant 0 : index
      %c0_11 = arith.constant 0 : index
      %12 = vector.load %arg4[%c0_10, %c0_11] : memref<2x128xf32, #tpu.memory_space<vmem>>, vector<2x128xf32>
      tpu.vector_store %arg4[%c0_10, %c0_11], %11 {strides = array<i32>} : memref<2x128xf32, #tpu.memory_space<vmem>>, vector<2x128xf32>,
    } else {
    }
    %c0 = arith.constant 0 : index
    %c0_1 = arith.constant 0 : index
    %3 = vector.load %arg4[%c0, %c0_1] : memref<2x128xf32, #tpu.memory_space<vmem>>, vector<2x128xf32>
    %c0_2 = arith.constant 0 : index
    %c0_3 = arith.constant 0 : index
    %4 = vector.load %arg1[%c0_2, %c0_3] : memref<2x4096xbf16, #tpu.memory_space<vmem>>, vector<2x4096xbf16>
    %c0_4 = arith.constant 0 : index
    %c0_5 = arith.constant 0 : index
    %5 = vector.load %arg2[%c0_4, %c0_5] : memref<4096x128xbf16, #tpu.memory_space<vmem>>, vector<4096x128xbf16>
    %cst = arith.constant dense<0.000000e+00> : vector<2x128xf32>
    %6 = tpu.matmul %4, %5, %cst {dimension_numbers = #tpu.dot_dimension_numbers<[1], [0], [0], [1], [0, 0, 1, 1], [], []>} : vector<2x4096xbf16>, vector<4096x128xbf16>, vector<2x128xf32> -> vector<2x128xf32>
    %7 = arith.addf %3, %6 : vector<2x128xf32>
    %c0_6 = arith.constant 0 : index
    %c0_7 = arith.constant 0 : index
    %8 = vector.load %arg4[%c0_6, %c0_7] : memref<2x128xf32, #tpu.memory_space<vmem>>, vector<2x128xf32>
    tpu.vector_store %arg4[%c0_6, %c0_7], %7 {strides = array<i32>} : memref<2x128xf32, #tpu.memory_space<vmem>>, vector<2x128xf32>,
    return
  }
  func.func @transform_0(%arg0: i32) -> (i32, i32) {
    %c0_i32 = arith.constant 0 : i32
    %c0_i32_0 = arith.constant 0 : i32
    return %c0_i32, %arg0 : i32, i32
  }
  func.func @transform_1(%arg0: i32) -> (i32, i32) {
    %c0_i32 = arith.constant 0 : i32
    %c0_i32_0 = arith.constant 0 : i32
    return %arg0, %c0_i32 : i32, i32
  }
  func.func @transform_2(%arg0: i32) -> (i32, i32) {
    %c0_i32 = arith.constant 0 : i32
    %c0_i32_0 = arith.constant 0 : i32
    %c0_i32_1 = arith.constant 0 : i32
    return %c0_i32, %c0_i32_0 : i32, i32
  }
  func.func @transform_3(%arg0: i32) -> (i32, i32) {
    %c0_i32 = arith.constant 0 : i32
    %c0_i32_0 = arith.constant 0 : i32
    %c0_i32_1 = arith.constant 0 : i32
    return %c0_i32, %c0_i32_0 : i32, i32
  }
}

</mosaic_0001>

<llo_original>
// kernel: cnn2d_nopooling_forward.4
$region0: #{cnn2d_nopooling_forward.4}
  #allocation0 [shape = 'u32[]', space=smem, size = 0x4, offset = 0x4, fixed_abs, tag = 'smem constant byte address 0x4 - core index']
  #allocation1 [shape = 'u32[144,128]{1,0:T(1,128)}', space=vmem, size = 0x12000, scoped, tag = 'internal scratch']
  %s0 = inlined_call_operand.vmem [shape: bf16[2048,128], index: 0, kind: input, shape index: {}]
  %s1 = inlined_call_operand.vmem [shape: bf16[128,128], index: 1, kind: input, shape index: {}]
  %s2 = inlined_call_operand.vmem [shape: f32[1,128], index: 2, kind: input, shape index: {}]
  %s3 = inlined_call_operand.vmem [shape: bf16[2048,128], index: 3, kind: output, shape index: {}]
  %s4 = sld [smem:[#allocation0]]
  $region45: #{cnn2d_nopooling_forward.4} parent=0
    _
  %s6 = ssub.s32 1, %s4
  %s7 = scalar_select 0, %s6, %s4
  loop: start=0, step=1, limit=6
  $region2: #{cnn2d_nopooling_forward.4} parent=0 // loop_pre_header
    _
  $region3: #{cnn2d_nopooling_forward.4} parent=0 // loop_header
    %s9 = sphi 0, %s13
    %p10 = scmp.ge.s32.totalorder %s9, 6
    %s19 = sphi 0, %s21
    %s22 = sphi 0, %s19
    %s23 = sphi 0, %s22
    %s39 = sphi 0, %s23
    %s43 = sphi 0, %s43
    %s45 = sphi 0, %s43
    %s46 = sphi 0, %s45
    %s60 = sphi 0, %s46
    %s64 = sphi 0, %s64
    %s66 = sphi 0, %s64
    %s67 = sphi 0, %s66
    %s81 = sphi 0, %s67
    %s87 = sphi 0, %s89
    %s90 = sphi 0, %s87
    %s91 = sphi 0, %s90
    %s107 = sphi 0, %s91
  $region4: #{cnn2d_nopooling_forward.4} parent=0 // loop_header_branch
    %12 = sbr.rel (%p10) target = $region8
  $region5: #{cnn2d_nopooling_forward.4} parent=0 // loop_body
    %s14 = ssub.s32 %s9, 1
    %s15 = ssub.s32 %s9, 2
    %s16 = sadd.s32 %s9, 1
    %s17 = ssub.s32 %s9, %s16
    %p18 = scmp.eq.s32.totalorder %s17, 0
    %s20 = sadd.s32 %s19, 1
    %s21 = scalar_select %p18, %s19, %s20
    %p24 = pneg %p18
    %p25 = scmp.eq.s32.totalorder %s9, 3
    %p26 = por %p24, %p25
    %p27 = scmp.ne.s32.totalorder %s19, %s22
    %p28 = scmp.eq.s32.totalorder %s9, 0
    %p29 = por %p27, %p28
    %p30 = scmp.ne.s32.totalorder %s19, %s22
    %p31 = scmp.eq.s32.totalorder %s14, 3
    %p32 = por %p30, %p31
    %p33 = scmp.ne.s32.totalorder %s22, %s23
    %p34 = scmp.eq.s32.totalorder %s14, 0
    %p35 = por %p33, %p34
    %p36 = scmp.ne.s32.totalorder %s22, %s23
    %p37 = scmp.eq.s32.totalorder %s15, 3
    %p38 = por %p36, %p37
    %p40 = scmp.ne.s32.totalorder %s23, %s39
    %p41 = scmp.eq.s32.totalorder %s15, 0
    %p42 = por %p40, %p41
    %s44 = sadd.s32 %s43, 1
    %p47 = scmp.eq.s32.totalorder %s9, 3
    %p48 = scmp.ne.s32.totalorder %s43, %s45
    %p49 = scmp.eq.s32.totalorder %s9, 0
    %p50 = por %p48, %p49
    %p51 = scmp.ne.s32.totalorder %s43, %s45
    %p52 = scmp.eq.s32.totalorder %s14, 3
    %p53 = por %p51, %p52
    %p54 = scmp.ne.s32.totalorder %s45, %s46
    %p55 = scmp.eq.s32.totalorder %s14, 0
    %p56 = por %p54, %p55
    %p57 = scmp.ne.s32.totalorder %s45, %s46
    %p58 = scmp.eq.s32.totalorder %s15, 3
    %p59 = por %p57, %p58
    %p61 = scmp.ne.s32.totalorder %s46, %s60
    %p62 = scmp.eq.s32.totalorder %s15, 0
    %p63 = por %p61, %p62
    %s65 = sadd.s32 %s64, 1
    %p68 = scmp.eq.s32.totalorder %s9, 3
    %p69 = scmp.ne.s32.totalorder %s64, %s66
    %p70 = scmp.eq.s32.totalorder %s9, 0
    %p71 = por %p69, %p70
    %p72 = scmp.ne.s32.totalorder %s64, %s66
    %p73 = scmp.eq.s32.totalorder %s14, 3
    %p74 = por %p72, %p73
    %p75 = scmp.ne.s32.totalorder %s66, %s67
    %p76 = scmp.eq.s32.totalorder %s14, 0
    %p77 = por %p75, %p76
    %p78 = scmp.ne.s32.totalorder %s66, %s67
    %p79 = scmp.eq.s32.totalorder %s15, 3
    %p80 = por %p78, %p79
    %p82 = scmp.ne.s32.totalorder %s67, %s81
    %p83 = scmp.eq.s32.totalorder %s15, 0
    %p84 = por %p82, %p83
    %s85 = ssub.s32 %s9, %s16
    %p86 = scmp.eq.s32.totalorder %s85, 0
    %s88 = sadd.s32 %s87, 1
    %s89 = scalar_select %p86, %s87, %s88
    %p92 = pneg %p86
    %p93 = scmp.eq.s32.totalorder %s9, 3
    %p94 = por %p92, %p93
    %p95 = scmp.ne.s32.totalorder %s87, %s90
    %p96 = scmp.eq.s32.totalorder %s9, 0
    %p97 = por %p95, %p96
    %p98 = scmp.ne.s32.totalorder %s87, %s90
    %p99 = scmp.eq.s32.totalorder %s14, 3
    %p100 = por %p98, %p99
    %p101 = scmp.ne.s32.totalorder %s90, %s91
    %p102 = scmp.eq.s32.totalorder %s14, 0
    %p103 = por %p101, %p102
    %p104 = scmp.ne.s32.totalorder %s90, %s91
    %p105 = scmp.eq.s32.totalorder %s15, 3
    %p106 = por %p104, %p105
    %p108 = scmp.ne.s32.totalorder %s91, %s107
    %p109 = scmp.eq.s32.totalorder %s15, 0
    %p110 = por %p108, %p109
    %p111 = scmp.le.s32.totalorder 1, %s9
    %p112 = scmp.lt.s32.totalorder %s9, 5
    %p113 = pnand %p111, %p112
    %p114 = pneg %p113
    // Predicated region
    $region9: #{cnn2d_nopooling_forward.4} parent=5 // pred_check
      _
    $region10: #{cnn2d_nopooling_forward.4} parent=5 // pred_check_branch
      %116 = sbr.rel (%p113) target = $region12
    $region11: #{cnn2d_nopooling_forward.4} parent=5 // pred_region
      %s117 = ssub.s32 %s9, 1
      // Predicated region
      $region13: #{cnn2d_nopooling_forward.4} parent=11 // pred_check
        %p118 = pneg %p56
      $region14: #{cnn2d_nopooling_forward.4} parent=11 // pred_check_branch
        %120 = sbr.rel (%p118) target = $region16
      $region15: #{cnn2d_nopooling_forward.4} parent=11 // pred_region
        _
      $region16: #{cnn2d_nopooling_forward.4} parent=11 // pred_fallthru
        _
      // Predicated region
      $region17: #{cnn2d_nopooling_forward.4} parent=11 // pred_check
        %p121 = pneg %p77
      $region18: #{cnn2d_nopooling_forward.4} parent=11 // pred_check_branch
        %123 = sbr.rel (%p121) target = $region20
      $region19: #{cnn2d_nopooling_forward.4} parent=11 // pred_region
        _
      $region20: #{cnn2d_nopooling_forward.4} parent=11 // pred_fallthru
        _
    $region12: #{cnn2d_nopooling_forward.4} parent=5 // pred_fallthru
      _
    %p124 = scmp.lt.s32.totalorder %s9, 4
    // Predicated region
    $region21: #{cnn2d_nopooling_forward.4} parent=5 // pred_check
      %p125 = pneg %p124
    $region22: #{cnn2d_nopooling_forward.4} parent=5 // pred_check_branch
      %127 = sbr.rel (%p125) target = $region24
    $region23: #{cnn2d_nopooling_forward.4} parent=5 // pred_region
      // Predicated region
      $region25: #{cnn2d_nopooling_forward.4} parent=23 // pred_check
        %p128 = pneg %p29
      $region26: #{cnn2d_nopooling_forward.4} parent=23 // pred_check_branch
        %130 = sbr.rel (%p128) target = $region28
      $region27: #{cnn2d_nopooling_forward.4} parent=23 // pred_region
        %s131 = smul.u32 64, %s9
        %p132 = scmp.lt.s32.totalorder %s131, 255
        %s133 = scalar_select %p132, %s131, 255
        %s134 = smul.addr %s133, 4
        %s135 = scalar_lea.vmem %s0, %s134
        %s136 = smul.u32 64, %s9
      $region28: #{cnn2d_nopooling_forward.4} parent=23 // pred_fallthru
        _
    $region24: #{cnn2d_nopooling_forward.4} parent=5 // pred_fallthru
      _
    %p137 = scmp.le.s32.totalorder 1, %s9
    %p138 = scmp.lt.s32.totalorder %s9, 5
    %p139 = pnand %p137, %p138
    %p140 = pneg %p139
    // Predicated region
    $region29: #{cnn2d_nopooling_forward.4} parent=5 // pred_check
      _
    $region30: #{cnn2d_nopooling_forward.4} parent=5 // pred_check_branch
      %142 = sbr.rel (%p139) target = $region32
    $region31: #{cnn2d_nopooling_forward.4} parent=5 // pred_region
      %s143 = ssub.s32 %s9, 1
      %s144 = smul.u32 64, %s14
      %p145 = scmp.lt.s32.totalorder %s144, 255
      %s146 = scalar_select %p145, %s144, 255
      %s147 = smul.addr %s146, 4
      %s148 = scalar_lea.vmem %s0, %s147
      %p149 = pneg %p35
      %p150 = pneg %p32
      %p151 = pneg %p56
      %p152 = pneg %p53
      %p153 = pneg %p77
      %p154 = pneg %p74
      %p155 = pneg %p103
      %p156 = pneg %p100
      %s157 = smul.u32 64, %s14
      %p158 = scmp.lt.s32.totalorder %s157, 255
      %s159 = scalar_select %p158, %s157, 255
      %s160 = smul.addr %s159, 4
      %s161 = scalar_lea.vmem %s3, %s160
      %s162 = smul.u32 64, %s14
      %p163 = scmp.lt.s32.totalorder %s162, 255
      %s164 = scalar_select %p163, %s162, 255
      %s165 = smul.addr %s164, 4
      %s166 = scalar_lea.vmem %s0, %s165
      %s167 = smul.u32 64, %s14
      %s168 = smul.u32 64, %s14
      %p169 = scmp.lt.s32.totalorder %s168, 255
      %s170 = scalar_select %p169, %s168, 255
      %s171 = smul.addr %s170, 4
      %s172 = scalar_lea.vmem %s3, %s171
      %s173 = smul.u32 64, %s14
      %v175 = vld [vmem:[%s166] sm:$0xf]
      %v176 = vld [vmem:[%s166 + $0x4] sm:$0xf]
      %v177 = vld [vmem:[%s166 + $0x8] sm:$0xf]
      %v178 = vld [vmem:[%s166 + $0xc] sm:$0xf]
      %v179 = vld [vmem:[%s166 + $0x10] sm:$0xf]
      %v180 = vld [vmem:[%s166 + $0x14] sm:$0xf]
      %v181 = vld [vmem:[%s166 + $0x18] sm:$0xf]
      %v182 = vld [vmem:[%s166 + $0x1c] sm:$0xf]
      %v183 = vld [vmem:[%s166 + $0x20] sm:$0xf]
      %v184 = vld [vmem:[%s166 + $0x24] sm:$0xf]
      %v185 = vld [vmem:[%s166 + $0x28] sm:$0xf]
      %v186 = vld [vmem:[%s166 + $0x2c] sm:$0xf]
      %v187 = vld [vmem:[%s166 + $0x30] sm:$0xf]
      %v188 = vld [vmem:[%s166 + $0x34] sm:$0xf]
      %v189 = vld [vmem:[%s166 + $0x38] sm:$0xf]
      %v190 = vld [vmem:[%s166 + $0x3c] sm:$0xf]
      %v191 = vld [vmem:[%s166 + $0x40] sm:$0xf]
      %v192 = vld [vmem:[%s166 + $0x44] sm:$0xf]
      %v193 = vld [vmem:[%s166 + $0x48] sm:$0xf]
      %v194 = vld [vmem:[%s166 + $0x4c] sm:$0xf]
      %v195 = vld [vmem:[%s166 + $0x50] sm:$0xf]
      %v196 = vld [vmem:[%s166 + $0x54] sm:$0xf]
      %v197 = vld [vmem:[%s166 + $0x58] sm:$0xf]
      %v198 = vld [vmem:[%s166 + $0x5c] sm:$0xf]
      %v199 = vld [vmem:[%s166 + $0x60] sm:$0xf]
      %v200 = vld [vmem:[%s166 + $0x64] sm:$0xf]
      %v201 = vld [vmem:[%s166 + $0x68] sm:$0xf]
      %v202 = vld [vmem:[%s166 + $0x6c] sm:$0xf]
      %v203 = vld [vmem:[%s166 + $0x70] sm:$0xf]
      %v204 = vld [vmem:[%s166 + $0x74] sm:$0xf]
      %v205 = vld [vmem:[%s166 + $0x78] sm:$0xf]
      %v206 = vld [vmem:[%s166 + $0x7c] sm:$0xf]
      %v207 = vld [vmem:[%s166 + $0x80] sm:$0xf]
      %v208 = vld [vmem:[%s166 + $0x84] sm:$0xf]
      %v209 = vld [vmem:[%s166 + $0x88] sm:$0xf]
      %v210 = vld [vmem:[%s166 + $0x8c] sm:$0xf]
      %v211 = vld [vmem:[%s166 + $0x90] sm:$0xf]
      %v212 = vld [vmem:[%s166 + $0x94] sm:$0xf]
      %v213 = vld [vmem:[%s166 + $0x98] sm:$0xf]
      %v214 = vld [vmem:[%s166 + $0x9c] sm:$0xf]
      %v215 = vld [vmem:[%s166 + $0xa0] sm:$0xf]
      %v216 = vld [vmem:[%s166 + $0xa4] sm:$0xf]
      %v217 = vld [vmem:[%s166 + $0xa8] sm:$0xf]
      %v218 = vld [vmem:[%s166 + $0xac] sm:$0xf]
      %v219 = vld [vmem:[%s166 + $0xb0] sm:$0xf]
      %v220 = vld [vmem:[%s166 + $0xb4] sm:$0xf]
      %v221 = vld [vmem:[%s166 + $0xb8] sm:$0xf]
      %v222 = vld [vmem:[%s166 + $0xbc] sm:$0xf]
      %v223 = vld [vmem:[%s166 + $0xc0] sm:$0xf]
      %v224 = vld [vmem:[%s166 + $0xc4] sm:$0xf]
      %v225 = vld [vmem:[%s166 + $0xc8] sm:$0xf]
      %v226 = vld [vmem:[%s166 + $0xcc] sm:$0xf]
      %v227 = vld [vmem:[%s166 + $0xd0] sm:$0xf]
      %v228 = vld [vmem:[%s166 + $0xd4] sm:$0xf]
      %v229 = vld [vmem:[%s166 + $0xd8] sm:$0xf]
      %v230 = vld [vmem:[%s166 + $0xdc] sm:$0xf]
      %v231 = vld [vmem:[%s166 + $0xe0] sm:$0xf]
      %v232 = vld [vmem:[%s166 + $0xe4] sm:$0xf]
      %v233 = vld [vmem:[%s166 + $0xe8] sm:$0xf]
      %v234 = vld [vmem:[%s166 + $0xec] sm:$0xf]
      %v235 = vld [vmem:[%s166 + $0xf0] sm:$0xf]
      %v236 = vld [vmem:[%s166 + $0xf4] sm:$0xf]
      %v237 = vld [vmem:[%s166 + $0xf8] sm:$0xf]
      %v238 = vld [vmem:[%s166 + $0xfc] sm:$0xf]
      %v239 = vld [vmem:[%s1] sm:$0xf]
      %v240 = vld [vmem:[%s1 + $0x4] sm:$0xf]
      %v241 = vld [vmem:[%s1 + $0x8] sm:$0xf]
      %v242 = vld [vmem:[%s1 + $0xc] sm:$0xf]
      %v243 = vld [vmem:[%s1 + $0x10] sm:$0xf]
      %v244 = vld [vmem:[%s1 + $0x14] sm:$0xf]
      %v245 = vld [vmem:[%s1 + $0x18] sm:$0xf]
      %v246 = vld [vmem:[%s1 + $0x1c] sm:$0xf]
      %v247 = vld [vmem:[%s1 + $0x20] sm:$0xf]
      %v248 = vld [vmem:[%s1 + $0x24] sm:$0xf]
      %v249 = vld [vmem:[%s1 + $0x28] sm:$0xf]
      %v250 = vld [vmem:[%s1 + $0x2c] sm:$0xf]
      %v251 = vld [vmem:[%s1 + $0x30] sm:$0xf]
      %v252 = vld [vmem:[%s1 + $0x34] sm:$0xf]
      %v253 = vld [vmem:[%s1 + $0x38] sm:$0xf]
      %v254 = vld [vmem:[%s1 + $0x3c] sm:$0xf]
      %v255 = vld [vmem:[%s2] sm:$0x1]
      %v257 = vlaneseq
      %v258 = vshrl.u32 %v257, 7
      %v259 = vsub.s32 0, %v258
      %v260 = vrot.slane %v255, %v259
      %v326 = vunpack.c.l.b16 %v175
      %v327 = vunpack.c.l.b16 %v176
      %v328 = vunpack.c.l.b16 %v177
      %v329 = vunpack.c.l.b16 %v178
      %v330 = vunpack.c.l.b16 %v179
      %v331 = vunpack.c.l.b16 %v180
      %v332 = vunpack.c.l.b16 %v181
      %v333 = vunpack.c.l.b16 %v182
      %v334 = vunpack.c.l.b16 %v183
      %v335 = vunpack.c.l.b16 %v184
      %v336 = vunpack.c.l.b16 %v185
      %v337 = vunpack.c.l.b16 %v186
      %v338 = vunpack.c.l.b16 %v187
      %v339 = vunpack.c.l.b16 %v188
      %v340 = vunpack.c.l.b16 %v189
      %v341 = vunpack.c.l.b16 %v190
      %v342 = vunpack.c.l.b16 %v191
      %v343 = vunpack.c.l.b16 %v192
      %v344 = vunpack.c.l.b16 %v193
      %v345 = vunpack.c.l.b16 %v194
      %v346 = vunpack.c.l.b16 %v195
      %v347 = vunpack.c.l.b16 %v196
      %v348 = vunpack.c.l.b16 %v197
      %v349 = vunpack.c.l.b16 %v198
      %v350 = vunpack.c.l.b16 %v199
      %v351 = vunpack.c.l.b16 %v200
      %v352 = vunpack.c.l.b16 %v201
      %v353 = vunpack.c.l.b16 %v202
      %v354 = vunpack.c.l.b16 %v203
      %v355 = vunpack.c.l.b16 %v204
      %v356 = vunpack.c.l.b16 %v205
      %v357 = vunpack.c.l.b16 %v206
      %v358 = vunpack.c.l.b16 %v207
      %v359 = vunpack.c.l.b16 %v208
      %v360 = vunpack.c.l.b16 %v209
      %v361 = vunpack.c.l.b16 %v210
      %v362 = vunpack.c.l.b16 %v211
      %v363 = vunpack.c.l.b16 %v212
      %v364 = vunpack.c.l.b16 %v213
      %v365 = vunpack.c.l.b16 %v214
      %v366 = vunpack.c.l.b16 %v215
      %v367 = vunpack.c.l.b16 %v216
      %v368 = vunpack.c.l.b16 %v217
      %v369 = vunpack.c.l.b16 %v218
      %v370 = vunpack.c.l.b16 %v219
      %v371 = vunpack.c.l.b16 %v220
      %v372 = vunpack.c.l.b16 %v221
      %v373 = vunpack.c.l.b16 %v222
      %v374 = vunpack.c.l.b16 %v223
      %v375 = vunpack.c.l.b16 %v224
      %v376 = vunpack.c.l.b16 %v225
      %v377 = vunpack.c.l.b16 %v226
      %v378 = vunpack.c.l.b16 %v227
      %v379 = vunpack.c.l.b16 %v228
      %v380 = vunpack.c.l.b16 %v229
      %v381 = vunpack.c.l.b16 %v230
      %v382 = vunpack.c.l.b16 %v231
      %v383 = vunpack.c.l.b16 %v232
      %v384 = vunpack.c.l.b16 %v233
      %v385 = vunpack.c.l.b16 %v234
      %v386 = vunpack.c.l.b16 %v235
      %v387 = vunpack.c.l.b16 %v236
      %v388 = vunpack.c.l.b16 %v237
      %v389 = vunpack.c.l.b16 %v238
      %v390 = vpack.c.b16 %v327, %v326
      %v391 = vpack.c.b16 %v329, %v328
      %v392 = vpack.c.b16 %v331, %v330
      %v393 = vpack.c.b16 %v333, %v332
      %v394 = vpack.c.b16 %v335, %v334
      %v395 = vpack.c.b16 %v337, %v336
      %v396 = vpack.c.b16 %v339, %v338
      %v397 = vpack.c.b16 %v341, %v340
      %v398 = vpack.c.b16 %v343, %v342
      %v399 = vpack.c.b16 %v345, %v344
      %v400 = vpack.c.b16 %v347, %v346
      %v401 = vpack.c.b16 %v349, %v348
      %v402 = vpack.c.b16 %v351, %v350
      %v403 = vpack.c.b16 %v353, %v352
      %v404 = vpack.c.b16 %v355, %v354
      %v405 = vpack.c.b16 %v357, %v356
      %v406 = vpack.c.b16 %v359, %v358
      %v407 = vpack.c.b16 %v361, %v360
      %v408 = vpack.c.b16 %v363, %v362
      %v409 = vpack.c.b16 %v365, %v364
      %v410 = vpack.c.b16 %v367, %v366
      %v411 = vpack.c.b16 %v369, %v368
      %v412 = vpack.c.b16 %v371, %v370
      %v413 = vpack.c.b16 %v373, %v372
      %v414 = vpack.c.b16 %v375, %v374
      %v415 = vpack.c.b16 %v377, %v376
      %v416 = vpack.c.b16 %v379, %v378
      %v417 = vpack.c.b16 %v381, %v380
      %v418 = vpack.c.b16 %v383, %v382
      %v419 = vpack.c.b16 %v385, %v384
      %v420 = vpack.c.b16 %v387, %v386
      %v421 = vpack.c.b16 %v389, %v388
      %v470 = vunpack.c.l.b16 %v239
      %v471 = vunpack.c.l.b16 %v240
      %v472 = vunpack.c.l.b16 %v241
      %v473 = vunpack.c.l.b16 %v242
      %v474 = vunpack.c.l.b16 %v243
      %v475 = vunpack.c.l.b16 %v244
      %v476 = vunpack.c.l.b16 %v245
      %v477 = vunpack.c.l.b16 %v246
      %v478 = vunpack.c.l.b16 %v247
      %v479 = vunpack.c.l.b16 %v248
      %v480 = vunpack.c.l.b16 %v249
      %v481 = vunpack.c.l.b16 %v250
      %v482 = vunpack.c.l.b16 %v251
      %v483 = vunpack.c.l.b16 %v252
      %v484 = vunpack.c.l.b16 %v253
      %v485 = vunpack.c.l.b16 %v254
      %v486 = vpack.c.b16 %v471, %v470
      %v487 = vpack.c.b16 %v473, %v472
      %v488 = vpack.c.b16 %v475, %v474
      %v489 = vpack.c.b16 %v477, %v476
      %v490 = vpack.c.b16 %v479, %v478
      %v491 = vpack.c.b16 %v481, %v480
      %v492 = vpack.c.b16 %v483, %v482
      %v493 = vpack.c.b16 %v485, %v484
      %502 = vmatprep.subr.bf16.mxu0 0
      %503 = vmatpush1.bf16.msra.mxu0 %v486
      %504 = vmatprep.subr.bf16.mxu0 0
      %505 = vmatpush1.bf16.msra.mxu0 %v487
      %506 = vmatprep.subr.bf16.mxu0 0
      %507 = vmatpush1.bf16.msra.mxu0 %v488
      %508 = vmatprep.subr.bf16.mxu0 0
      %509 = vmatpush1.bf16.msra.mxu0 %v489
      %510 = vmatprep.subr.bf16.mxu0 0
      %511 = vmatpush1.bf16.msra.mxu0 %v490
      %512 = vmatprep.subr.bf16.mxu0 0
      %513 = vmatpush1.bf16.msra.mxu0 %v491
      %514 = vmatprep.subr.bf16.mxu0 0
      %515 = vmatpush1.bf16.msra.mxu0 %v492
      %516 = vmatprep.subr.bf16.mxu0 0
      %517 = vmatpush1.bf16.msra.mxu0 %v493
      %518 = vmatprep.subr.bf16.mxu0 0
      %519 = vmatpush1.bf16.msra.mxu0 0
      %520 = vmatprep.subr.bf16.mxu0 0
      %521 = vmatpush1.bf16.msra.mxu0 0
      %522 = vmatprep.subr.bf16.mxu0 0
      %523 = vmatpush1.bf16.msra.mxu0 0
      %524 = vmatprep.subr.bf16.mxu0 0
      %525 = vmatpush1.bf16.msra.mxu0 0
      %526 = vmatprep.subr.bf16.mxu0 0
      %527 = vmatpush1.bf16.msra.mxu0 0
      %528 = vmatprep.subr.bf16.mxu0 0
      %529 = vmatpush1.bf16.msra.mxu0 0
      %530 = vmatprep.subr.bf16.mxu0 0
      %531 = vmatpush1.bf16.msra.mxu0 0
      %532 = vmatprep.subr.bf16.mxu0 0
      %533 = vmatpush1.bf16.msra.mxu0 0
      %534 = vmatprep.mubr.bf16.mxu0 0
      %535 = vmatmul.mubr.bf16.gmra.mrb[0].mxu0 %v390
      %v536 = vpop.f32.mrb[0].mxu0
      %v537 = vadd.f32 %v260, %v536
      %v538 = vpop.f32.mrb[0].mxu0
      %v539 = vpop.f32.mrb[0].mxu0
      %v540 = vadd.f32 %v260, %v539
      %v541 = vpop.f32.mrb[0].mxu0
      %542 = vmatprep.mubr.bf16.mxu0 0
      %543 = vmatmul.mubr.bf16.gmra.mrb[0].mxu0 %v391
      %v544 = vpop.f32.mrb[0].mxu0
      %v545 = vadd.f32 %v260, %v544
      %v546 = vpop.f32.mrb[0].mxu0
      %v547 = vpop.f32.mrb[0].mxu0
      %v548 = vadd.f32 %v260, %v547
      %v549 = vpop.f32.mrb[0].mxu0
      %550 = vmatprep.mubr.bf16.mxu0 0
      %551 = vmatmul.mubr.bf16.gmra.mrb[0].mxu0 %v392
      %v552 = vpop.f32.mrb[0].mxu0
      %v553 = vadd.f32 %v260, %v552
      %v554 = vpop.f32.mrb[0].mxu0
      %v555 = vpop.f32.mrb[0].mxu0
      %v556 = vadd.f32 %v260, %v555
      %v557 = vpop.f32.mrb[0].mxu0
      %558 = vmatprep.mubr.bf16.mxu0 0
      %559 = vmatmul.mubr.bf16.gmra.mrb[0].mxu0 %v393
      %v560 = vpop.f32.mrb[0].mxu0
      %v561 = vadd.f32 %v260, %v560
      %v562 = vpop.f32.mrb[0].mxu0
      %v563 = vpop.f32.mrb[0].mxu0
      %v564 = vadd.f32 %v260, %v563
      %v565 = vpop.f32.mrb[0].mxu0
      %566 = vmatprep.mubr.bf16.mxu0 0
      %567 = vmatmul.mubr.bf16.gmra.mrb[0].mxu0 %v394
      %v568 = vpop.f32.mrb[0].mxu0
      %v569 = vadd.f32 %v260, %v568
      %v570 = vpop.f32.mrb[0].mxu0
      %v571 = vpop.f32.mrb[0].mxu0
      %v572 = vadd.f32 %v260, %v571
      %v573 = vpop.f32.mrb[0].mxu0
      %574 = vmatprep.mubr.bf16.mxu0 0
      %575 = vmatmul.mubr.bf16.gmra.mrb[0].mxu0 %v395
      %v576 = vpop.f32.mrb[0].mxu0
      %v577 = vadd.f32 %v260, %v576
      %v578 = vpop.f32.mrb[0].mxu0
      %v579 = vpop.f32.mrb[0].mxu0
      %v580 = vadd.f32 %v260, %v579
      %v581 = vpop.f32.mrb[0].mxu0
      %582 = vmatprep.mubr.bf16.mxu0 0
      %583 = vmatmul.mubr.bf16.gmra.mrb[0].mxu0 %v396
      %v584 = vpop.f32.mrb[0].mxu0
      %v585 = vadd.f32 %v260, %v584
      %v586 = vpop.f32.mrb[0].mxu0
      %v587 = vpop.f32.mrb[0].mxu0
      %v588 = vadd.f32 %v260, %v587
      %v589 = vpop.f32.mrb[0].mxu0
      %590 = vmatprep.mubr.bf16.mxu0 0
      %591 = vmatmul.mubr.bf16.gmra.mrb[0].mxu0 %v397
      %v592 = vpop.f32.mrb[0].mxu0
      %v593 = vadd.f32 %v260, %v592
      %v594 = vpop.f32.mrb[0].mxu0
      %v595 = vpop.f32.mrb[0].mxu0
      %v596 = vadd.f32 %v260, %v595
      %v597 = vpop.f32.mrb[0].mxu0
      %598 = vmatprep.mubr.bf16.mxu0 0
      %599 = vmatmul.mubr.bf16.gmra.mrb[0].mxu0 %v398
      %v600 = vpop.f32.mrb[0].mxu0
      %v601 = vadd.f32 %v260, %v600
      %v602 = vpop.f32.mrb[0].mxu0
      %v603 = vpop.f32.mrb[0].mxu0
      %v604 = vadd.f32 %v260, %v603
      %v605 = vpop.f32.mrb[0].mxu0
      %606 = vmatprep.mubr.bf16.mxu0 0
      %607 = vmatmul.mubr.bf16.gmra.mrb[0].mxu0 %v399
      %v608 = vpop.f32.mrb[0].mxu0
      %v609 = vadd.f32 %v260, %v608
      %v610 = vpop.f32.mrb[0].mxu0
      %v611 = vpop.f32.mrb[0].mxu0
      %v612 = vadd.f32 %v260, %v611
      %v613 = vpop.f32.mrb[0].mxu0
      %614 = vmatprep.mubr.bf16.mxu0 0
      %615 = vmatmul.mubr.bf16.gmra.mrb[0].mxu0 %v400
      %v616 = vpop.f32.mrb[0].mxu0
      %v617 = vadd.f32 %v260, %v616
      %v618 = vpop.f32.mrb[0].mxu0
      %v619 = vpop.f32.mrb[0].mxu0
      %v620 = vadd.f32 %v260, %v619
      %v621 = vpop.f32.mrb[0].mxu0
      %622 = vmatprep.mubr.bf16.mxu0 0
      %623 = vmatmul.mubr.bf16.gmra.mrb[0].mxu0 %v401
      %v624 = vpop.f32.mrb[0].mxu0
      %v625 = vadd.f32 %v260, %v624
      %v626 = vpop.f32.mrb[0].mxu0
      %v627 = vpop.f32.mrb[0].mxu0
      %v628 = vadd.f32 %v260, %v627
      %v629 = vpop.f32.mrb[0].mxu0
      %630 = vmatprep.mubr.bf16.mxu0 0
      %631 = vmatmul.mubr.bf16.gmra.mrb[0].mxu0 %v402
      %v632 = vpop.f32.mrb[0].mxu0
      %v633 = vadd.f32 %v260, %v632
      %v634 = vpop.f32.mrb[0].mxu0
      %v635 = vpop.f32.mrb[0].mxu0
      %v636 = vadd.f32 %v260, %v635
      %v637 = vpop.f32.mrb[0].mxu0
      %638 = vmatprep.mubr.bf16.mxu0 0
      %639 = vmatmul.mubr.bf16.gmra.mrb[0].mxu0 %v403
      %v640 = vpop.f32.mrb[0].mxu0
      %v641 = vadd.f32 %v260, %v640
      %v642 = vpop.f32.mrb[0].mxu0
      %v643 = vpop.f32.mrb[0].mxu0
      %v644 = vadd.f32 %v260, %v643
      %v645 = vpop.f32.mrb[0].mxu0
      %646 = vmatprep.mubr.bf16.mxu0 0
      %647 = vmatmul.mubr.bf16.gmra.mrb[0].mxu0 %v404
      %v648 = vpop.f32.mrb[0].mxu0
      %v649 = vadd.f32 %v260, %v648
      %v650 = vpop.f32.mrb[0].mxu0
      %v651 = vpop.f32.mrb[0].mxu0
      %v652 = vadd.f32 %v260, %v651
      %v653 = vpop.f32.mrb[0].mxu0
      %654 = vmatprep.mubr.bf16.mxu0 0
      %655 = vmatmul.mubr.bf16.gmra.mrb[0].mxu0 %v405
      %v656 = vpop.f32.mrb[0].mxu0
      %v657 = vadd.f32 %v260, %v656
      %v658 = vpop.f32.mrb[0].mxu0
      %v659 = vpop.f32.mrb[0].mxu0
      %v660 = vadd.f32 %v260, %v659
      %v661 = vpop.f32.mrb[0].mxu0
      %662 = vmatprep.mubr.bf16.mxu0 0
      %663 = vmatmul.mubr.bf16.gmra.mrb[0].mxu0 %v406
      %v664 = vpop.f32.mrb[0].mxu0
      %v665 = vadd.f32 %v260, %v664
      %v666 = vpop.f32.mrb[0].mxu0
      %v667 = vpop.f32.mrb[0].mxu0
      %v668 = vadd.f32 %v260, %v667
      %v669 = vpop.f32.mrb[0].mxu0
      %670 = vmatprep.mubr.bf16.mxu0 0
      %671 = vmatmul.mubr.bf16.gmra.mrb[0].mxu0 %v407
      %v672 = vpop.f32.mrb[0].mxu0
      %v673 = vadd.f32 %v260, %v672
      %v674 = vpop.f32.mrb[0].mxu0
      %v675 = vpop.f32.mrb[0].mxu0
      %v676 = vadd.f32 %v260, %v675
      %v677 = vpop.f32.mrb[0].mxu0
      %678 = vmatprep.mubr.bf16.mxu0 0
      %679 = vmatmul.mubr.bf16.gmra.mrb[0].mxu0 %v408
      %v680 = vpop.f32.mrb[0].mxu0
      %v681 = vadd.f32 %v260, %v680
      %v682 = vpop.f32.mrb[0].mxu0
      %v683 = vpop.f32.mrb[0].mxu0
      %v684 = vadd.f32 %v260, %v683
      %v685 = vpop.f32.mrb[0].mxu0
      %686 = vmatprep.mubr.bf16.mxu0 0
      %687 = vmatmul.mubr.bf16.gmra.mrb[0].mxu0 %v409
      %v688 = vpop.f32.mrb[0].mxu0
      %v689 = vadd.f32 %v260, %v688
      %v690 = vpop.f32.mrb[0].mxu0
      %v691 = vpop.f32.mrb[0].mxu0
      %v692 = vadd.f32 %v260, %v691
      %v693 = vpop.f32.mrb[0].mxu0
      %694 = vmatprep.mubr.bf16.mxu0 0
      %695 = vmatmul.mubr.bf16.gmra.mrb[0].mxu0 %v410
      %v696 = vpop.f32.mrb[0].mxu0
      %v697 = vadd.f32 %v260, %v696
      %v698 = vpop.f32.mrb[0].mxu0
      %v699 = vpop.f32.mrb[0].mxu0
      %v700 = vadd.f32 %v260, %v699
      %v701 = vpop.f32.mrb[0].mxu0
      %702 = vmatprep.mubr.bf16.mxu0 0
      %703 = vmatmul.mubr.bf16.gmra.mrb[0].mxu0 %v411
      %v704 = vpop.f32.mrb[0].mxu0
      %v705 = vadd.f32 %v260, %v704
      %v706 = vpop.f32.mrb[0].mxu0
      %v707 = vpop.f32.mrb[0].mxu0
      %v708 = vadd.f32 %v260, %v707
      %v709 = vpop.f32.mrb[0].mxu0
      %710 = vmatprep.mubr.bf16.mxu0 0
      %711 = vmatmul.mubr.bf16.gmra.mrb[0].mxu0 %v412
      %v712 = vpop.f32.mrb[0].mxu0
      %v713 = vadd.f32 %v260, %v712
      %v714 = vpop.f32.mrb[0].mxu0
      %v715 = vpop.f32.mrb[0].mxu0
      %v716 = vadd.f32 %v260, %v715
      %v717 = vpop.f32.mrb[0].mxu0
      %718 = vmatprep.mubr.bf16.mxu0 0
      %719 = vmatmul.mubr.bf16.gmra.mrb[0].mxu0 %v413
      %v720 = vpop.f32.mrb[0].mxu0
      %v721 = vadd.f32 %v260, %v720
      %v722 = vpop.f32.mrb[0].mxu0
      %v723 = vpop.f32.mrb[0].mxu0
      %v724 = vadd.f32 %v260, %v723
      %v725 = vpop.f32.mrb[0].mxu0
      %726 = vmatprep.mubr.bf16.mxu0 0
      %727 = vmatmul.mubr.bf16.gmra.mrb[0].mxu0 %v414
      %v728 = vpop.f32.mrb[0].mxu0
      %v729 = vadd.f32 %v260, %v728
      %v730 = vpop.f32.mrb[0].mxu0
      %v731 = vpop.f32.mrb[0].mxu0
      %v732 = vadd.f32 %v260, %v731
      %v733 = vpop.f32.mrb[0].mxu0
      %734 = vmatprep.mubr.bf16.mxu0 0
      %735 = vmatmul.mubr.bf16.gmra.mrb[0].mxu0 %v415
      %v736 = vpop.f32.mrb[0].mxu0
      %v737 = vadd.f32 %v260, %v736
      %v738 = vpop.f32.mrb[0].mxu0
      %v739 = vpop.f32.mrb[0].mxu0
      %v740 = vadd.f32 %v260, %v739
      %v741 = vpop.f32.mrb[0].mxu0
      %742 = vmatprep.mubr.bf16.mxu0 0
      %743 = vmatmul.mubr.bf16.gmra.mrb[0].mxu0 %v416
      %v744 = vpop.f32.mrb[0].mxu0
      %v745 = vadd.f32 %v260, %v744
      %v746 = vpop.f32.mrb[0].mxu0
      %v747 = vpop.f32.mrb[0].mxu0
      %v748 = vadd.f32 %v260, %v747
      %v749 = vpop.f32.mrb[0].mxu0
      %750 = vmatprep.mubr.bf16.mxu0 0
      %751 = vmatmul.mubr.bf16.gmra.mrb[0].mxu0 %v417
      %v752 = vpop.f32.mrb[0].mxu0
      %v753 = vadd.f32 %v260, %v752
      %v754 = vpop.f32.mrb[0].mxu0
      %v755 = vpop.f32.mrb[0].mxu0
      %v756 = vadd.f32 %v260, %v755
      %v757 = vpop.f32.mrb[0].mxu0
      %758 = vmatprep.mubr.bf16.mxu0 0
      %759 = vmatmul.mubr.bf16.gmra.mrb[0].mxu0 %v418
      %v760 = vpop.f32.mrb[0].mxu0
      %v761 = vadd.f32 %v260, %v760
      %v762 = vpop.f32.mrb[0].mxu0
      %v763 = vpop.f32.mrb[0].mxu0
      %v764 = vadd.f32 %v260, %v763
      %v765 = vpop.f32.mrb[0].mxu0
      %766 = vmatprep.mubr.bf16.mxu0 0
      %767 = vmatmul.mubr.bf16.gmra.mrb[0].mxu0 %v419
      %v768 = vpop.f32.mrb[0].mxu0
      %v769 = vadd.f32 %v260, %v768
      %v770 = vpop.f32.mrb[0].mxu0
      %v771 = vpop.f32.mrb[0].mxu0
      %v772 = vadd.f32 %v260, %v771
      %v773 = vpop.f32.mrb[0].mxu0
      %774 = vmatprep.mubr.bf16.mxu0 0
      %775 = vmatmul.mubr.bf16.gmra.mrb[0].mxu0 %v420
      %v776 = vpop.f32.mrb[0].mxu0
      %v777 = vadd.f32 %v260, %v776
      %v778 = vpop.f32.mrb[0].mxu0
      %v779 = vpop.f32.mrb[0].mxu0
      %v780 = vadd.f32 %v260, %v779
      %v781 = vpop.f32.mrb[0].mxu0
      %782 = vmatprep.mubr.bf16.mxu0 0
      %783 = vmatmul.mubr.bf16.gmra.mrb[0].mxu0 %v421
      %v784 = vpop.f32.mrb[0].mxu0
      %v785 = vadd.f32 %v260, %v784
      %v786 = vpop.f32.mrb[0].mxu0
      %v787 = vpop.f32.mrb[0].mxu0
      %v788 = vadd.f32 %v260, %v787
      %v789 = vpop.f32.mrb[0].mxu0
      %790 = vdwg.mxu0
      %v791 = vmax.f32 %v537, 0.0
      %v792 = vmax.f32 %v540, 0.0
      %v793 = vmax.f32 %v545, 0.0
      %v794 = vmax.f32 %v548, 0.0
      %v795 = vmax.f32 %v553, 0.0
      %v796 = vmax.f32 %v556, 0.0
      %v797 = vmax.f32 %v561, 0.0
      %v798 = vmax.f32 %v564, 0.0
      %v799 = vmax.f32 %v569, 0.0
      %v800 = vmax.f32 %v572, 0.0
      %v801 = vmax.f32 %v577, 0.0
      %v802 = vmax.f32 %v580, 0.0
      %v803 = vmax.f32 %v585, 0.0
      %v804 = vmax.f32 %v588, 0.0
      %v805 = vmax.f32 %v593, 0.0
      %v806 = vmax.f32 %v596, 0.0
      %v807 = vmax.f32 %v601, 0.0
      %v808 = vmax.f32 %v604, 0.0
      %v809 = vmax.f32 %v609, 0.0
      %v810 = vmax.f32 %v612, 0.0
      %v811 = vmax.f32 %v617, 0.0
      %v812 = vmax.f32 %v620, 0.0
      %v813 = vmax.f32 %v625, 0.0
      %v814 = vmax.f32 %v628, 0.0
      %v815 = vmax.f32 %v633, 0.0
      %v816 = vmax.f32 %v636, 0.0
      %v817 = vmax.f32 %v641, 0.0
      %v818 = vmax.f32 %v644, 0.0
      %v819 = vmax.f32 %v649, 0.0
      %v820 = vmax.f32 %v652, 0.0
      %v821 = vmax.f32 %v657, 0.0
      %v822 = vmax.f32 %v660, 0.0
      %v823 = vmax.f32 %v665, 0.0
      %v824 = vmax.f32 %v668, 0.0
      %v825 = vmax.f32 %v673, 0.0
      %v826 = vmax.f32 %v676, 0.0
      %v827 = vmax.f32 %v681, 0.0
      %v828 = vmax.f32 %v684, 0.0
      %v829 = vmax.f32 %v689, 0.0
      %v830 = vmax.f32 %v692, 0.0
      %v831 = vmax.f32 %v697, 0.0
      %v832 = vmax.f32 %v700, 0.0
      %v833 = vmax.f32 %v705, 0.0
      %v834 = vmax.f32 %v708, 0.0
      %v835 = vmax.f32 %v713, 0.0
      %v836 = vmax.f32 %v716, 0.0
      %v837 = vmax.f32 %v721, 0.0
      %v838 = vmax.f32 %v724, 0.0
      %v839 = vmax.f32 %v729, 0.0
      %v840 = vmax.f32 %v732, 0.0
      %v841 = vmax.f32 %v737, 0.0
      %v842 = vmax.f32 %v740, 0.0
      %v843 = vmax.f32 %v745, 0.0
      %v844 = vmax.f32 %v748, 0.0
      %v845 = vmax.f32 %v753, 0.0
      %v846 = vmax.f32 %v756, 0.0
      %v847 = vmax.f32 %v761, 0.0
      %v848 = vmax.f32 %v764, 0.0
      %v849 = vmax.f32 %v769, 0.0
      %v850 = vmax.f32 %v772, 0.0
      %v851 = vmax.f32 %v777, 0.0
      %v852 = vmax.f32 %v780, 0.0
      %v853 = vmax.f32 %v785, 0.0
      %v854 = vmax.f32 %v788, 0.0
      %v855 = vpack.c.bf16 %v792, %v791
      %v856 = vpack.c.bf16 %v794, %v793
      %v857 = vpack.c.bf16 %v796, %v795
      %v858 = vpack.c.bf16 %v798, %v797
      %v859 = vpack.c.bf16 %v800, %v799
      %v860 = vpack.c.bf16 %v802, %v801
      %v861 = vpack.c.bf16 %v804, %v803
      %v862 = vpack.c.bf16 %v806, %v805
      %v863 = vpack.c.bf16 %v808, %v807
      %v864 = vpack.c.bf16 %v810, %v809
      %v865 = vpack.c.bf16 %v812, %v811
      %v866 = vpack.c.bf16 %v814, %v813
      %v867 = vpack.c.bf16 %v816, %v815
      %v868 = vpack.c.bf16 %v818, %v817
      %v869 = vpack.c.bf16 %v820, %v819
      %v870 = vpack.c.bf16 %v822, %v821
      %v871 = vpack.c.bf16 %v824, %v823
      %v872 = vpack.c.bf16 %v826, %v825
      %v873 = vpack.c.bf16 %v828, %v827
      %v874 = vpack.c.bf16 %v830, %v829
      %v875 = vpack.c.bf16 %v832, %v831
      %v876 = vpack.c.bf16 %v834, %v833
      %v877 = vpack.c.bf16 %v836, %v835
      %v878 = vpack.c.bf16 %v838, %v837
      %v879 = vpack.c.bf16 %v840, %v839
      %v880 = vpack.c.bf16 %v842, %v841
      %v881 = vpack.c.bf16 %v844, %v843
      %v882 = vpack.c.bf16 %v846, %v845
      %v883 = vpack.c.bf16 %v848, %v847
      %v884 = vpack.c.bf16 %v850, %v849
      %v885 = vpack.c.bf16 %v852, %v851
      %v886 = vpack.c.bf16 %v854, %v853
      %v919 = vunpack.c.l.b16 %v855
      %v920 = vunpack.c.h.b16 %v855
      %v921 = vunpack.c.l.b16 %v856
      %v922 = vunpack.c.h.b16 %v856
      %v923 = vunpack.c.l.b16 %v857
      %v924 = vunpack.c.h.b16 %v857
      %v925 = vunpack.c.l.b16 %v858
      %v926 = vunpack.c.h.b16 %v858
      %v927 = vunpack.c.l.b16 %v859
      %v928 = vunpack.c.h.b16 %v859
      %v929 = vunpack.c.l.b16 %v860
      %v930 = vunpack.c.h.b16 %v860
      %v931 = vunpack.c.l.b16 %v861
      %v932 = vunpack.c.h.b16 %v861
      %v933 = vunpack.c.l.b16 %v862
      %v934 = vunpack.c.h.b16 %v862
      %v935 = vunpack.c.l.b16 %v863
      %v936 = vunpack.c.h.b16 %v863
      %v937 = vunpack.c.l.b16 %v864
      %v938 = vunpack.c.h.b16 %v864
      %v939 = vunpack.c.l.b16 %v865
      %v940 = vunpack.c.h.b16 %v865
      %v941 = vunpack.c.l.b16 %v866
      %v942 = vunpack.c.h.b16 %v866
      %v943 = vunpack.c.l.b16 %v867
      %v944 = vunpack.c.h.b16 %v867
      %v945 = vunpack.c.l.b16 %v868
      %v946 = vunpack.c.h.b16 %v868
      %v947 = vunpack.c.l.b16 %v869
      %v948 = vunpack.c.h.b16 %v869
      %v949 = vunpack.c.l.b16 %v870
      %v950 = vunpack.c.h.b16 %v870
      %v951 = vunpack.c.l.b16 %v871
      %v952 = vunpack.c.h.b16 %v871
      %v953 = vunpack.c.l.b16 %v872
      %v954 = vunpack.c.h.b16 %v872
      %v955 = vunpack.c.l.b16 %v873
      %v956 = vunpack.c.h.b16 %v873
      %v957 = vunpack.c.l.b16 %v874
      %v958 = vunpack.c.h.b16 %v874
      %v959 = vunpack.c.l.b16 %v875
      %v960 = vunpack.c.h.b16 %v875
      %v961 = vunpack.c.l.b16 %v876
      %v962 = vunpack.c.h.b16 %v876
      %v963 = vunpack.c.l.b16 %v877
      %v964 = vunpack.c.h.b16 %v877
      %v965 = vunpack.c.l.b16 %v878
      %v966 = vunpack.c.h.b16 %v878
      %v967 = vunpack.c.l.b16 %v879
      %v968 = vunpack.c.h.b16 %v879
      %v969 = vunpack.c.l.b16 %v880
      %v970 = vunpack.c.h.b16 %v880
      %v971 = vunpack.c.l.b16 %v881
      %v972 = vunpack.c.h.b16 %v881
      %v973 = vunpack.c.l.b16 %v882
      %v974 = vunpack.c.h.b16 %v882
      %v975 = vunpack.c.l.b16 %v883
      %v976 = vunpack.c.h.b16 %v883
      %v977 = vunpack.c.l.b16 %v884
      %v978 = vunpack.c.h.b16 %v884
      %v979 = vunpack.c.l.b16 %v885
      %v980 = vunpack.c.h.b16 %v885
      %v981 = vunpack.c.l.b16 %v886
      %v982 = vunpack.c.h.b16 %v886
      %v983 = vpack.c.b16 %v919, %v919
      %v984 = vpack.c.b16 %v920, %v920
      %v985 = vpack.c.b16 %v921, %v921
      %v986 = vpack.c.b16 %v922, %v922
      %v987 = vpack.c.b16 %v923, %v923
      %v988 = vpack.c.b16 %v924, %v924
      %v989 = vpack.c.b16 %v925, %v925
      %v990 = vpack.c.b16 %v926, %v926
      %v991 = vpack.c.b16 %v927, %v927
      %v992 = vpack.c.b16 %v928, %v928
      %v993 = vpack.c.b16 %v929, %v929
      %v994 = vpack.c.b16 %v930, %v930
      %v995 = vpack.c.b16 %v931, %v931
      %v996 = vpack.c.b16 %v932, %v932
      %v997 = vpack.c.b16 %v933, %v933
      %v998 = vpack.c.b16 %v934, %v934
      %v999 = vpack.c.b16 %v935, %v935
      %v1000 = vpack.c.b16 %v936, %v936
      %v1001 = vpack.c.b16 %v937, %v937
      %v1002 = vpack.c.b16 %v938, %v938
      %v1003 = vpack.c.b16 %v939, %v939
      %v1004 = vpack.c.b16 %v940, %v940
      %v1005 = vpack.c.b16 %v941, %v941
      %v1006 = vpack.c.b16 %v942, %v942
      %v1007 = vpack.c.b16 %v943, %v943
      %v1008 = vpack.c.b16 %v944, %v944
      %v1009 = vpack.c.b16 %v945, %v945
      %v1010 = vpack.c.b16 %v946, %v946
      %v1011 = vpack.c.b16 %v947, %v947
      %v1012 = vpack.c.b16 %v948, %v948
      %v1013 = vpack.c.b16 %v949, %v949
      %v1014 = vpack.c.b16 %v950, %v950
      %v1015 = vpack.c.b16 %v951, %v951
      %v1016 = vpack.c.b16 %v952, %v952
      %v1017 = vpack.c.b16 %v953, %v953
      %v1018 = vpack.c.b16 %v954, %v954
      %v1019 = vpack.c.b16 %v955, %v955
      %v1020 = vpack.c.b16 %v956, %v956
      %v1021 = vpack.c.b16 %v957, %v957
      %v1022 = vpack.c.b16 %v958, %v958
      %v1023 = vpack.c.b16 %v959, %v959
      %v1024 = vpack.c.b16 %v960, %v960
      %v1025 = vpack.c.b16 %v961, %v961
      %v1026 = vpack.c.b16 %v962, %v962
      %v1027 = vpack.c.b16 %v963, %v963
      %v1028 = vpack.c.b16 %v964, %v964
      %v1029 = vpack.c.b16 %v965, %v965
      %v1030 = vpack.c.b16 %v966, %v966
      %v1031 = vpack.c.b16 %v967, %v967
      %v1032 = vpack.c.b16 %v968, %v968
      %v1033 = vpack.c.b16 %v969, %v969
      %v1034 = vpack.c.b16 %v970, %v970
      %v1035 = vpack.c.b16 %v971, %v971
      %v1036 = vpack.c.b16 %v972, %v972
      %v1037 = vpack.c.b16 %v973, %v973
      %v1038 = vpack.c.b16 %v974, %v974
      %v1039 = vpack.c.b16 %v975, %v975
      %v1040 = vpack.c.b16 %v976, %v976
      %v1041 = vpack.c.b16 %v977, %v977
      %v1042 = vpack.c.b16 %v978, %v978
      %v1043 = vpack.c.b16 %v979, %v979
      %v1044 = vpack.c.b16 %v980, %v980
      %v1045 = vpack.c.b16 %v981, %v981
      %v1046 = vpack.c.b16 %v982, %v982
      %1111 = vst [vmem:[%s172] sm:$0xf] %v983
      %1112 = vst [vmem:[%s172 + $0x4] sm:$0xf] %v984
      %1113 = vst [vmem:[%s172 + $0x8] sm:$0xf] %v985
      %1114 = vst [vmem:[%s172 + $0xc] sm:$0xf] %v986
      %1115 = vst [vmem:[%s172 + $0x10] sm:$0xf] %v987
      %1116 = vst [vmem:[%s172 + $0x14] sm:$0xf] %v988
      %1117 = vst [vmem:[%s172 + $0x18] sm:$0xf] %v989
      %1118 = vst [vmem:[%s172 + $0x1c] sm:$0xf] %v990
      %1119 = vst [vmem:[%s172 + $0x20] sm:$0xf] %v991
      %1120 = vst [vmem:[%s172 + $0x24] sm:$0xf] %v992
      %1121 = vst [vmem:[%s172 + $0x28] sm:$0xf] %v993
      %1122 = vst [vmem:[%s172 + $0x2c] sm:$0xf] %v994
      %1123 = vst [vmem:[%s172 + $0x30] sm:$0xf] %v995
      %1124 = vst [vmem:[%s172 + $0x34] sm:$0xf] %v996
      %1125 = vst [vmem:[%s172 + $0x38] sm:$0xf] %v997
      %1126 = vst [vmem:[%s172 + $0x3c] sm:$0xf] %v998
      %1127 = vst [vmem:[%s172 + $0x40] sm:$0xf] %v999
      %1128 = vst [vmem:[%s172 + $0x44] sm:$0xf] %v1000
      %1129 = vst [vmem:[%s172 + $0x48] sm:$0xf] %v1001
      %1130 = vst [vmem:[%s172 + $0x4c] sm:$0xf] %v1002
      %1131 = vst [vmem:[%s172 + $0x50] sm:$0xf] %v1003
      %1132 = vst [vmem:[%s172 + $0x54] sm:$0xf] %v1004
      %1133 = vst [vmem:[%s172 + $0x58] sm:$0xf] %v1005
      %1134 = vst [vmem:[%s172 + $0x5c] sm:$0xf] %v1006
      %1135 = vst [vmem:[%s172 + $0x60] sm:$0xf] %v1007
      %1136 = vst [vmem:[%s172 + $0x64] sm:$0xf] %v1008
      %1137 = vst [vmem:[%s172 + $0x68] sm:$0xf] %v1009
      %1138 = vst [vmem:[%s172 + $0x6c] sm:$0xf] %v1010
      %1139 = vst [vmem:[%s172 + $0x70] sm:$0xf] %v1011
      %1140 = vst [vmem:[%s172 + $0x74] sm:$0xf] %v1012
      %1141 = vst [vmem:[%s172 + $0x78] sm:$0xf] %v1013
      %1142 = vst [vmem:[%s172 + $0x7c] sm:$0xf] %v1014
      %1143 = vst [vmem:[%s172 + $0x80] sm:$0xf] %v1015
      %1144 = vst [vmem:[%s172 + $0x84] sm:$0xf] %v1016
      %1145 = vst [vmem:[%s172 + $0x88] sm:$0xf] %v1017
      %1146 = vst [vmem:[%s172 + $0x8c] sm:$0xf] %v1018
      %1147 = vst [vmem:[%s172 + $0x90] sm:$0xf] %v1019
      %1148 = vst [vmem:[%s172 + $0x94] sm:$0xf] %v1020
      %1149 = vst [vmem:[%s172 + $0x98] sm:$0xf] %v1021
      %1150 = vst [vmem:[%s172 + $0x9c] sm:$0xf] %v1022
      %1151 = vst [vmem:[%s172 + $0xa0] sm:$0xf] %v1023
      %1152 = vst [vmem:[%s172 + $0xa4] sm:$0xf] %v1024
      %1153 = vst [vmem:[%s172 + $0xa8] sm:$0xf] %v1025
      %1154 = vst [vmem:[%s172 + $0xac] sm:$0xf] %v1026
      %1155 = vst [vmem:[%s172 + $0xb0] sm:$0xf] %v1027
      %1156 = vst [vmem:[%s172 + $0xb4] sm:$0xf] %v1028
      %1157 = vst [vmem:[%s172 + $0xb8] sm:$0xf] %v1029
      %1158 = vst [vmem:[%s172 + $0xbc] sm:$0xf] %v1030
      %1159 = vst [vmem:[%s172 + $0xc0] sm:$0xf] %v1031
      %1160 = vst [vmem:[%s172 + $0xc4] sm:$0xf] %v1032
      %1161 = vst [vmem:[%s172 + $0xc8] sm:$0xf] %v1033
      %1162 = vst [vmem:[%s172 + $0xcc] sm:$0xf] %v1034
      %1163 = vst [vmem:[%s172 + $0xd0] sm:$0xf] %v1035
      %1164 = vst [vmem:[%s172 + $0xd4] sm:$0xf] %v1036
      %1165 = vst [vmem:[%s172 + $0xd8] sm:$0xf] %v1037
      %1166 = vst [vmem:[%s172 + $0xdc] sm:$0xf] %v1038
      %1167 = vst [vmem:[%s172 + $0xe0] sm:$0xf] %v1039
      %1168 = vst [vmem:[%s172 + $0xe4] sm:$0xf] %v1040
      %1169 = vst [vmem:[%s172 + $0xe8] sm:$0xf] %v1041
      %1170 = vst [vmem:[%s172 + $0xec] sm:$0xf] %v1042
      %1171 = vst [vmem:[%s172 + $0xf0] sm:$0xf] %v1043
      %1172 = vst [vmem:[%s172 + $0xf4] sm:$0xf] %v1044
      %1173 = vst [vmem:[%s172 + $0xf8] sm:$0xf] %v1045
      %1174 = vst [vmem:[%s172 + $0xfc] sm:$0xf] %v1046
      %s1175 = smul.u32 64, %s14
      %p1176 = scmp.lt.s32.totalorder %s1175, 255
      %s1177 = scalar_select %p1176, %s1175, 255
      %s1178 = smul.addr %s1177, 4
      %s1179 = scalar_lea.vmem %s3, %s1178
      // Predicated region
      $region33: #{cnn2d_nopooling_forward.4} parent=31 // pred_check
        %p1180 = pneg %p100
      $region34: #{cnn2d_nopooling_forward.4} parent=31 // pred_check_branch
        %1182 = sbr.rel (%p1180) target = $region36
      $region35: #{cnn2d_nopooling_forward.4} parent=31 // pred_region
        %s1183 = smul.u32 64, %s14
      $region36: #{cnn2d_nopooling_forward.4} parent=31 // pred_fallthru
        _
    $region32: #{cnn2d_nopooling_forward.4} parent=5 // pred_fallthru
      _
    %p1184 = scmp.le.s32.totalorder 2, %s9
    // Predicated region
    $region37: #{cnn2d_nopooling_forward.4} parent=5 // pred_check
      %p1185 = pneg %p1184
    $region38: #{cnn2d_nopooling_forward.4} parent=5 // pred_check_branch
      %1187 = sbr.rel (%p1185) target = $region40
    $region39: #{cnn2d_nopooling_forward.4} parent=5 // pred_region
      %s1188 = ssub.s32 %s9, 2
      // Predicated region
      $region41: #{cnn2d_nopooling_forward.4} parent=39 // pred_check
        %p1189 = pneg %p106
      $region42: #{cnn2d_nopooling_forward.4} parent=39 // pred_check_branch
        %1191 = sbr.rel (%p1189) target = $region44
      $region43: #{cnn2d_nopooling_forward.4} parent=39 // pred_region
        %s1192 = smul.u32 64, %s15
        %p1193 = scmp.lt.s32.totalorder %s1192, 255
        %s1194 = scalar_select %p1193, %s1192, 255
        %s1195 = smul.addr %s1194, 4
        %s1196 = scalar_lea.vmem %s3, %s1195
      $region44: #{cnn2d_nopooling_forward.4} parent=39 // pred_fallthru
        _
    $region40: #{cnn2d_nopooling_forward.4} parent=5 // pred_fallthru
      _
  $region6: #{cnn2d_nopooling_forward.4} parent=0 // loop_footer
    %s13 = sadd.s32 1, %s9
  $region7: #{cnn2d_nopooling_forward.4} parent=0 // loop_footer_branch
    %8 = sbr.rel target = $region3
  $region8: #{cnn2d_nopooling_forward.4} parent=0 // loop_exit
    _

// kernel: cnn2d_nopooling_forward.5
$region0: #{cnn2d_nopooling_forward.5}
  #allocation0 [shape = 'u32[]', space=smem, size = 0x4, offset = 0x4, fixed_abs, tag = 'smem constant byte address 0x4 - core index']
  #allocation1 [shape = 'u32[144,128]{1,0:T(1,128)}', space=vmem, size = 0x12000, scoped, tag = 'internal scratch']
  %s0 = inlined_call_operand.vmem [shape: bf16[464,384], index: 0, kind: input, shape index: {}]
  %s1 = inlined_call_operand.vmem [shape: bf16[384,128], index: 1, kind: input, shape index: {}]
  %s2 = inlined_call_operand.vmem [shape: f32[1,128], index: 2, kind: input, shape index: {}]
  %s3 = inlined_call_operand.vmem [shape: bf16[464,128], index: 3, kind: output, shape index: {}]
  %s4 = sld [smem:[#allocation0]]
  $region45: #{cnn2d_nopooling_forward.5} parent=0
    _
  %s6 = ssub.s32 1, %s4
  %s7 = scalar_select 0, %s6, %s4
  loop: start=0, step=1, limit=4
  $region2: #{cnn2d_nopooling_forward.5} parent=0 // loop_pre_header
    _
  $region3: #{cnn2d_nopooling_forward.5} parent=0 // loop_header
    %s9 = sphi 0, %s13
    %p10 = scmp.ge.s32.totalorder %s9, 4
    %s19 = sphi 0, %s21
    %s22 = sphi 0, %s19
    %s23 = sphi 0, %s22
    %s39 = sphi 0, %s23
    %s43 = sphi 0, %s43
    %s45 = sphi 0, %s43
    %s46 = sphi 0, %s45
    %s60 = sphi 0, %s46
    %s64 = sphi 0, %s64
    %s66 = sphi 0, %s64
    %s67 = sphi 0, %s66
    %s81 = sphi 0, %s67
    %s87 = sphi 0, %s89
    %s90 = sphi 0, %s87
    %s91 = sphi 0, %s90
    %s107 = sphi 0, %s91
  $region4: #{cnn2d_nopooling_forward.5} parent=0 // loop_header_branch
    %12 = sbr.rel (%p10) target = $region8
  $region5: #{cnn2d_nopooling_forward.5} parent=0 // loop_body
    %s14 = ssub.s32 %s9, 1
    %s15 = ssub.s32 %s9, 2
    %s16 = sadd.s32 %s9, 1
    %s17 = ssub.s32 %s9, %s16
    %p18 = scmp.eq.s32.totalorder %s17, 0
    %s20 = sadd.s32 %s19, 1
    %s21 = scalar_select %p18, %s19, %s20
    %p24 = pneg %p18
    %p25 = scmp.eq.s32.totalorder %s9, 1
    %p26 = por %p24, %p25
    %p27 = scmp.ne.s32.totalorder %s19, %s22
    %p28 = scmp.eq.s32.totalorder %s9, 0
    %p29 = por %p27, %p28
    %p30 = scmp.ne.s32.totalorder %s19, %s22
    %p31 = scmp.eq.s32.totalorder %s14, 1
    %p32 = por %p30, %p31
    %p33 = scmp.ne.s32.totalorder %s22, %s23
    %p34 = scmp.eq.s32.totalorder %s14, 0
    %p35 = por %p33, %p34
    %p36 = scmp.ne.s32.totalorder %s22, %s23
    %p37 = scmp.eq.s32.totalorder %s15, 1
    %p38 = por %p36, %p37
    %p40 = scmp.ne.s32.totalorder %s23, %s39
    %p41 = scmp.eq.s32.totalorder %s15, 0
    %p42 = por %p40, %p41
    %s44 = sadd.s32 %s43, 1
    %p47 = scmp.eq.s32.totalorder %s9, 1
    %p48 = scmp.ne.s32.totalorder %s43, %s45
    %p49 = scmp.eq.s32.totalorder %s9, 0
    %p50 = por %p48, %p49
    %p51 = scmp.ne.s32.totalorder %s43, %s45
    %p52 = scmp.eq.s32.totalorder %s14, 1
    %p53 = por %p51, %p52
    %p54 = scmp.ne.s32.totalorder %s45, %s46
    %p55 = scmp.eq.s32.totalorder %s14, 0
    %p56 = por %p54, %p55
    %p57 = scmp.ne.s32.totalorder %s45, %s46
    %p58 = scmp.eq.s32.totalorder %s15, 1
    %p59 = por %p57, %p58
    %p61 = scmp.ne.s32.totalorder %s46, %s60
    %p62 = scmp.eq.s32.totalorder %s15, 0
    %p63 = por %p61, %p62
    %s65 = sadd.s32 %s64, 1
    %p68 = scmp.eq.s32.totalorder %s9, 1
    %p69 = scmp.ne.s32.totalorder %s64, %s66
    %p70 = scmp.eq.s32.totalorder %s9, 0
    %p71 = por %p69, %p70
    %p72 = scmp.ne.s32.totalorder %s64, %s66
    %p73 = scmp.eq.s32.totalorder %s14, 1
    %p74 = por %p72, %p73
    %p75 = scmp.ne.s32.totalorder %s66, %s67
    %p76 = scmp.eq.s32.totalorder %s14, 0
    %p77 = por %p75, %p76
    %p78 = scmp.ne.s32.totalorder %s66, %s67
    %p79 = scmp.eq.s32.totalorder %s15, 1
    %p80 = por %p78, %p79
    %p82 = scmp.ne.s32.totalorder %s67, %s81
    %p83 = scmp.eq.s32.totalorder %s15, 0
    %p84 = por %p82, %p83
    %s85 = ssub.s32 %s9, %s16
    %p86 = scmp.eq.s32.totalorder %s85, 0
    %s88 = sadd.s32 %s87, 1
    %s89 = scalar_select %p86, %s87, %s88
    %p92 = pneg %p86
    %p93 = scmp.eq.s32.totalorder %s9, 1
    %p94 = por %p92, %p93
    %p95 = scmp.ne.s32.totalorder %s87, %s90
    %p96 = scmp.eq.s32.totalorder %s9, 0
    %p97 = por %p95, %p96
    %p98 = scmp.ne.s32.totalorder %s87, %s90
    %p99 = scmp.eq.s32.totalorder %s14, 1
    %p100 = por %p98, %p99
    %p101 = scmp.ne.s32.totalorder %s90, %s91
    %p102 = scmp.eq.s32.totalorder %s14, 0
    %p103 = por %p101, %p102
    %p104 = scmp.ne.s32.totalorder %s90, %s91
    %p105 = scmp.eq.s32.totalorder %s15, 1
    %p106 = por %p104, %p105
    %p108 = scmp.ne.s32.totalorder %s91, %s107
    %p109 = scmp.eq.s32.totalorder %s15, 0
    %p110 = por %p108, %p109
    %p111 = scmp.le.s32.totalorder 1, %s9
    %p112 = scmp.lt.s32.totalorder %s9, 3
    %p113 = pnand %p111, %p112
    %p114 = pneg %p113
    // Predicated region
    $region9: #{cnn2d_nopooling_forward.5} parent=5 // pred_check
      _
    $region10: #{cnn2d_nopooling_forward.5} parent=5 // pred_check_branch
      %116 = sbr.rel (%p113) target = $region12
    $region11: #{cnn2d_nopooling_forward.5} parent=5 // pred_region
      %s117 = ssub.s32 %s9, 1
      // Predicated region
      $region13: #{cnn2d_nopooling_forward.5} parent=11 // pred_check
        %p118 = pneg %p56
      $region14: #{cnn2d_nopooling_forward.5} parent=11 // pred_check_branch
        %120 = sbr.rel (%p118) target = $region16
      $region15: #{cnn2d_nopooling_forward.5} parent=11 // pred_region
        _
      $region16: #{cnn2d_nopooling_forward.5} parent=11 // pred_fallthru
        _
      // Predicated region
      $region17: #{cnn2d_nopooling_forward.5} parent=11 // pred_check
        %p121 = pneg %p77
      $region18: #{cnn2d_nopooling_forward.5} parent=11 // pred_check_branch
        %123 = sbr.rel (%p121) target = $region20
      $region19: #{cnn2d_nopooling_forward.5} parent=11 // pred_region
        _
      $region20: #{cnn2d_nopooling_forward.5} parent=11 // pred_fallthru
        _
    $region12: #{cnn2d_nopooling_forward.5} parent=5 // pred_fallthru
      _
    %p124 = scmp.lt.s32.totalorder %s9, 2
    // Predicated region
    $region21: #{cnn2d_nopooling_forward.5} parent=5 // pred_check
      %p125 = pneg %p124
    $region22: #{cnn2d_nopooling_forward.5} parent=5 // pred_check_branch
      %127 = sbr.rel (%p125) target = $region24
    $region23: #{cnn2d_nopooling_forward.5} parent=5 // pred_region
      // Predicated region
      $region25: #{cnn2d_nopooling_forward.5} parent=23 // pred_check
        %p128 = pneg %p29
      $region26: #{cnn2d_nopooling_forward.5} parent=23 // pred_check_branch
        %130 = sbr.rel (%p128) target = $region28
      $region27: #{cnn2d_nopooling_forward.5} parent=23 // pred_region
        %s131 = smul.u32 29, %s9
        %p132 = scmp.lt.s32.totalorder %s131, 57
        %s133 = scalar_select %p132, %s131, 57
        %s134 = smul.addr %s133, 3
        %s135 = smul.addr %s134, 4
        %s136 = scalar_lea.vmem %s0, %s135
        %s137 = smul.u32 29, %s9
      $region28: #{cnn2d_nopooling_forward.5} parent=23 // pred_fallthru
        _
    $region24: #{cnn2d_nopooling_forward.5} parent=5 // pred_fallthru
      _
    %p138 = scmp.le.s32.totalorder 1, %s9
    %p139 = scmp.lt.s32.totalorder %s9, 3
    %p140 = pnand %p138, %p139
    %p141 = pneg %p140
    // Predicated region
    $region29: #{cnn2d_nopooling_forward.5} parent=5 // pred_check
      _
    $region30: #{cnn2d_nopooling_forward.5} parent=5 // pred_check_branch
      %143 = sbr.rel (%p140) target = $region32
    $region31: #{cnn2d_nopooling_forward.5} parent=5 // pred_region
      %s144 = ssub.s32 %s9, 1
      %s145 = smul.u32 29, %s14
      %p146 = scmp.lt.s32.totalorder %s145, 57
      %s147 = scalar_select %p146, %s145, 57
      %s148 = smul.addr %s147, 3
      %s149 = smul.addr %s148, 4
      %s150 = scalar_lea.vmem %s0, %s149
      %p151 = pneg %p35
      %p152 = pneg %p32
      %p153 = pneg %p56
      %p154 = pneg %p53
      %p155 = pneg %p77
      %p156 = pneg %p74
      %p157 = pneg %p103
      %p158 = pneg %p100
      %s159 = smul.u32 29, %s14
      %p160 = scmp.lt.s32.totalorder %s159, 57
      %s161 = scalar_select %p160, %s159, 57
      %s162 = smul.addr %s161, 4
      %s163 = scalar_lea.vmem %s3, %s162
      %s164 = smul.u32 29, %s14
      %p165 = scmp.lt.s32.totalorder %s164, 57
      %s166 = scalar_select %p165, %s164, 57
      %s167 = smul.addr %s166, 3
      %s168 = smul.addr %s167, 4
      %s169 = scalar_lea.vmem %s0, %s168
      %s170 = smul.u32 29, %s14
      %s171 = smul.u32 29, %s14
      %p172 = scmp.lt.s32.totalorder %s171, 57
      %s173 = scalar_select %p172, %s171, 57
      %s174 = smul.addr %s173, 4
      %s175 = scalar_lea.vmem %s3, %s174
      %s176 = smul.u32 29, %s14
      %v178 = vld [vmem:[%s169] sm:$0xff]
      %v179 = vld [vmem:[%s169 + $0x8] sm:$0xf]
      %v180 = vld [vmem:[%s169 + $0xc] sm:$0xff]
      %v181 = vld [vmem:[%s169 + $0x14] sm:$0xf]
      %v182 = vld [vmem:[%s169 + $0x18] sm:$0xff]
      %v183 = vld [vmem:[%s169 + $0x20] sm:$0xf]
      %v184 = vld [vmem:[%s169 + $0x24] sm:$0xff]
      %v185 = vld [vmem:[%s169 + $0x2c] sm:$0xf]
      %v186 = vld [vmem:[%s169 + $0x30] sm:$0xff]
      %v187 = vld [vmem:[%s169 + $0x38] sm:$0xf]
      %v188 = vld [vmem:[%s169 + $0x3c] sm:$0xff]
      %v189 = vld [vmem:[%s169 + $0x44] sm:$0xf]
      %v190 = vld [vmem:[%s169 + $0x48] sm:$0xff]
      %v191 = vld [vmem:[%s169 + $0x50] sm:$0xf]
      %v192 = vld [vmem:[%s169 + $0x54] sm:$0xff]
      %v193 = vld [vmem:[%s169 + $0x5c] sm:$0xf]
      %v194 = vld [vmem:[%s169 + $0x60] sm:$0xff]
      %v195 = vld [vmem:[%s169 + $0x68] sm:$0xf]
      %v196 = vld [vmem:[%s169 + $0x6c] sm:$0xff]
      %v197 = vld [vmem:[%s169 + $0x74] sm:$0xf]
      %v198 = vld [vmem:[%s169 + $0x78] sm:$0xff]
      %v199 = vld [vmem:[%s169 + $0x80] sm:$0xf]
      %v200 = vld [vmem:[%s169 + $0x84] sm:$0xff]
      %v201 = vld [vmem:[%s169 + $0x8c] sm:$0xf]
      %v202 = vld [vmem:[%s169 + $0x90] sm:$0xff]
      %v203 = vld [vmem:[%s169 + $0x98] sm:$0xf]
      %v204 = vld [vmem:[%s169 + $0x9c] sm:$0xff]
      %v205 = vld [vmem:[%s169 + $0xa4] sm:$0xf]
      %v206 = vld [vmem:[%s169 + $0xa8] sm:$0xff]
      %v207 = vld [vmem:[%s169 + $0xb0] sm:$0xf]
      %v208 = vld [vmem:[%s169 + $0xb4] sm:$0xff]
      %v209 = vld [vmem:[%s169 + $0xbc] sm:$0xf]
      %v210 = vld [vmem:[%s169 + $0xc0] sm:$0xff]
      %v211 = vld [vmem:[%s169 + $0xc8] sm:$0xf]
      %v212 = vld [vmem:[%s169 + $0xcc] sm:$0xff]
      %v213 = vld [vmem:[%s169 + $0xd4] sm:$0xf]
      %v214 = vld [vmem:[%s169 + $0xd8] sm:$0xff]
      %v215 = vld [vmem:[%s169 + $0xe0] sm:$0xf]
      %v216 = vld [vmem:[%s169 + $0xe4] sm:$0xff]
      %v217 = vld [vmem:[%s169 + $0xec] sm:$0xf]
      %v218 = vld [vmem:[%s169 + $0xf0] sm:$0xff]
      %v219 = vld [vmem:[%s169 + $0xf8] sm:$0xf]
      %v220 = vld [vmem:[%s169 + $0xfc] sm:$0xff]
      %v221 = vld [vmem:[%s169 + $0x104] sm:$0xf]
      %v222 = vld [vmem:[%s169 + $0x108] sm:$0xff]
      %v223 = vld [vmem:[%s169 + $0x110] sm:$0xf]
      %v224 = vld [vmem:[%s169 + $0x114] sm:$0xff]
      %v225 = vld [vmem:[%s169 + $0x11c] sm:$0xf]
      %v226 = vld [vmem:[%s169 + $0x120] sm:$0xff]
      %v227 = vld [vmem:[%s169 + $0x128] sm:$0xf]
      %v228 = vld [vmem:[%s169 + $0x12c] sm:$0xff]
      %v229 = vld [vmem:[%s169 + $0x134] sm:$0xf]
      %v230 = vld [vmem:[%s169 + $0x138] sm:$0xff]
      %v231 = vld [vmem:[%s169 + $0x140] sm:$0xf]
      %v232 = vld [vmem:[%s169 + $0x144] sm:$0xff]
      %v233 = vld [vmem:[%s169 + $0x14c] sm:$0xf]
      %v234 = vld [vmem:[%s169 + $0x150] sm:$0xff]
      %v235 = vld [vmem:[%s169 + $0x158] sm:$0xf]
      %v236 = vld [vmem:[%s1] sm:$0xf]
      %v237 = vld [vmem:[%s1 + $0x4] sm:$0xf]
      %v238 = vld [vmem:[%s1 + $0x8] sm:$0xf]
      %v239 = vld [vmem:[%s1 + $0xc] sm:$0xf]
      %v240 = vld [vmem:[%s1 + $0x10] sm:$0xf]
      %v241 = vld [vmem:[%s1 + $0x14] sm:$0xf]
      %v242 = vld [vmem:[%s1 + $0x18] sm:$0xf]
      %v243 = vld [vmem:[%s1 + $0x1c] sm:$0xf]
      %v244 = vld [vmem:[%s1 + $0x20] sm:$0xf]
      %v245 = vld [vmem:[%s1 + $0x24] sm:$0xf]
      %v246 = vld [vmem:[%s1 + $0x28] sm:$0xf]
      %v247 = vld [vmem:[%s1 + $0x2c] sm:$0xf]
      %v248 = vld [vmem:[%s1 + $0x30] sm:$0xf]
      %v249 = vld [vmem:[%s1 + $0x34] sm:$0xf]
      %v250 = vld [vmem:[%s1 + $0x38] sm:$0xf]
      %v251 = vld [vmem:[%s1 + $0x3c] sm:$0xf]
      %v252 = vld [vmem:[%s1 + $0x40] sm:$0xf]
      %v253 = vld [vmem:[%s1 + $0x44] sm:$0xf]
      %v254 = vld [vmem:[%s1 + $0x48] sm:$0xf]
      %v255 = vld [vmem:[%s1 + $0x4c] sm:$0xf]
      %v256 = vld [vmem:[%s1 + $0x50] sm:$0xf]
      %v257 = vld [vmem:[%s1 + $0x54] sm:$0xf]
      %v258 = vld [vmem:[%s1 + $0x58] sm:$0xf]
      %v259 = vld [vmem:[%s1 + $0x5c] sm:$0xf]
      %v260 = vld [vmem:[%s1 + $0x60] sm:$0xf]
      %v261 = vld [vmem:[%s1 + $0x64] sm:$0xf]
      %v262 = vld [vmem:[%s1 + $0x68] sm:$0xf]
      %v263 = vld [vmem:[%s1 + $0x6c] sm:$0xf]
      %v264 = vld [vmem:[%s1 + $0x70] sm:$0xf]
      %v265 = vld [vmem:[%s1 + $0x74] sm:$0xf]
      %v266 = vld [vmem:[%s1 + $0x78] sm:$0xf]
      %v267 = vld [vmem:[%s1 + $0x7c] sm:$0xf]
      %v268 = vld [vmem:[%s1 + $0x80] sm:$0xf]
      %v269 = vld [vmem:[%s1 + $0x84] sm:$0xf]
      %v270 = vld [vmem:[%s1 + $0x88] sm:$0xf]
      %v271 = vld [vmem:[%s1 + $0x8c] sm:$0xf]
      %v272 = vld [vmem:[%s1 + $0x90] sm:$0xf]
      %v273 = vld [vmem:[%s1 + $0x94] sm:$0xf]
      %v274 = vld [vmem:[%s1 + $0x98] sm:$0xf]
      %v275 = vld [vmem:[%s1 + $0x9c] sm:$0xf]
      %v276 = vld [vmem:[%s1 + $0xa0] sm:$0xf]
      %v277 = vld [vmem:[%s1 + $0xa4] sm:$0xf]
      %v278 = vld [vmem:[%s1 + $0xa8] sm:$0xf]
      %v279 = vld [vmem:[%s1 + $0xac] sm:$0xf]
      %v280 = vld [vmem:[%s1 + $0xb0] sm:$0xf]
      %v281 = vld [vmem:[%s1 + $0xb4] sm:$0xf]
      %v282 = vld [vmem:[%s1 + $0xb8] sm:$0xf]
      %v283 = vld [vmem:[%s1 + $0xbc] sm:$0xf]
      %v284 = vld [vmem:[%s2] sm:$0x1]
      %v286 = vlaneseq
      %v287 = vshrl.u32 %v286, 7
      %v288 = vsub.s32 0, %v287
      %v289 = vrot.slane %v284, %v288
      %v349 = vunpack.c.l.b16 %v178
      %v350 = vunpack.c.h.b16 %v178
      %v351 = vunpack.c.l.b16 %v179
      %v352 = vunpack.c.l.b16 %v180
      %v353 = vunpack.c.h.b16 %v180
      %v354 = vunpack.c.l.b16 %v181
      %v355 = vunpack.c.l.b16 %v182
      %v356 = vunpack.c.h.b16 %v182
      %v357 = vunpack.c.l.b16 %v183
      %v358 = vunpack.c.l.b16 %v184
      %v359 = vunpack.c.h.b16 %v184
      %v360 = vunpack.c.l.b16 %v185
      %v361 = vunpack.c.l.b16 %v186
      %v362 = vunpack.c.h.b16 %v186
      %v363 = vunpack.c.l.b16 %v187
      %v364 = vunpack.c.l.b16 %v188
      %v365 = vunpack.c.h.b16 %v188
      %v366 = vunpack.c.l.b16 %v189
      %v367 = vunpack.c.l.b16 %v190
      %v368 = vunpack.c.h.b16 %v190
      %v369 = vunpack.c.l.b16 %v191
      %v370 = vunpack.c.l.b16 %v192
      %v371 = vunpack.c.h.b16 %v192
      %v372 = vunpack.c.l.b16 %v193
      %v373 = vunpack.c.l.b16 %v194
      %v374 = vunpack.c.h.b16 %v194
      %v375 = vunpack.c.l.b16 %v195
      %v376 = vunpack.c.l.b16 %v196
      %v377 = vunpack.c.h.b16 %v196
      %v378 = vunpack.c.l.b16 %v197
      %v379 = vunpack.c.l.b16 %v198
      %v380 = vunpack.c.h.b16 %v198
      %v381 = vunpack.c.l.b16 %v199
      %v382 = vunpack.c.l.b16 %v200
      %v383 = vunpack.c.h.b16 %v200
      %v384 = vunpack.c.l.b16 %v201
      %v385 = vunpack.c.l.b16 %v202
      %v386 = vunpack.c.h.b16 %v202
      %v387 = vunpack.c.l.b16 %v203
      %v388 = vunpack.c.l.b16 %v204
      %v389 = vunpack.c.h.b16 %v204
      %v390 = vunpack.c.l.b16 %v205
      %v391 = vunpack.c.l.b16 %v206
      %v392 = vunpack.c.h.b16 %v206
      %v393 = vunpack.c.l.b16 %v207
      %v394 = vunpack.c.l.b16 %v208
      %v395 = vunpack.c.h.b16 %v208
      %v396 = vunpack.c.l.b16 %v209
      %v397 = vunpack.c.l.b16 %v210
      %v398 = vunpack.c.h.b16 %v210
      %v399 = vunpack.c.l.b16 %v211
      %v400 = vunpack.c.l.b16 %v212
      %v401 = vunpack.c.h.b16 %v212
      %v402 = vunpack.c.l.b16 %v213
      %v403 = vunpack.c.l.b16 %v214
      %v404 = vunpack.c.h.b16 %v214
      %v405 = vunpack.c.l.b16 %v215
      %v406 = vunpack.c.l.b16 %v216
      %v407 = vunpack.c.h.b16 %v216
      %v408 = vunpack.c.l.b16 %v217
      %v409 = vunpack.c.l.b16 %v218
      %v410 = vunpack.c.h.b16 %v218
      %v411 = vunpack.c.l.b16 %v219
      %v412 = vunpack.c.l.b16 %v220
      %v413 = vunpack.c.h.b16 %v220
      %v414 = vunpack.c.l.b16 %v221
      %v415 = vunpack.c.l.b16 %v222
      %v416 = vunpack.c.h.b16 %v222
      %v417 = vunpack.c.l.b16 %v223
      %v418 = vunpack.c.l.b16 %v224
      %v419 = vunpack.c.h.b16 %v224
      %v420 = vunpack.c.l.b16 %v225
      %v421 = vunpack.c.l.b16 %v226
      %v422 = vunpack.c.h.b16 %v226
      %v423 = vunpack.c.l.b16 %v227
      %v424 = vunpack.c.l.b16 %v228
      %v425 = vunpack.c.h.b16 %v228
      %v426 = vunpack.c.l.b16 %v229
      %v427 = vunpack.c.l.b16 %v230
      %v428 = vunpack.c.h.b16 %v230
      %v429 = vunpack.c.l.b16 %v231
      %v430 = vunpack.c.l.b16 %v232
      %v431 = vunpack.c.h.b16 %v232
      %v432 = vunpack.c.l.b16 %v233
      %v433 = vunpack.c.l.b16 %v234
      %v434 = vunpack.c.h.b16 %v234
      %v435 = vunpack.c.l.b16 %v235
      %v436 = vpack.c.b16 %v352, %v349
      %v437 = vpack.c.b16 %v353, %v350
      %v438 = vpack.c.b16 %v354, %v351
      %v439 = vpack.c.b16 %v358, %v355
      %v440 = vpack.c.b16 %v359, %v356
      %v441 = vpack.c.b16 %v360, %v357
      %v442 = vpack.c.b16 %v364, %v361
      %v443 = vpack.c.b16 %v365, %v362
      %v444 = vpack.c.b16 %v366, %v363
      %v445 = vpack.c.b16 %v370, %v367
      %v446 = vpack.c.b16 %v371, %v368
      %v447 = vpack.c.b16 %v372, %v369
      %v448 = vpack.c.b16 %v376, %v373
      %v449 = vpack.c.b16 %v377, %v374
      %v450 = vpack.c.b16 %v378, %v375
      %v451 = vpack.c.b16 %v382, %v379
      %v452 = vpack.c.b16 %v383, %v380
      %v453 = vpack.c.b16 %v384, %v381
      %v454 = vpack.c.b16 %v388, %v385
      %v455 = vpack.c.b16 %v389, %v386
      %v456 = vpack.c.b16 %v390, %v387
      %v457 = vpack.c.b16 %v394, %v391
      %v458 = vpack.c.b16 %v395, %v392
      %v459 = vpack.c.b16 %v396, %v393
      %v460 = vpack.c.b16 %v400, %v397
      %v461 = vpack.c.b16 %v401, %v398
      %v462 = vpack.c.b16 %v402, %v399
      %v463 = vpack.c.b16 %v406, %v403
      %v464 = vpack.c.b16 %v407, %v404
      %v465 = vpack.c.b16 %v408, %v405
      %v466 = vpack.c.b16 %v412, %v409
      %v467 = vpack.c.b16 %v413, %v410
      %v468 = vpack.c.b16 %v414, %v411
      %v469 = vpack.c.b16 %v418, %v415
      %v470 = vpack.c.b16 %v419, %v416
      %v471 = vpack.c.b16 %v420, %v417
      %v472 = vpack.c.b16 %v424, %v421
      %v473 = vpack.c.b16 %v425, %v422
      %v474 = vpack.c.b16 %v426, %v423
      %v475 = vpack.c.b16 %v430, %v427
      %v476 = vpack.c.b16 %v431, %v428
      %v477 = vpack.c.b16 %v432, %v429
      %v478 = vpack.c.b16 %v433, %v433
      %v479 = vpack.c.b16 %v434, %v434
      %v480 = vpack.c.b16 %v435, %v435
      %v574 = vunpack.c.l.b16 %v236
      %v575 = vunpack.c.l.b16 %v237
      %v576 = vunpack.c.l.b16 %v238
      %v577 = vunpack.c.l.b16 %v239
      %v578 = vunpack.c.l.b16 %v240
      %v579 = vunpack.c.l.b16 %v241
      %v580 = vunpack.c.l.b16 %v242
      %v581 = vunpack.c.l.b16 %v243
      %v582 = vunpack.c.l.b16 %v244
      %v583 = vunpack.c.l.b16 %v245
      %v584 = vunpack.c.l.b16 %v246
      %v585 = vunpack.c.l.b16 %v247
      %v586 = vunpack.c.l.b16 %v248
      %v587 = vunpack.c.l.b16 %v249
      %v588 = vunpack.c.l.b16 %v250
      %v589 = vunpack.c.l.b16 %v251
      %v590 = vunpack.c.l.b16 %v252
      %v591 = vunpack.c.l.b16 %v253
      %v592 = vunpack.c.l.b16 %v254
      %v593 = vunpack.c.l.b16 %v255
      %v594 = vunpack.c.l.b16 %v256
      %v595 = vunpack.c.l.b16 %v257
      %v596 = vunpack.c.l.b16 %v258
      %v597 = vunpack.c.l.b16 %v259
      %v598 = vunpack.c.l.b16 %v260
      %v599 = vunpack.c.l.b16 %v261
      %v600 = vunpack.c.l.b16 %v262
      %v601 = vunpack.c.l.b16 %v263
      %v602 = vunpack.c.l.b16 %v264
      %v603 = vunpack.c.l.b16 %v265
      %v604 = vunpack.c.l.b16 %v266
      %v605 = vunpack.c.l.b16 %v267
      %v606 = vunpack.c.l.b16 %v268
      %v607 = vunpack.c.l.b16 %v269
      %v608 = vunpack.c.l.b16 %v270
      %v609 = vunpack.c.l.b16 %v271
      %v610 = vunpack.c.l.b16 %v272
      %v611 = vunpack.c.l.b16 %v273
      %v612 = vunpack.c.l.b16 %v274
      %v613 = vunpack.c.l.b16 %v275
      %v614 = vunpack.c.l.b16 %v276
      %v615 = vunpack.c.l.b16 %v277
      %v616 = vunpack.c.l.b16 %v278
      %v617 = vunpack.c.l.b16 %v279
      %v618 = vunpack.c.l.b16 %v280
      %v619 = vunpack.c.l.b16 %v281
      %v620 = vunpack.c.l.b16 %v282
      %v621 = vunpack.c.l.b16 %v283
      %v622 = vpack.c.b16 %v575, %v574
      %v623 = vpack.c.b16 %v577, %v576
      %v624 = vpack.c.b16 %v579, %v578
      %v625 = vpack.c.b16 %v581, %v580
      %v626 = vpack.c.b16 %v583, %v582
      %v627 = vpack.c.b16 %v585, %v584
      %v628 = vpack.c.b16 %v587, %v586
      %v629 = vpack.c.b16 %v589, %v588
      %v630 = vpack.c.b16 %v591, %v590
      %v631 = vpack.c.b16 %v593, %v592
      %v632 = vpack.c.b16 %v595, %v594
      %v633 = vpack.c.b16 %v597, %v596
      %v634 = vpack.c.b16 %v599, %v598
      %v635 = vpack.c.b16 %v601, %v600
      %v636 = vpack.c.b16 %v603, %v602
      %v637 = vpack.c.b16 %v605, %v604
      %v638 = vpack.c.b16 %v607, %v606
      %v639 = vpack.c.b16 %v609, %v608
      %v640 = vpack.c.b16 %v611, %v610
      %v641 = vpack.c.b16 %v613, %v612
      %v642 = vpack.c.b16 %v615, %v614
      %v643 = vpack.c.b16 %v617, %v616
      %v644 = vpack.c.b16 %v619, %v618
      %v645 = vpack.c.b16 %v621, %v620
      %670 = vmatprep.subr.bf16.mxu0 0
      %671 = vmatpush1.bf16.msra.mxu0 %v622
      %672 = vmatprep.subr.bf16.mxu0 0
      %673 = vmatpush1.bf16.msra.mxu0 %v623
      %674 = vmatprep.subr.bf16.mxu0 0
      %675 = vmatpush1.bf16.msra.mxu0 %v624
      %676 = vmatprep.subr.bf16.mxu0 0
      %677 = vmatpush1.bf16.msra.mxu0 %v625
      %678 = vmatprep.subr.bf16.mxu0 0
      %679 = vmatpush1.bf16.msra.mxu0 %v626
      %680 = vmatprep.subr.bf16.mxu0 0
      %681 = vmatpush1.bf16.msra.mxu0 %v627
      %682 = vmatprep.subr.bf16.mxu0 0
      %683 = vmatpush1.bf16.msra.mxu0 %v628
      %684 = vmatprep.subr.bf16.mxu0 0
      %685 = vmatpush1.bf16.msra.mxu0 %v629
      %686 = vmatprep.subr.bf16.mxu0 0
      %687 = vmatpush1.bf16.msra.mxu0 %v630
      %688 = vmatprep.subr.bf16.mxu0 0
      %689 = vmatpush1.bf16.msra.mxu0 %v631
      %690 = vmatprep.subr.bf16.mxu0 0
      %691 = vmatpush1.bf16.msra.mxu0 %v632
      %692 = vmatprep.subr.bf16.mxu0 0
      %693 = vmatpush1.bf16.msra.mxu0 %v633
      %694 = vmatprep.subr.bf16.mxu0 0
      %695 = vmatpush1.bf16.msra.mxu0 %v634
      %696 = vmatprep.subr.bf16.mxu0 0
      %697 = vmatpush1.bf16.msra.mxu0 %v635
      %698 = vmatprep.subr.bf16.mxu0 0
      %699 = vmatpush1.bf16.msra.mxu0 %v636
      %700 = vmatprep.subr.bf16.mxu0 0
      %701 = vmatpush1.bf16.msra.mxu0 %v637
      %702 = vmatprep.mubr.bf16.mxu0 %v437
      %703 = vmatmul.mubr.bf16.gmra.mrb[0].mxu0 %v436
      %v704 = vpop.f32.mrb[0].mxu0
      %v705 = vadd.f32 %v289, %v704
      %v706 = vpop.f32.mrb[0].mxu0
      %v707 = vpop.f32.mrb[0].mxu0
      %v708 = vadd.f32 %v289, %v707
      %v709 = vpop.f32.mrb[0].mxu0
      %710 = vmatprep.mubr.bf16.mxu0 %v440
      %711 = vmatmul.mubr.bf16.gmra.mrb[0].mxu0 %v439
      %v712 = vpop.f32.mrb[0].mxu0
      %v713 = vadd.f32 %v289, %v712
      %v714 = vpop.f32.mrb[0].mxu0
      %v715 = vpop.f32.mrb[0].mxu0
      %v716 = vadd.f32 %v289, %v715
      %v717 = vpop.f32.mrb[0].mxu0
      %718 = vmatprep.mubr.bf16.mxu0 %v443
      %719 = vmatmul.mubr.bf16.gmra.mrb[0].mxu0 %v442
      %v720 = vpop.f32.mrb[0].mxu0
      %v721 = vadd.f32 %v289, %v720
      %v722 = vpop.f32.mrb[0].mxu0
      %v723 = vpop.f32.mrb[0].mxu0
      %v724 = vadd.f32 %v289, %v723
      %v725 = vpop.f32.mrb[0].mxu0
      %726 = vmatprep.mubr.bf16.mxu0 %v446
      %727 = vmatmul.mubr.bf16.gmra.mrb[0].mxu0 %v445
      %v728 = vpop.f32.mrb[0].mxu0
      %v729 = vadd.f32 %v289, %v728
      %v730 = vpop.f32.mrb[0].mxu0
      %v731 = vpop.f32.mrb[0].mxu0
      %v732 = vadd.f32 %v289, %v731
      %v733 = vpop.f32.mrb[0].mxu0
      %734 = vmatprep.mubr.bf16.mxu0 %v449
      %735 = vmatmul.mubr.bf16.gmra.mrb[0].mxu0 %v448
      %v736 = vpop.f32.mrb[0].mxu0
      %v737 = vadd.f32 %v289, %v736
      %v738 = vpop.f32.mrb[0].mxu0
      %v739 = vpop.f32.mrb[0].mxu0
      %v740 = vadd.f32 %v289, %v739
      %v741 = vpop.f32.mrb[0].mxu0
      %742 = vmatprep.mubr.bf16.mxu0 %v452
      %743 = vmatmul.mubr.bf16.gmra.mrb[0].mxu0 %v451
      %v744 = vpop.f32.mrb[0].mxu0
      %v745 = vadd.f32 %v289, %v744
      %v746 = vpop.f32.mrb[0].mxu0
      %v747 = vpop.f32.mrb[0].mxu0
      %v748 = vadd.f32 %v289, %v747
      %v749 = vpop.f32.mrb[0].mxu0
      %750 = vmatprep.mubr.bf16.mxu0 %v455
      %751 = vmatmul.mubr.bf16.gmra.mrb[0].mxu0 %v454
      %v752 = vpop.f32.mrb[0].mxu0
      %v753 = vadd.f32 %v289, %v752
      %v754 = vpop.f32.mrb[0].mxu0
      %v755 = vpop.f32.mrb[0].mxu0
      %v756 = vadd.f32 %v289, %v755
      %v757 = vpop.f32.mrb[0].mxu0
      %758 = vmatprep.mubr.bf16.mxu0 %v458
      %759 = vmatmul.mubr.bf16.gmra.mrb[0].mxu0 %v457
      %v760 = vpop.f32.mrb[0].mxu0
      %v761 = vadd.f32 %v289, %v760
      %v762 = vpop.f32.mrb[0].mxu0
      %v763 = vpop.f32.mrb[0].mxu0
      %v764 = vadd.f32 %v289, %v763
      %v765 = vpop.f32.mrb[0].mxu0
      %766 = vmatprep.mubr.bf16.mxu0 %v461
      %767 = vmatmul.mubr.bf16.gmra.mrb[0].mxu0 %v460
      %v768 = vpop.f32.mrb[0].mxu0
      %v769 = vadd.f32 %v289, %v768
      %v770 = vpop.f32.mrb[0].mxu0
      %v771 = vpop.f32.mrb[0].mxu0
      %v772 = vadd.f32 %v289, %v771
      %v773 = vpop.f32.mrb[0].mxu0
      %774 = vmatprep.mubr.bf16.mxu0 %v464
      %775 = vmatmul.mubr.bf16.gmra.mrb[0].mxu0 %v463
      %v776 = vpop.f32.mrb[0].mxu0
      %v777 = vadd.f32 %v289, %v776
      %v778 = vpop.f32.mrb[0].mxu0
      %v779 = vpop.f32.mrb[0].mxu0
      %v780 = vadd.f32 %v289, %v779
      %v781 = vpop.f32.mrb[0].mxu0
      %782 = vmatprep.mubr.bf16.mxu0 %v467
      %783 = vmatmul.mubr.bf16.gmra.mrb[0].mxu0 %v466
      %v784 = vpop.f32.mrb[0].mxu0
      %v785 = vadd.f32 %v289, %v784
      %v786 = vpop.f32.mrb[0].mxu0
      %v787 = vpop.f32.mrb[0].mxu0
      %v788 = vadd.f32 %v289, %v787
      %v789 = vpop.f32.mrb[0].mxu0
      %790 = vmatprep.mubr.bf16.mxu0 %v470
      %791 = vmatmul.mubr.bf16.gmra.mrb[0].mxu0 %v469
      %v792 = vpop.f32.mrb[0].mxu0
      %v793 = vadd.f32 %v289, %v792
      %v794 = vpop.f32.mrb[0].mxu0
      %v795 = vpop.f32.mrb[0].mxu0
      %v796 = vadd.f32 %v289, %v795
      %v797 = vpop.f32.mrb[0].mxu0
      %798 = vmatprep.mubr.bf16.mxu0 %v473
      %799 = vmatmul.mubr.bf16.gmra.mrb[0].mxu0 %v472
      %v800 = vpop.f32.mrb[0].mxu0
      %v801 = vadd.f32 %v289, %v800
      %v802 = vpop.f32.mrb[0].mxu0
      %v803 = vpop.f32.mrb[0].mxu0
      %v804 = vadd.f32 %v289, %v803
      %v805 = vpop.f32.mrb[0].mxu0
      %806 = vmatprep.mubr.bf16.mxu0 %v476
      %807 = vmatmul.mubr.bf16.gmra.mrb[0].mxu0 %v475
      %v808 = vpop.f32.mrb[0].mxu0
      %v809 = vadd.f32 %v289, %v808
      %v810 = vpop.f32.mrb[0].mxu0
      %v811 = vpop.f32.mrb[0].mxu0
      %v812 = vadd.f32 %v289, %v811
      %v813 = vpop.f32.mrb[0].mxu0
      %814 = vmatprep.mubr.bf16.mxu0 %v479
      %815 = vmatmul.mubr.bf16.gmra.mrb[0].mxu0 %v478
      %v816 = vpop.f32.mrb[0].mxu0
      %v817 = vadd.f32 %v289, %v816
      %v818 = vpop.f32.mrb[0].mxu0
      %v819 = vpop.f32.mrb[0].mxu0
      %v820 = vpop.f32.mrb[0].mxu0
      %821 = vdwg.mxu0
      %822 = vmatprep.subr.bf16.mxu0 0
      %823 = vmatpush1.bf16.msra.mxu0 %v638
      %824 = vmatprep.subr.bf16.mxu0 0
      %825 = vmatpush1.bf16.msra.mxu0 %v639
      %826 = vmatprep.subr.bf16.mxu0 0
      %827 = vmatpush1.bf16.msra.mxu0 %v640
      %828 = vmatprep.subr.bf16.mxu0 0
      %829 = vmatpush1.bf16.msra.mxu0 %v641
      %830 = vmatprep.subr.bf16.mxu0 0
      %831 = vmatpush1.bf16.msra.mxu0 %v642
      %832 = vmatprep.subr.bf16.mxu0 0
      %833 = vmatpush1.bf16.msra.mxu0 %v643
      %834 = vmatprep.subr.bf16.mxu0 0
      %835 = vmatpush1.bf16.msra.mxu0 %v644
      %836 = vmatprep.subr.bf16.mxu0 0
      %837 = vmatpush1.bf16.msra.mxu0 %v645
      %838 = vmatprep.subr.bf16.mxu0 0
      %839 = vmatpush1.bf16.msra.mxu0 0
      %840 = vmatprep.subr.bf16.mxu0 0
      %841 = vmatpush1.bf16.msra.mxu0 0
      %842 = vmatprep.subr.bf16.mxu0 0
      %843 = vmatpush1.bf16.msra.mxu0 0
      %844 = vmatprep.subr.bf16.mxu0 0
      %845 = vmatpush1.bf16.msra.mxu0 0
      %846 = vmatprep.subr.bf16.mxu0 0
      %847 = vmatpush1.bf16.msra.mxu0 0
      %848 = vmatprep.subr.bf16.mxu0 0
      %849 = vmatpush1.bf16.msra.mxu0 0
      %850 = vmatprep.subr.bf16.mxu0 0
      %851 = vmatpush1.bf16.msra.mxu0 0
      %852 = vmatprep.subr.bf16.mxu0 0
      %853 = vmatpush1.bf16.msra.mxu0 0
      %854 = vmatprep.mubr.bf16.mxu0 0
      %855 = vmatmul.mubr.bf16.gmra.mrb[0].mxu0 %v438
      %v856 = vpop.f32.mrb[0].mxu0
      %v857 = vadd.f32 %v705, %v856
      %v858 = vpop.f32.mrb[0].mxu0
      %v859 = vpop.f32.mrb[0].mxu0
      %v860 = vadd.f32 %v708, %v859
      %v861 = vpop.f32.mrb[0].mxu0
      %862 = vmatprep.mubr.bf16.mxu0 0
      %863 = vmatmul.mubr.bf16.gmra.mrb[0].mxu0 %v441
      %v864 = vpop.f32.mrb[0].mxu0
      %v865 = vadd.f32 %v713, %v864
      %v866 = vpop.f32.mrb[0].mxu0
      %v867 = vpop.f32.mrb[0].mxu0
      %v868 = vadd.f32 %v716, %v867
      %v869 = vpop.f32.mrb[0].mxu0
      %870 = vmatprep.mubr.bf16.mxu0 0
      %871 = vmatmul.mubr.bf16.gmra.mrb[0].mxu0 %v444
      %v872 = vpop.f32.mrb[0].mxu0
      %v873 = vadd.f32 %v721, %v872
      %v874 = vpop.f32.mrb[0].mxu0
      %v875 = vpop.f32.mrb[0].mxu0
      %v876 = vadd.f32 %v724, %v875
      %v877 = vpop.f32.mrb[0].mxu0
      %878 = vmatprep.mubr.bf16.mxu0 0
      %879 = vmatmul.mubr.bf16.gmra.mrb[0].mxu0 %v447
      %v880 = vpop.f32.mrb[0].mxu0
      %v881 = vadd.f32 %v729, %v880
      %v882 = vpop.f32.mrb[0].mxu0
      %v883 = vpop.f32.mrb[0].mxu0
      %v884 = vadd.f32 %v732, %v883
      %v885 = vpop.f32.mrb[0].mxu0
      %886 = vmatprep.mubr.bf16.mxu0 0
      %887 = vmatmul.mubr.bf16.gmra.mrb[0].mxu0 %v450
      %v888 = vpop.f32.mrb[0].mxu0
      %v889 = vadd.f32 %v737, %v888
      %v890 = vpop.f32.mrb[0].mxu0
      %v891 = vpop.f32.mrb[0].mxu0
      %v892 = vadd.f32 %v740, %v891
      %v893 = vpop.f32.mrb[0].mxu0
      %894 = vmatprep.mubr.bf16.mxu0 0
      %895 = vmatmul.mubr.bf16.gmra.mrb[0].mxu0 %v453
      %v896 = vpop.f32.mrb[0].mxu0
      %v897 = vadd.f32 %v745, %v896
      %v898 = vpop.f32.mrb[0].mxu0
      %v899 = vpop.f32.mrb[0].mxu0
      %v900 = vadd.f32 %v748, %v899
      %v901 = vpop.f32.mrb[0].mxu0
      %902 = vmatprep.mubr.bf16.mxu0 0
      %903 = vmatmul.mubr.bf16.gmra.mrb[0].mxu0 %v456
      %v904 = vpop.f32.mrb[0].mxu0
      %v905 = vadd.f32 %v753, %v904
      %v906 = vpop.f32.mrb[0].mxu0
      %v907 = vpop.f32.mrb[0].mxu0
      %v908 = vadd.f32 %v756, %v907
      %v909 = vpop.f32.mrb[0].mxu0
      %910 = vmatprep.mubr.bf16.mxu0 0
      %911 = vmatmul.mubr.bf16.gmra.mrb[0].mxu0 %v459
      %v912 = vpop.f32.mrb[0].mxu0
      %v913 = vadd.f32 %v761, %v912
      %v914 = vpop.f32.mrb[0].mxu0
      %v915 = vpop.f32.mrb[0].mxu0
      %v916 = vadd.f32 %v764, %v915
      %v917 = vpop.f32.mrb[0].mxu0
      %918 = vmatprep.mubr.bf16.mxu0 0
      %919 = vmatmul.mubr.bf16.gmra.mrb[0].mxu0 %v462
      %v920 = vpop.f32.mrb[0].mxu0
      %v921 = vadd.f32 %v769, %v920
      %v922 = vpop.f32.mrb[0].mxu0
      %v923 = vpop.f32.mrb[0].mxu0
      %v924 = vadd.f32 %v772, %v923
      %v925 = vpop.f32.mrb[0].mxu0
      %926 = vmatprep.mubr.bf16.mxu0 0
      %927 = vmatmul.mubr.bf16.gmra.mrb[0].mxu0 %v465
      %v928 = vpop.f32.mrb[0].mxu0
      %v929 = vadd.f32 %v777, %v928
      %v930 = vpop.f32.mrb[0].mxu0
      %v931 = vpop.f32.mrb[0].mxu0
      %v932 = vadd.f32 %v780, %v931
      %v933 = vpop.f32.mrb[0].mxu0
      %934 = vmatprep.mubr.bf16.mxu0 0
      %935 = vmatmul.mubr.bf16.gmra.mrb[0].mxu0 %v468
      %v936 = vpop.f32.mrb[0].mxu0
      %v937 = vadd.f32 %v785, %v936
      %v938 = vpop.f32.mrb[0].mxu0
      %v939 = vpop.f32.mrb[0].mxu0
      %v940 = vadd.f32 %v788, %v939
      %v941 = vpop.f32.mrb[0].mxu0
      %942 = vmatprep.mubr.bf16.mxu0 0
      %943 = vmatmul.mubr.bf16.gmra.mrb[0].mxu0 %v471
      %v944 = vpop.f32.mrb[0].mxu0
      %v945 = vadd.f32 %v793, %v944
      %v946 = vpop.f32.mrb[0].mxu0
      %v947 = vpop.f32.mrb[0].mxu0
      %v948 = vadd.f32 %v796, %v947
      %v949 = vpop.f32.mrb[0].mxu0
      %950 = vmatprep.mubr.bf16.mxu0 0
      %951 = vmatmul.mubr.bf16.gmra.mrb[0].mxu0 %v474
      %v952 = vpop.f32.mrb[0].mxu0
      %v953 = vadd.f32 %v801, %v952
      %v954 = vpop.f32.mrb[0].mxu0
      %v955 = vpop.f32.mrb[0].mxu0
      %v956 = vadd.f32 %v804, %v955
      %v957 = vpop.f32.mrb[0].mxu0
      %958 = vmatprep.mubr.bf16.mxu0 0
      %959 = vmatmul.mubr.bf16.gmra.mrb[0].mxu0 %v477
      %v960 = vpop.f32.mrb[0].mxu0
      %v961 = vadd.f32 %v809, %v960
      %v962 = vpop.f32.mrb[0].mxu0
      %v963 = vpop.f32.mrb[0].mxu0
      %v964 = vadd.f32 %v812, %v963
      %v965 = vpop.f32.mrb[0].mxu0
      %966 = vmatprep.mubr.bf16.mxu0 0
      %967 = vmatmul.mubr.bf16.gmra.mrb[0].mxu0 %v480
      %v968 = vpop.f32.mrb[0].mxu0
      %v969 = vadd.f32 %v817, %v968
      %v970 = vpop.f32.mrb[0].mxu0
      %v971 = vpop.f32.mrb[0].mxu0
      %v972 = vpop.f32.mrb[0].mxu0
      %973 = vdwg.mxu0
      %v974 = vmax.f32 %v857, 0.0
      %v975 = vmax.f32 %v860, 0.0
      %v976 = vmax.f32 %v865, 0.0
      %v977 = vmax.f32 %v868, 0.0
      %v978 = vmax.f32 %v873, 0.0
      %v979 = vmax.f32 %v876, 0.0
      %v980 = vmax.f32 %v881, 0.0
      %v981 = vmax.f32 %v884, 0.0
      %v982 = vmax.f32 %v889, 0.0
      %v983 = vmax.f32 %v892, 0.0
      %v984 = vmax.f32 %v897, 0.0
      %v985 = vmax.f32 %v900, 0.0
      %v986 = vmax.f32 %v905, 0.0
      %v987 = vmax.f32 %v908, 0.0
      %v988 = vmax.f32 %v913, 0.0
      %v989 = vmax.f32 %v916, 0.0
      %v990 = vmax.f32 %v921, 0.0
      %v991 = vmax.f32 %v924, 0.0
      %v992 = vmax.f32 %v929, 0.0
      %v993 = vmax.f32 %v932, 0.0
      %v994 = vmax.f32 %v937, 0.0
      %v995 = vmax.f32 %v940, 0.0
      %v996 = vmax.f32 %v945, 0.0
      %v997 = vmax.f32 %v948, 0.0
      %v998 = vmax.f32 %v953, 0.0
      %v999 = vmax.f32 %v956, 0.0
      %v1000 = vmax.f32 %v961, 0.0
      %v1001 = vmax.f32 %v964, 0.0
      %v1002 = vmax.f32 %v969, 0.0
      %v1003 = vpack.c.bf16 %v975, %v974
      %v1004 = vpack.c.bf16 %v977, %v976
      %v1005 = vpack.c.bf16 %v979, %v978
      %v1006 = vpack.c.bf16 %v981, %v980
      %v1007 = vpack.c.bf16 %v983, %v982
      %v1008 = vpack.c.bf16 %v985, %v984
      %v1009 = vpack.c.bf16 %v987, %v986
      %v1010 = vpack.c.bf16 %v989, %v988
      %v1011 = vpack.c.bf16 %v991, %v990
      %v1012 = vpack.c.bf16 %v993, %v992
      %v1013 = vpack.c.bf16 %v995, %v994
      %v1014 = vpack.c.bf16 %v997, %v996
      %v1015 = vpack.c.bf16 %v999, %v998
      %v1016 = vpack.c.bf16 %v1001, %v1000
      %v1017 = vpack.c.bf16 %v1002, %v1002
      %v1033 = vunpack.c.l.b16 %v1003
      %v1034 = vunpack.c.h.b16 %v1003
      %v1035 = vunpack.c.l.b16 %v1004
      %v1036 = vunpack.c.h.b16 %v1004
      %v1037 = vunpack.c.l.b16 %v1005
      %v1038 = vunpack.c.h.b16 %v1005
      %v1039 = vunpack.c.l.b16 %v1006
      %v1040 = vunpack.c.h.b16 %v1006
      %v1041 = vunpack.c.l.b16 %v1007
      %v1042 = vunpack.c.h.b16 %v1007
      %v1043 = vunpack.c.l.b16 %v1008
      %v1044 = vunpack.c.h.b16 %v1008
      %v1045 = vunpack.c.l.b16 %v1009
      %v1046 = vunpack.c.h.b16 %v1009
      %v1047 = vunpack.c.l.b16 %v1010
      %v1048 = vunpack.c.h.b16 %v1010
      %v1049 = vunpack.c.l.b16 %v1011
      %v1050 = vunpack.c.h.b16 %v1011
      %v1051 = vunpack.c.l.b16 %v1012
      %v1052 = vunpack.c.h.b16 %v1012
      %v1053 = vunpack.c.l.b16 %v1013
      %v1054 = vunpack.c.h.b16 %v1013
      %v1055 = vunpack.c.l.b16 %v1014
      %v1056 = vunpack.c.h.b16 %v1014
      %v1057 = vunpack.c.l.b16 %v1015
      %v1058 = vunpack.c.h.b16 %v1015
      %v1059 = vunpack.c.l.b16 %v1016
      %v1060 = vunpack.c.h.b16 %v1016
      %v1061 = vunpack.c.l.b16 %v1017
      %v1062 = vpack.c.b16 %v1033, %v1033
      %v1063 = vpack.c.b16 %v1034, %v1034
      %v1064 = vpack.c.b16 %v1035, %v1035
      %v1065 = vpack.c.b16 %v1036, %v1036
      %v1066 = vpack.c.b16 %v1037, %v1037
      %v1067 = vpack.c.b16 %v1038, %v1038
      %v1068 = vpack.c.b16 %v1039, %v1039
      %v1069 = vpack.c.b16 %v1040, %v1040
      %v1070 = vpack.c.b16 %v1041, %v1041
      %v1071 = vpack.c.b16 %v1042, %v1042
      %v1072 = vpack.c.b16 %v1043, %v1043
      %v1073 = vpack.c.b16 %v1044, %v1044
      %v1074 = vpack.c.b16 %v1045, %v1045
      %v1075 = vpack.c.b16 %v1046, %v1046
      %v1076 = vpack.c.b16 %v1047, %v1047
      %v1077 = vpack.c.b16 %v1048, %v1048
      %v1078 = vpack.c.b16 %v1049, %v1049
      %v1079 = vpack.c.b16 %v1050, %v1050
      %v1080 = vpack.c.b16 %v1051, %v1051
      %v1081 = vpack.c.b16 %v1052, %v1052
      %v1082 = vpack.c.b16 %v1053, %v1053
      %v1083 = vpack.c.b16 %v1054, %v1054
      %v1084 = vpack.c.b16 %v1055, %v1055
      %v1085 = vpack.c.b16 %v1056, %v1056
      %v1086 = vpack.c.b16 %v1057, %v1057
      %v1087 = vpack.c.b16 %v1058, %v1058
      %v1088 = vpack.c.b16 %v1059, %v1059
      %v1089 = vpack.c.b16 %v1060, %v1060
      %v1090 = vpack.c.b16 %v1061, %v1061
      %1120 = vst [vmem:[%s175] sm:$0xf] %v1062
      %1121 = vst [vmem:[%s175 + $0x4] sm:$0xf] %v1063
      %1122 = vst [vmem:[%s175 + $0x8] sm:$0xf] %v1064
      %1123 = vst [vmem:[%s175 + $0xc] sm:$0xf] %v1065
      %1124 = vst [vmem:[%s175 + $0x10] sm:$0xf] %v1066
      %1125 = vst [vmem:[%s175 + $0x14] sm:$0xf] %v1067
      %1126 = vst [vmem:[%s175 + $0x18] sm:$0xf] %v1068
      %1127 = vst [vmem:[%s175 + $0x1c] sm:$0xf] %v1069
      %1128 = vst [vmem:[%s175 + $0x20] sm:$0xf] %v1070
      %1129 = vst [vmem:[%s175 + $0x24] sm:$0xf] %v1071
      %1130 = vst [vmem:[%s175 + $0x28] sm:$0xf] %v1072
      %1131 = vst [vmem:[%s175 + $0x2c] sm:$0xf] %v1073
      %1132 = vst [vmem:[%s175 + $0x30] sm:$0xf] %v1074
      %1133 = vst [vmem:[%s175 + $0x34] sm:$0xf] %v1075
      %1134 = vst [vmem:[%s175 + $0x38] sm:$0xf] %v1076
      %1135 = vst [vmem:[%s175 + $0x3c] sm:$0xf] %v1077
      %1136 = vst [vmem:[%s175 + $0x40] sm:$0xf] %v1078
      %1137 = vst [vmem:[%s175 + $0x44] sm:$0xf] %v1079
      %1138 = vst [vmem:[%s175 + $0x48] sm:$0xf] %v1080
      %1139 = vst [vmem:[%s175 + $0x4c] sm:$0xf] %v1081
      %1140 = vst [vmem:[%s175 + $0x50] sm:$0xf] %v1082
      %1141 = vst [vmem:[%s175 + $0x54] sm:$0xf] %v1083
      %1142 = vst [vmem:[%s175 + $0x58] sm:$0xf] %v1084
      %1143 = vst [vmem:[%s175 + $0x5c] sm:$0xf] %v1085
      %1144 = vst [vmem:[%s175 + $0x60] sm:$0xf] %v1086
      %1145 = vst [vmem:[%s175 + $0x64] sm:$0xf] %v1087
      %1146 = vst [vmem:[%s175 + $0x68] sm:$0xf] %v1088
      %1147 = vst [vmem:[%s175 + $0x6c] sm:$0xf] %v1089
      %1148 = vst [vmem:[%s175 + $0x70] sm:$0xf] %v1090
      %s1149 = smul.u32 29, %s14
      %p1150 = scmp.lt.s32.totalorder %s1149, 57
      %s1151 = scalar_select %p1150, %s1149, 57
      %s1152 = smul.addr %s1151, 4
      %s1153 = scalar_lea.vmem %s3, %s1152
      // Predicated region
      $region33: #{cnn2d_nopooling_forward.5} parent=31 // pred_check
        %p1154 = pneg %p100
      $region34: #{cnn2d_nopooling_forward.5} parent=31 // pred_check_branch
        %1156 = sbr.rel (%p1154) target = $region36
      $region35: #{cnn2d_nopooling_forward.5} parent=31 // pred_region
        %s1157 = smul.u32 29, %s14
      $region36: #{cnn2d_nopooling_forward.5} parent=31 // pred_fallthru
        _
    $region32: #{cnn2d_nopooling_forward.5} parent=5 // pred_fallthru
      _
    %p1158 = scmp.le.s32.totalorder 2, %s9
    // Predicated region
    $region37: #{cnn2d_nopooling_forward.5} parent=5 // pred_check
      %p1159 = pneg %p1158
    $region38: #{cnn2d_nopooling_forward.5} parent=5 // pred_check_branch
      %1161 = sbr.rel (%p1159) target = $region40
    $region39: #{cnn2d_nopooling_forward.5} parent=5 // pred_region
      %s1162 = ssub.s32 %s9, 2
      // Predicated region
      $region41: #{cnn2d_nopooling_forward.5} parent=39 // pred_check
        %p1163 = pneg %p106
      $region42: #{cnn2d_nopooling_forward.5} parent=39 // pred_check_branch
        %1165 = sbr.rel (%p1163) target = $region44
      $region43: #{cnn2d_nopooling_forward.5} parent=39 // pred_region
        %s1166 = smul.u32 29, %s15
        %p1167 = scmp.lt.s32.totalorder %s1166, 57
        %s1168 = scalar_select %p1167, %s1166, 57
        %s1169 = smul.addr %s1168, 4
        %s1170 = scalar_lea.vmem %s3, %s1169
      $region44: #{cnn2d_nopooling_forward.5} parent=39 // pred_fallthru
        _
    $region40: #{cnn2d_nopooling_forward.5} parent=5 // pred_fallthru
      _
  $region6: #{cnn2d_nopooling_forward.5} parent=0 // loop_footer
    %s13 = sadd.s32 1, %s9
  $region7: #{cnn2d_nopooling_forward.5} parent=0 // loop_footer_branch
    %8 = sbr.rel target = $region3
  $region8: #{cnn2d_nopooling_forward.5} parent=0 // loop_exit
    _

// kernel: cnn2d_nopooling_forward.6
$region0: #{cnn2d_nopooling_forward.6}
  #allocation0 [shape = 'u32[]', space=smem, size = 0x4, offset = 0x4, fixed_abs, tag = 'smem constant byte address 0x4 - core index']
  #allocation1 [shape = 'u32[144,128]{1,0:T(1,128)}', space=vmem, size = 0x12000, scoped, tag = 'internal scratch']
  %s0 = inlined_call_operand.vmem [shape: bf16[128,640], index: 0, kind: input, shape index: {}]
  %s1 = inlined_call_operand.vmem [shape: bf16[640,128], index: 1, kind: input, shape index: {}]
  %s2 = inlined_call_operand.vmem [shape: f32[1,128], index: 2, kind: input, shape index: {}]
  %s3 = inlined_call_operand.vmem [shape: bf16[128,128], index: 3, kind: output, shape index: {}]
  %s4 = sld [smem:[#allocation0]]
  $region45: #{cnn2d_nopooling_forward.6} parent=0
    _
  %s6 = ssub.s32 1, %s4
  %s7 = scalar_select 0, %s6, %s4
  loop: start=0, step=1, limit=4
  $region2: #{cnn2d_nopooling_forward.6} parent=0 // loop_pre_header
    _
  $region3: #{cnn2d_nopooling_forward.6} parent=0 // loop_header
    %s9 = sphi 0, %s13
    %p10 = scmp.ge.s32.totalorder %s9, 4
    %s19 = sphi 0, %s21
    %s22 = sphi 0, %s19
    %s23 = sphi 0, %s22
    %s39 = sphi 0, %s23
    %s43 = sphi 0, %s43
    %s45 = sphi 0, %s43
    %s46 = sphi 0, %s45
    %s60 = sphi 0, %s46
    %s64 = sphi 0, %s64
    %s66 = sphi 0, %s64
    %s67 = sphi 0, %s66
    %s81 = sphi 0, %s67
    %s87 = sphi 0, %s89
    %s90 = sphi 0, %s87
    %s91 = sphi 0, %s90
    %s107 = sphi 0, %s91
  $region4: #{cnn2d_nopooling_forward.6} parent=0 // loop_header_branch
    %12 = sbr.rel (%p10) target = $region8
  $region5: #{cnn2d_nopooling_forward.6} parent=0 // loop_body
    %s14 = ssub.s32 %s9, 1
    %s15 = ssub.s32 %s9, 2
    %s16 = sadd.s32 %s9, 1
    %s17 = ssub.s32 %s9, %s16
    %p18 = scmp.eq.s32.totalorder %s17, 0
    %s20 = sadd.s32 %s19, 1
    %s21 = scalar_select %p18, %s19, %s20
    %p24 = pneg %p18
    %p25 = scmp.eq.s32.totalorder %s9, 1
    %p26 = por %p24, %p25
    %p27 = scmp.ne.s32.totalorder %s19, %s22
    %p28 = scmp.eq.s32.totalorder %s9, 0
    %p29 = por %p27, %p28
    %p30 = scmp.ne.s32.totalorder %s19, %s22
    %p31 = scmp.eq.s32.totalorder %s14, 1
    %p32 = por %p30, %p31
    %p33 = scmp.ne.s32.totalorder %s22, %s23
    %p34 = scmp.eq.s32.totalorder %s14, 0
    %p35 = por %p33, %p34
    %p36 = scmp.ne.s32.totalorder %s22, %s23
    %p37 = scmp.eq.s32.totalorder %s15, 1
    %p38 = por %p36, %p37
    %p40 = scmp.ne.s32.totalorder %s23, %s39
    %p41 = scmp.eq.s32.totalorder %s15, 0
    %p42 = por %p40, %p41
    %s44 = sadd.s32 %s43, 1
    %p47 = scmp.eq.s32.totalorder %s9, 1
    %p48 = scmp.ne.s32.totalorder %s43, %s45
    %p49 = scmp.eq.s32.totalorder %s9, 0
    %p50 = por %p48, %p49
    %p51 = scmp.ne.s32.totalorder %s43, %s45
    %p52 = scmp.eq.s32.totalorder %s14, 1
    %p53 = por %p51, %p52
    %p54 = scmp.ne.s32.totalorder %s45, %s46
    %p55 = scmp.eq.s32.totalorder %s14, 0
    %p56 = por %p54, %p55
    %p57 = scmp.ne.s32.totalorder %s45, %s46
    %p58 = scmp.eq.s32.totalorder %s15, 1
    %p59 = por %p57, %p58
    %p61 = scmp.ne.s32.totalorder %s46, %s60
    %p62 = scmp.eq.s32.totalorder %s15, 0
    %p63 = por %p61, %p62
    %s65 = sadd.s32 %s64, 1
    %p68 = scmp.eq.s32.totalorder %s9, 1
    %p69 = scmp.ne.s32.totalorder %s64, %s66
    %p70 = scmp.eq.s32.totalorder %s9, 0
    %p71 = por %p69, %p70
    %p72 = scmp.ne.s32.totalorder %s64, %s66
    %p73 = scmp.eq.s32.totalorder %s14, 1
    %p74 = por %p72, %p73
    %p75 = scmp.ne.s32.totalorder %s66, %s67
    %p76 = scmp.eq.s32.totalorder %s14, 0
    %p77 = por %p75, %p76
    %p78 = scmp.ne.s32.totalorder %s66, %s67
    %p79 = scmp.eq.s32.totalorder %s15, 1
    %p80 = por %p78, %p79
    %p82 = scmp.ne.s32.totalorder %s67, %s81
    %p83 = scmp.eq.s32.totalorder %s15, 0
    %p84 = por %p82, %p83
    %s85 = ssub.s32 %s9, %s16
    %p86 = scmp.eq.s32.totalorder %s85, 0
    %s88 = sadd.s32 %s87, 1
    %s89 = scalar_select %p86, %s87, %s88
    %p92 = pneg %p86
    %p93 = scmp.eq.s32.totalorder %s9, 1
    %p94 = por %p92, %p93
    %p95 = scmp.ne.s32.totalorder %s87, %s90
    %p96 = scmp.eq.s32.totalorder %s9, 0
    %p97 = por %p95, %p96
    %p98 = scmp.ne.s32.totalorder %s87, %s90
    %p99 = scmp.eq.s32.totalorder %s14, 1
    %p100 = por %p98, %p99
    %p101 = scmp.ne.s32.totalorder %s90, %s91
    %p102 = scmp.eq.s32.totalorder %s14, 0
    %p103 = por %p101, %p102
    %p104 = scmp.ne.s32.totalorder %s90, %s91
    %p105 = scmp.eq.s32.totalorder %s15, 1
    %p106 = por %p104, %p105
    %p108 = scmp.ne.s32.totalorder %s91, %s107
    %p109 = scmp.eq.s32.totalorder %s15, 0
    %p110 = por %p108, %p109
    %p111 = scmp.le.s32.totalorder 1, %s9
    %p112 = scmp.lt.s32.totalorder %s9, 3
    %p113 = pnand %p111, %p112
    %p114 = pneg %p113
    // Predicated region
    $region9: #{cnn2d_nopooling_forward.6} parent=5 // pred_check
      _
    $region10: #{cnn2d_nopooling_forward.6} parent=5 // pred_check_branch
      %116 = sbr.rel (%p113) target = $region12
    $region11: #{cnn2d_nopooling_forward.6} parent=5 // pred_region
      %s117 = ssub.s32 %s9, 1
      // Predicated region
      $region13: #{cnn2d_nopooling_forward.6} parent=11 // pred_check
        %p118 = pneg %p56
      $region14: #{cnn2d_nopooling_forward.6} parent=11 // pred_check_branch
        %120 = sbr.rel (%p118) target = $region16
      $region15: #{cnn2d_nopooling_forward.6} parent=11 // pred_region
        _
      $region16: #{cnn2d_nopooling_forward.6} parent=11 // pred_fallthru
        _
      // Predicated region
      $region17: #{cnn2d_nopooling_forward.6} parent=11 // pred_check
        %p121 = pneg %p77
      $region18: #{cnn2d_nopooling_forward.6} parent=11 // pred_check_branch
        %123 = sbr.rel (%p121) target = $region20
      $region19: #{cnn2d_nopooling_forward.6} parent=11 // pred_region
        _
      $region20: #{cnn2d_nopooling_forward.6} parent=11 // pred_fallthru
        _
    $region12: #{cnn2d_nopooling_forward.6} parent=5 // pred_fallthru
      _
    %p124 = scmp.lt.s32.totalorder %s9, 2
    // Predicated region
    $region21: #{cnn2d_nopooling_forward.6} parent=5 // pred_check
      %p125 = pneg %p124
    $region22: #{cnn2d_nopooling_forward.6} parent=5 // pred_check_branch
      %127 = sbr.rel (%p125) target = $region24
    $region23: #{cnn2d_nopooling_forward.6} parent=5 // pred_region
      // Predicated region
      $region25: #{cnn2d_nopooling_forward.6} parent=23 // pred_check
        %p128 = pneg %p29
      $region26: #{cnn2d_nopooling_forward.6} parent=23 // pred_check_branch
        %130 = sbr.rel (%p128) target = $region28
      $region27: #{cnn2d_nopooling_forward.6} parent=23 // pred_region
        %s131 = smul.u32 8, %s9
        %p132 = scmp.lt.s32.totalorder %s131, 15
        %s133 = scalar_select %p132, %s131, 15
        %s134 = smul.addr %s133, 5
        %s135 = smul.addr %s134, 4
        %s136 = scalar_lea.vmem %s0, %s135
        %s137 = smul.u32 8, %s9
      $region28: #{cnn2d_nopooling_forward.6} parent=23 // pred_fallthru
        _
    $region24: #{cnn2d_nopooling_forward.6} parent=5 // pred_fallthru
      _
    %p138 = scmp.le.s32.totalorder 1, %s9
    %p139 = scmp.lt.s32.totalorder %s9, 3
    %p140 = pnand %p138, %p139
    %p141 = pneg %p140
    // Predicated region
    $region29: #{cnn2d_nopooling_forward.6} parent=5 // pred_check
      _
    $region30: #{cnn2d_nopooling_forward.6} parent=5 // pred_check_branch
      %143 = sbr.rel (%p140) target = $region32
    $region31: #{cnn2d_nopooling_forward.6} parent=5 // pred_region
      %s144 = ssub.s32 %s9, 1
      %s145 = smul.u32 8, %s14
      %p146 = scmp.lt.s32.totalorder %s145, 15
      %s147 = scalar_select %p146, %s145, 15
      %s148 = smul.addr %s147, 5
      %s149 = smul.addr %s148, 4
      %s150 = scalar_lea.vmem %s0, %s149
      %p151 = pneg %p35
      %p152 = pneg %p32
      %p153 = pneg %p56
      %p154 = pneg %p53
      %p155 = pneg %p77
      %p156 = pneg %p74
      %p157 = pneg %p103
      %p158 = pneg %p100
      %s159 = smul.u32 8, %s14
      %p160 = scmp.lt.s32.totalorder %s159, 15
      %s161 = scalar_select %p160, %s159, 15
      %s162 = smul.addr %s161, 4
      %s163 = scalar_lea.vmem %s3, %s162
      %s164 = smul.u32 8, %s14
      %p165 = scmp.lt.s32.totalorder %s164, 15
      %s166 = scalar_select %p165, %s164, 15
      %s167 = smul.addr %s166, 5
      %s168 = smul.addr %s167, 4
      %s169 = scalar_lea.vmem %s0, %s168
      %s170 = smul.u32 8, %s14
      %s171 = smul.u32 8, %s14
      %p172 = scmp.lt.s32.totalorder %s171, 15
      %s173 = scalar_select %p172, %s171, 15
      %s174 = smul.addr %s173, 4
      %s175 = scalar_lea.vmem %s3, %s174
      %s176 = smul.u32 8, %s14
      %v178 = vld [vmem:[%s169] sm:$0xff]
      %v179 = vld [vmem:[%s169 + $0x8] sm:$0xff]
      %v180 = vld [vmem:[%s169 + $0x10] sm:$0xf]
      %v181 = vld [vmem:[%s169 + $0x14] sm:$0xff]
      %v182 = vld [vmem:[%s169 + $0x1c] sm:$0xff]
      %v183 = vld [vmem:[%s169 + $0x24] sm:$0xf]
      %v184 = vld [vmem:[%s169 + $0x28] sm:$0xff]
      %v185 = vld [vmem:[%s169 + $0x30] sm:$0xff]
      %v186 = vld [vmem:[%s169 + $0x38] sm:$0xf]
      %v187 = vld [vmem:[%s169 + $0x3c] sm:$0xff]
      %v188 = vld [vmem:[%s169 + $0x44] sm:$0xff]
      %v189 = vld [vmem:[%s169 + $0x4c] sm:$0xf]
      %v190 = vld [vmem:[%s169 + $0x50] sm:$0xff]
      %v191 = vld [vmem:[%s169 + $0x58] sm:$0xff]
      %v192 = vld [vmem:[%s169 + $0x60] sm:$0xf]
      %v193 = vld [vmem:[%s169 + $0x64] sm:$0xff]
      %v194 = vld [vmem:[%s169 + $0x6c] sm:$0xff]
      %v195 = vld [vmem:[%s169 + $0x74] sm:$0xf]
      %v196 = vld [vmem:[%s169 + $0x78] sm:$0xff]
      %v197 = vld [vmem:[%s169 + $0x80] sm:$0xff]
      %v198 = vld [vmem:[%s169 + $0x88] sm:$0xf]
      %v199 = vld [vmem:[%s169 + $0x8c] sm:$0xff]
      %v200 = vld [vmem:[%s169 + $0x94] sm:$0xff]
      %v201 = vld [vmem:[%s169 + $0x9c] sm:$0xf]
      %v202 = vld [vmem:[%s1] sm:$0xf]
      %v203 = vld [vmem:[%s1 + $0x4] sm:$0xf]
      %v204 = vld [vmem:[%s1 + $0x8] sm:$0xf]
      %v205 = vld [vmem:[%s1 + $0xc] sm:$0xf]
      %v206 = vld [vmem:[%s1 + $0x10] sm:$0xf]
      %v207 = vld [vmem:[%s1 + $0x14] sm:$0xf]
      %v208 = vld [vmem:[%s1 + $0x18] sm:$0xf]
      %v209 = vld [vmem:[%s1 + $0x1c] sm:$0xf]
      %v210 = vld [vmem:[%s1 + $0x20] sm:$0xf]
      %v211 = vld [vmem:[%s1 + $0x24] sm:$0xf]
      %v212 = vld [vmem:[%s1 + $0x28] sm:$0xf]
      %v213 = vld [vmem:[%s1 + $0x2c] sm:$0xf]
      %v214 = vld [vmem:[%s1 + $0x30] sm:$0xf]
      %v215 = vld [vmem:[%s1 + $0x34] sm:$0xf]
      %v216 = vld [vmem:[%s1 + $0x38] sm:$0xf]
      %v217 = vld [vmem:[%s1 + $0x3c] sm:$0xf]
      %v218 = vld [vmem:[%s1 + $0x40] sm:$0xf]
      %v219 = vld [vmem:[%s1 + $0x44] sm:$0xf]
      %v220 = vld [vmem:[%s1 + $0x48] sm:$0xf]
      %v221 = vld [vmem:[%s1 + $0x4c] sm:$0xf]
      %v222 = vld [vmem:[%s1 + $0x50] sm:$0xf]
      %v223 = vld [vmem:[%s1 + $0x54] sm:$0xf]
      %v224 = vld [vmem:[%s1 + $0x58] sm:$0xf]
      %v225 = vld [vmem:[%s1 + $0x5c] sm:$0xf]
      %v226 = vld [vmem:[%s1 + $0x60] sm:$0xf]
      %v227 = vld [vmem:[%s1 + $0x64] sm:$0xf]
      %v228 = vld [vmem:[%s1 + $0x68] sm:$0xf]
      %v229 = vld [vmem:[%s1 + $0x6c] sm:$0xf]
      %v230 = vld [vmem:[%s1 + $0x70] sm:$0xf]
      %v231 = vld [vmem:[%s1 + $0x74] sm:$0xf]
      %v232 = vld [vmem:[%s1 + $0x78] sm:$0xf]
      %v233 = vld [vmem:[%s1 + $0x7c] sm:$0xf]
      %v234 = vld [vmem:[%s1 + $0x80] sm:$0xf]
      %v235 = vld [vmem:[%s1 + $0x84] sm:$0xf]
      %v236 = vld [vmem:[%s1 + $0x88] sm:$0xf]
      %v237 = vld [vmem:[%s1 + $0x8c] sm:$0xf]
      %v238 = vld [vmem:[%s1 + $0x90] sm:$0xf]
      %v239 = vld [vmem:[%s1 + $0x94] sm:$0xf]
      %v240 = vld [vmem:[%s1 + $0x98] sm:$0xf]
      %v241 = vld [vmem:[%s1 + $0x9c] sm:$0xf]
      %v242 = vld [vmem:[%s1 + $0xa0] sm:$0xf]
      %v243 = vld [vmem:[%s1 + $0xa4] sm:$0xf]
      %v244 = vld [vmem:[%s1 + $0xa8] sm:$0xf]
      %v245 = vld [vmem:[%s1 + $0xac] sm:$0xf]
      %v246 = vld [vmem:[%s1 + $0xb0] sm:$0xf]
      %v247 = vld [vmem:[%s1 + $0xb4] sm:$0xf]
      %v248 = vld [vmem:[%s1 + $0xb8] sm:$0xf]
      %v249 = vld [vmem:[%s1 + $0xbc] sm:$0xf]
      %v250 = vld [vmem:[%s1 + $0xc0] sm:$0xf]
      %v251 = vld [vmem:[%s1 + $0xc4] sm:$0xf]
      %v252 = vld [vmem:[%s1 + $0xc8] sm:$0xf]
      %v253 = vld [vmem:[%s1 + $0xcc] sm:$0xf]
      %v254 = vld [vmem:[%s1 + $0xd0] sm:$0xf]
      %v255 = vld [vmem:[%s1 + $0xd4] sm:$0xf]
      %v256 = vld [vmem:[%s1 + $0xd8] sm:$0xf]
      %v257 = vld [vmem:[%s1 + $0xdc] sm:$0xf]
      %v258 = vld [vmem:[%s1 + $0xe0] sm:$0xf]
      %v259 = vld [vmem:[%s1 + $0xe4] sm:$0xf]
      %v260 = vld [vmem:[%s1 + $0xe8] sm:$0xf]
      %v261 = vld [vmem:[%s1 + $0xec] sm:$0xf]
      %v262 = vld [vmem:[%s1 + $0xf0] sm:$0xf]
      %v263 = vld [vmem:[%s1 + $0xf4] sm:$0xf]
      %v264 = vld [vmem:[%s1 + $0xf8] sm:$0xf]
      %v265 = vld [vmem:[%s1 + $0xfc] sm:$0xf]
      %v266 = vld [vmem:[%s1 + $0x100] sm:$0xf]
      %v267 = vld [vmem:[%s1 + $0x104] sm:$0xf]
      %v268 = vld [vmem:[%s1 + $0x108] sm:$0xf]
      %v269 = vld [vmem:[%s1 + $0x10c] sm:$0xf]
      %v270 = vld [vmem:[%s1 + $0x110] sm:$0xf]
      %v271 = vld [vmem:[%s1 + $0x114] sm:$0xf]
      %v272 = vld [vmem:[%s1 + $0x118] sm:$0xf]
      %v273 = vld [vmem:[%s1 + $0x11c] sm:$0xf]
      %v274 = vld [vmem:[%s1 + $0x120] sm:$0xf]
      %v275 = vld [vmem:[%s1 + $0x124] sm:$0xf]
      %v276 = vld [vmem:[%s1 + $0x128] sm:$0xf]
      %v277 = vld [vmem:[%s1 + $0x12c] sm:$0xf]
      %v278 = vld [vmem:[%s1 + $0x130] sm:$0xf]
      %v279 = vld [vmem:[%s1 + $0x134] sm:$0xf]
      %v280 = vld [vmem:[%s1 + $0x138] sm:$0xf]
      %v281 = vld [vmem:[%s1 + $0x13c] sm:$0xf]
      %v282 = vld [vmem:[%s2] sm:$0x1]
      %v284 = vlaneseq
      %v285 = vshrl.u32 %v284, 7
      %v286 = vsub.s32 0, %v285
      %v287 = vrot.slane %v282, %v286
      %v313 = vunpack.c.l.b16 %v178
      %v314 = vunpack.c.h.b16 %v178
      %v315 = vunpack.c.l.b16 %v179
      %v316 = vunpack.c.h.b16 %v179
      %v317 = vunpack.c.l.b16 %v180
      %v318 = vunpack.c.l.b16 %v181
      %v319 = vunpack.c.h.b16 %v181
      %v320 = vunpack.c.l.b16 %v182
      %v321 = vunpack.c.h.b16 %v182
      %v322 = vunpack.c.l.b16 %v183
      %v323 = vunpack.c.l.b16 %v184
      %v324 = vunpack.c.h.b16 %v184
      %v325 = vunpack.c.l.b16 %v185
      %v326 = vunpack.c.h.b16 %v185
      %v327 = vunpack.c.l.b16 %v186
      %v328 = vunpack.c.l.b16 %v187
      %v329 = vunpack.c.h.b16 %v187
      %v330 = vunpack.c.l.b16 %v188
      %v331 = vunpack.c.h.b16 %v188
      %v332 = vunpack.c.l.b16 %v189
      %v333 = vunpack.c.l.b16 %v190
      %v334 = vunpack.c.h.b16 %v190
      %v335 = vunpack.c.l.b16 %v191
      %v336 = vunpack.c.h.b16 %v191
      %v337 = vunpack.c.l.b16 %v192
      %v338 = vunpack.c.l.b16 %v193
      %v339 = vunpack.c.h.b16 %v193
      %v340 = vunpack.c.l.b16 %v194
      %v341 = vunpack.c.h.b16 %v194
      %v342 = vunpack.c.l.b16 %v195
      %v343 = vunpack.c.l.b16 %v196
      %v344 = vunpack.c.h.b16 %v196
      %v345 = vunpack.c.l.b16 %v197
      %v346 = vunpack.c.h.b16 %v197
      %v347 = vunpack.c.l.b16 %v198
      %v348 = vunpack.c.l.b16 %v199
      %v349 = vunpack.c.h.b16 %v199
      %v350 = vunpack.c.l.b16 %v200
      %v351 = vunpack.c.h.b16 %v200
      %v352 = vunpack.c.l.b16 %v201
      %v353 = vpack.c.b16 %v318, %v313
      %v354 = vpack.c.b16 %v319, %v314
      %v355 = vpack.c.b16 %v320, %v315
      %v356 = vpack.c.b16 %v321, %v316
      %v357 = vpack.c.b16 %v322, %v317
      %v358 = vpack.c.b16 %v328, %v323
      %v359 = vpack.c.b16 %v329, %v324
      %v360 = vpack.c.b16 %v330, %v325
      %v361 = vpack.c.b16 %v331, %v326
      %v362 = vpack.c.b16 %v332, %v327
      %v363 = vpack.c.b16 %v338, %v333
      %v364 = vpack.c.b16 %v339, %v334
      %v365 = vpack.c.b16 %v340, %v335
      %v366 = vpack.c.b16 %v341, %v336
      %v367 = vpack.c.b16 %v342, %v337
      %v368 = vpack.c.b16 %v348, %v343
      %v369 = vpack.c.b16 %v349, %v344
      %v370 = vpack.c.b16 %v350, %v345
      %v371 = vpack.c.b16 %v351, %v346
      %v372 = vpack.c.b16 %v352, %v347
      %v473 = vunpack.c.l.b16 %v202
      %v474 = vunpack.c.l.b16 %v203
      %v475 = vunpack.c.l.b16 %v204
      %v476 = vunpack.c.l.b16 %v205
      %v477 = vunpack.c.l.b16 %v206
      %v478 = vunpack.c.l.b16 %v207
      %v479 = vunpack.c.l.b16 %v208
      %v480 = vunpack.c.l.b16 %v209
      %v481 = vunpack.c.l.b16 %v210
      %v482 = vunpack.c.l.b16 %v211
      %v483 = vunpack.c.l.b16 %v212
      %v484 = vunpack.c.l.b16 %v213
      %v485 = vunpack.c.l.b16 %v214
      %v486 = vunpack.c.l.b16 %v215
      %v487 = vunpack.c.l.b16 %v216
      %v488 = vunpack.c.l.b16 %v217
      %v489 = vunpack.c.l.b16 %v218
      %v490 = vunpack.c.l.b16 %v219
      %v491 = vunpack.c.l.b16 %v220
      %v492 = vunpack.c.l.b16 %v221
      %v493 = vunpack.c.l.b16 %v222
      %v494 = vunpack.c.l.b16 %v223
      %v495 = vunpack.c.l.b16 %v224
      %v496 = vunpack.c.l.b16 %v225
      %v497 = vunpack.c.l.b16 %v226
      %v498 = vunpack.c.l.b16 %v227
      %v499 = vunpack.c.l.b16 %v228
      %v500 = vunpack.c.l.b16 %v229
      %v501 = vunpack.c.l.b16 %v230
      %v502 = vunpack.c.l.b16 %v231
      %v503 = vunpack.c.l.b16 %v232
      %v504 = vunpack.c.l.b16 %v233
      %v505 = vunpack.c.l.b16 %v234
      %v506 = vunpack.c.l.b16 %v235
      %v507 = vunpack.c.l.b16 %v236
      %v508 = vunpack.c.l.b16 %v237
      %v509 = vunpack.c.l.b16 %v238
      %v510 = vunpack.c.l.b16 %v239
      %v511 = vunpack.c.l.b16 %v240
      %v512 = vunpack.c.l.b16 %v241
      %v513 = vunpack.c.l.b16 %v242
      %v514 = vunpack.c.l.b16 %v243
      %v515 = vunpack.c.l.b16 %v244
      %v516 = vunpack.c.l.b16 %v245
      %v517 = vunpack.c.l.b16 %v246
      %v518 = vunpack.c.l.b16 %v247
      %v519 = vunpack.c.l.b16 %v248
      %v520 = vunpack.c.l.b16 %v249
      %v521 = vunpack.c.l.b16 %v250
      %v522 = vunpack.c.l.b16 %v251
      %v523 = vunpack.c.l.b16 %v252
      %v524 = vunpack.c.l.b16 %v253
      %v525 = vunpack.c.l.b16 %v254
      %v526 = vunpack.c.l.b16 %v255
      %v527 = vunpack.c.l.b16 %v256
      %v528 = vunpack.c.l.b16 %v257
      %v529 = vunpack.c.l.b16 %v258
      %v530 = vunpack.c.l.b16 %v259
      %v531 = vunpack.c.l.b16 %v260
      %v532 = vunpack.c.l.b16 %v261
      %v533 = vunpack.c.l.b16 %v262
      %v534 = vunpack.c.l.b16 %v263
      %v535 = vunpack.c.l.b16 %v264
      %v536 = vunpack.c.l.b16 %v265
      %v537 = vunpack.c.l.b16 %v266
      %v538 = vunpack.c.l.b16 %v267
      %v539 = vunpack.c.l.b16 %v268
      %v540 = vunpack.c.l.b16 %v269
      %v541 = vunpack.c.l.b16 %v270
      %v542 = vunpack.c.l.b16 %v271
      %v543 = vunpack.c.l.b16 %v272
      %v544 = vunpack.c.l.b16 %v273
      %v545 = vunpack.c.l.b16 %v274
      %v546 = vunpack.c.l.b16 %v275
      %v547 = vunpack.c.l.b16 %v276
      %v548 = vunpack.c.l.b16 %v277
      %v549 = vunpack.c.l.b16 %v278
      %v550 = vunpack.c.l.b16 %v279
      %v551 = vunpack.c.l.b16 %v280
      %v552 = vunpack.c.l.b16 %v281
      %v553 = vpack.c.b16 %v474, %v473
      %v554 = vpack.c.b16 %v476, %v475
      %v555 = vpack.c.b16 %v478, %v477
      %v556 = vpack.c.b16 %v480, %v479
      %v557 = vpack.c.b16 %v482, %v481
      %v558 = vpack.c.b16 %v484, %v483
      %v559 = vpack.c.b16 %v486, %v485
      %v560 = vpack.c.b16 %v488, %v487
      %v561 = vpack.c.b16 %v490, %v489
      %v562 = vpack.c.b16 %v492, %v491
      %v563 = vpack.c.b16 %v494, %v493
      %v564 = vpack.c.b16 %v496, %v495
      %v565 = vpack.c.b16 %v498, %v497
      %v566 = vpack.c.b16 %v500, %v499
      %v567 = vpack.c.b16 %v502, %v501
      %v568 = vpack.c.b16 %v504, %v503
      %v569 = vpack.c.b16 %v506, %v505
      %v570 = vpack.c.b16 %v508, %v507
      %v571 = vpack.c.b16 %v510, %v509
      %v572 = vpack.c.b16 %v512, %v511
      %v573 = vpack.c.b16 %v514, %v513
      %v574 = vpack.c.b16 %v516, %v515
      %v575 = vpack.c.b16 %v518, %v517
      %v576 = vpack.c.b16 %v520, %v519
      %v577 = vpack.c.b16 %v522, %v521
      %v578 = vpack.c.b16 %v524, %v523
      %v579 = vpack.c.b16 %v526, %v525
      %v580 = vpack.c.b16 %v528, %v527
      %v581 = vpack.c.b16 %v530, %v529
      %v582 = vpack.c.b16 %v532, %v531
      %v583 = vpack.c.b16 %v534, %v533
      %v584 = vpack.c.b16 %v536, %v535
      %v585 = vpack.c.b16 %v538, %v537
      %v586 = vpack.c.b16 %v540, %v539
      %v587 = vpack.c.b16 %v542, %v541
      %v588 = vpack.c.b16 %v544, %v543
      %v589 = vpack.c.b16 %v546, %v545
      %v590 = vpack.c.b16 %v548, %v547
      %v591 = vpack.c.b16 %v550, %v549
      %v592 = vpack.c.b16 %v552, %v551
      %633 = vmatprep.subr.bf16.mxu0 0
      %634 = vmatpush1.bf16.msra.mxu0 %v553
      %635 = vmatprep.subr.bf16.mxu0 0
      %636 = vmatpush1.bf16.msra.mxu0 %v554
      %637 = vmatprep.subr.bf16.mxu0 0
      %638 = vmatpush1.bf16.msra.mxu0 %v555
      %639 = vmatprep.subr.bf16.mxu0 0
      %640 = vmatpush1.bf16.msra.mxu0 %v556
      %641 = vmatprep.subr.bf16.mxu0 0
      %642 = vmatpush1.bf16.msra.mxu0 %v557
      %643 = vmatprep.subr.bf16.mxu0 0
      %644 = vmatpush1.bf16.msra.mxu0 %v558
      %645 = vmatprep.subr.bf16.mxu0 0
      %646 = vmatpush1.bf16.msra.mxu0 %v559
      %647 = vmatprep.subr.bf16.mxu0 0
      %648 = vmatpush1.bf16.msra.mxu0 %v560
      %649 = vmatprep.subr.bf16.mxu0 0
      %650 = vmatpush1.bf16.msra.mxu0 %v561
      %651 = vmatprep.subr.bf16.mxu0 0
      %652 = vmatpush1.bf16.msra.mxu0 %v562
      %653 = vmatprep.subr.bf16.mxu0 0
      %654 = vmatpush1.bf16.msra.mxu0 %v563
      %655 = vmatprep.subr.bf16.mxu0 0
      %656 = vmatpush1.bf16.msra.mxu0 %v564
      %657 = vmatprep.subr.bf16.mxu0 0
      %658 = vmatpush1.bf16.msra.mxu0 %v565
      %659 = vmatprep.subr.bf16.mxu0 0
      %660 = vmatpush1.bf16.msra.mxu0 %v566
      %661 = vmatprep.subr.bf16.mxu0 0
      %662 = vmatpush1.bf16.msra.mxu0 %v567
      %663 = vmatprep.subr.bf16.mxu0 0
      %664 = vmatpush1.bf16.msra.mxu0 %v568
      %665 = vmatprep.mubr.bf16.mxu0 %v354
      %666 = vmatmul.mubr.bf16.gmra.mrb[0].mxu0 %v353
      %v667 = vpop.f32.mrb[0].mxu0
      %v668 = vadd.f32 %v287, %v667
      %v669 = vpop.f32.mrb[0].mxu0
      %v670 = vpop.f32.mrb[0].mxu0
      %v671 = vadd.f32 %v287, %v670
      %v672 = vpop.f32.mrb[0].mxu0
      %673 = vmatprep.mubr.bf16.mxu0 %v359
      %674 = vmatmul.mubr.bf16.gmra.mrb[0].mxu0 %v358
      %v675 = vpop.f32.mrb[0].mxu0
      %v676 = vadd.f32 %v287, %v675
      %v677 = vpop.f32.mrb[0].mxu0
      %v678 = vpop.f32.mrb[0].mxu0
      %v679 = vadd.f32 %v287, %v678
      %v680 = vpop.f32.mrb[0].mxu0
      %681 = vmatprep.mubr.bf16.mxu0 %v364
      %682 = vmatmul.mubr.bf16.gmra.mrb[0].mxu0 %v363
      %v683 = vpop.f32.mrb[0].mxu0
      %v684 = vadd.f32 %v287, %v683
      %v685 = vpop.f32.mrb[0].mxu0
      %v686 = vpop.f32.mrb[0].mxu0
      %v687 = vadd.f32 %v287, %v686
      %v688 = vpop.f32.mrb[0].mxu0
      %689 = vmatprep.mubr.bf16.mxu0 %v369
      %690 = vmatmul.mubr.bf16.gmra.mrb[0].mxu0 %v368
      %v691 = vpop.f32.mrb[0].mxu0
      %v692 = vadd.f32 %v287, %v691
      %v693 = vpop.f32.mrb[0].mxu0
      %v694 = vpop.f32.mrb[0].mxu0
      %v695 = vadd.f32 %v287, %v694
      %v696 = vpop.f32.mrb[0].mxu0
      %697 = vdwg.mxu0
      %698 = vmatprep.subr.bf16.mxu0 0
      %699 = vmatpush1.bf16.msra.mxu0 %v569
      %700 = vmatprep.subr.bf16.mxu0 0
      %701 = vmatpush1.bf16.msra.mxu0 %v570
      %702 = vmatprep.subr.bf16.mxu0 0
      %703 = vmatpush1.bf16.msra.mxu0 %v571
      %704 = vmatprep.subr.bf16.mxu0 0
      %705 = vmatpush1.bf16.msra.mxu0 %v572
      %706 = vmatprep.subr.bf16.mxu0 0
      %707 = vmatpush1.bf16.msra.mxu0 %v573
      %708 = vmatprep.subr.bf16.mxu0 0
      %709 = vmatpush1.bf16.msra.mxu0 %v574
      %710 = vmatprep.subr.bf16.mxu0 0
      %711 = vmatpush1.bf16.msra.mxu0 %v575
      %712 = vmatprep.subr.bf16.mxu0 0
      %713 = vmatpush1.bf16.msra.mxu0 %v576
      %714 = vmatprep.subr.bf16.mxu0 0
      %715 = vmatpush1.bf16.msra.mxu0 %v577
      %716 = vmatprep.subr.bf16.mxu0 0
      %717 = vmatpush1.bf16.msra.mxu0 %v578
      %718 = vmatprep.subr.bf16.mxu0 0
      %719 = vmatpush1.bf16.msra.mxu0 %v579
      %720 = vmatprep.subr.bf16.mxu0 0
      %721 = vmatpush1.bf16.msra.mxu0 %v580
      %722 = vmatprep.subr.bf16.mxu0 0
      %723 = vmatpush1.bf16.msra.mxu0 %v581
      %724 = vmatprep.subr.bf16.mxu0 0
      %725 = vmatpush1.bf16.msra.mxu0 %v582
      %726 = vmatprep.subr.bf16.mxu0 0
      %727 = vmatpush1.bf16.msra.mxu0 %v583
      %728 = vmatprep.subr.bf16.mxu0 0
      %729 = vmatpush1.bf16.msra.mxu0 %v584
      %730 = vmatprep.mubr.bf16.mxu0 %v356
      %731 = vmatmul.mubr.bf16.gmra.mrb[0].mxu0 %v355
      %v732 = vpop.f32.mrb[0].mxu0
      %v733 = vadd.f32 %v668, %v732
      %v734 = vpop.f32.mrb[0].mxu0
      %v735 = vpop.f32.mrb[0].mxu0
      %v736 = vadd.f32 %v671, %v735
      %v737 = vpop.f32.mrb[0].mxu0
      %738 = vmatprep.mubr.bf16.mxu0 %v361
      %739 = vmatmul.mubr.bf16.gmra.mrb[0].mxu0 %v360
      %v740 = vpop.f32.mrb[0].mxu0
      %v741 = vadd.f32 %v676, %v740
      %v742 = vpop.f32.mrb[0].mxu0
      %v743 = vpop.f32.mrb[0].mxu0
      %v744 = vadd.f32 %v679, %v743
      %v745 = vpop.f32.mrb[0].mxu0
      %746 = vmatprep.mubr.bf16.mxu0 %v366
      %747 = vmatmul.mubr.bf16.gmra.mrb[0].mxu0 %v365
      %v748 = vpop.f32.mrb[0].mxu0
      %v749 = vadd.f32 %v684, %v748
      %v750 = vpop.f32.mrb[0].mxu0
      %v751 = vpop.f32.mrb[0].mxu0
      %v752 = vadd.f32 %v687, %v751
      %v753 = vpop.f32.mrb[0].mxu0
      %754 = vmatprep.mubr.bf16.mxu0 %v371
      %755 = vmatmul.mubr.bf16.gmra.mrb[0].mxu0 %v370
      %v756 = vpop.f32.mrb[0].mxu0
      %v757 = vadd.f32 %v692, %v756
      %v758 = vpop.f32.mrb[0].mxu0
      %v759 = vpop.f32.mrb[0].mxu0
      %v760 = vadd.f32 %v695, %v759
      %v761 = vpop.f32.mrb[0].mxu0
      %762 = vdwg.mxu0
      %763 = vmatprep.subr.bf16.mxu0 0
      %764 = vmatpush1.bf16.msra.mxu0 %v585
      %765 = vmatprep.subr.bf16.mxu0 0
      %766 = vmatpush1.bf16.msra.mxu0 %v586
      %767 = vmatprep.subr.bf16.mxu0 0
      %768 = vmatpush1.bf16.msra.mxu0 %v587
      %769 = vmatprep.subr.bf16.mxu0 0
      %770 = vmatpush1.bf16.msra.mxu0 %v588
      %771 = vmatprep.subr.bf16.mxu0 0
      %772 = vmatpush1.bf16.msra.mxu0 %v589
      %773 = vmatprep.subr.bf16.mxu0 0
      %774 = vmatpush1.bf16.msra.mxu0 %v590
      %775 = vmatprep.subr.bf16.mxu0 0
      %776 = vmatpush1.bf16.msra.mxu0 %v591
      %777 = vmatprep.subr.bf16.mxu0 0
      %778 = vmatpush1.bf16.msra.mxu0 %v592
      %779 = vmatprep.subr.bf16.mxu0 0
      %780 = vmatpush1.bf16.msra.mxu0 0
      %781 = vmatprep.subr.bf16.mxu0 0
      %782 = vmatpush1.bf16.msra.mxu0 0
      %783 = vmatprep.subr.bf16.mxu0 0
      %784 = vmatpush1.bf16.msra.mxu0 0
      %785 = vmatprep.subr.bf16.mxu0 0
      %786 = vmatpush1.bf16.msra.mxu0 0
      %787 = vmatprep.subr.bf16.mxu0 0
      %788 = vmatpush1.bf16.msra.mxu0 0
      %789 = vmatprep.subr.bf16.mxu0 0
      %790 = vmatpush1.bf16.msra.mxu0 0
      %791 = vmatprep.subr.bf16.mxu0 0
      %792 = vmatpush1.bf16.msra.mxu0 0
      %793 = vmatprep.subr.bf16.mxu0 0
      %794 = vmatpush1.bf16.msra.mxu0 0
      %795 = vmatprep.mubr.bf16.mxu0 0
      %796 = vmatmul.mubr.bf16.gmra.mrb[0].mxu0 %v357
      %v797 = vpop.f32.mrb[0].mxu0
      %v798 = vadd.f32 %v733, %v797
      %v799 = vpop.f32.mrb[0].mxu0
      %v800 = vpop.f32.mrb[0].mxu0
      %v801 = vadd.f32 %v736, %v800
      %v802 = vpop.f32.mrb[0].mxu0
      %803 = vmatprep.mubr.bf16.mxu0 0
      %804 = vmatmul.mubr.bf16.gmra.mrb[0].mxu0 %v362
      %v805 = vpop.f32.mrb[0].mxu0
      %v806 = vadd.f32 %v741, %v805
      %v807 = vpop.f32.mrb[0].mxu0
      %v808 = vpop.f32.mrb[0].mxu0
      %v809 = vadd.f32 %v744, %v808
      %v810 = vpop.f32.mrb[0].mxu0
      %811 = vmatprep.mubr.bf16.mxu0 0
      %812 = vmatmul.mubr.bf16.gmra.mrb[0].mxu0 %v367
      %v813 = vpop.f32.mrb[0].mxu0
      %v814 = vadd.f32 %v749, %v813
      %v815 = vpop.f32.mrb[0].mxu0
      %v816 = vpop.f32.mrb[0].mxu0
      %v817 = vadd.f32 %v752, %v816
      %v818 = vpop.f32.mrb[0].mxu0
      %819 = vmatprep.mubr.bf16.mxu0 0
      %820 = vmatmul.mubr.bf16.gmra.mrb[0].mxu0 %v372
      %v821 = vpop.f32.mrb[0].mxu0
      %v822 = vadd.f32 %v757, %v821
      %v823 = vpop.f32.mrb[0].mxu0
      %v824 = vpop.f32.mrb[0].mxu0
      %v825 = vadd.f32 %v760, %v824
      %v826 = vpop.f32.mrb[0].mxu0
      %827 = vdwg.mxu0
      %v828 = vmax.f32 %v798, 0.0
      %v829 = vmax.f32 %v801, 0.0
      %v830 = vmax.f32 %v806, 0.0
      %v831 = vmax.f32 %v809, 0.0
      %v832 = vmax.f32 %v814, 0.0
      %v833 = vmax.f32 %v817, 0.0
      %v834 = vmax.f32 %v822, 0.0
      %v835 = vmax.f32 %v825, 0.0
      %v836 = vpack.c.bf16 %v829, %v828
      %v837 = vpack.c.bf16 %v831, %v830
      %v838 = vpack.c.bf16 %v833, %v832
      %v839 = vpack.c.bf16 %v835, %v834
      %v844 = vunpack.c.l.b16 %v836
      %v845 = vunpack.c.h.b16 %v836
      %v846 = vunpack.c.l.b16 %v837
      %v847 = vunpack.c.h.b16 %v837
      %v848 = vunpack.c.l.b16 %v838
      %v849 = vunpack.c.h.b16 %v838
      %v850 = vunpack.c.l.b16 %v839
      %v851 = vunpack.c.h.b16 %v839
      %v852 = vpack.c.b16 %v844, %v844
      %v853 = vpack.c.b16 %v845, %v845
      %v854 = vpack.c.b16 %v846, %v846
      %v855 = vpack.c.b16 %v847, %v847
      %v856 = vpack.c.b16 %v848, %v848
      %v857 = vpack.c.b16 %v849, %v849
      %v858 = vpack.c.b16 %v850, %v850
      %v859 = vpack.c.b16 %v851, %v851
      %868 = vst [vmem:[%s175] sm:$0xf] %v852
      %869 = vst [vmem:[%s175 + $0x4] sm:$0xf] %v853
      %870 = vst [vmem:[%s175 + $0x8] sm:$0xf] %v854
      %871 = vst [vmem:[%s175 + $0xc] sm:$0xf] %v855
      %872 = vst [vmem:[%s175 + $0x10] sm:$0xf] %v856
      %873 = vst [vmem:[%s175 + $0x14] sm:$0xf] %v857
      %874 = vst [vmem:[%s175 + $0x18] sm:$0xf] %v858
      %875 = vst [vmem:[%s175 + $0x1c] sm:$0xf] %v859
      %s876 = smul.u32 8, %s14
      %p877 = scmp.lt.s32.totalorder %s876, 15
      %s878 = scalar_select %p877, %s876, 15
      %s879 = smul.addr %s878, 4
      %s880 = scalar_lea.vmem %s3, %s879
      // Predicated region
      $region33: #{cnn2d_nopooling_forward.6} parent=31 // pred_check
        %p881 = pneg %p100
      $region34: #{cnn2d_nopooling_forward.6} parent=31 // pred_check_branch
        %883 = sbr.rel (%p881) target = $region36
      $region35: #{cnn2d_nopooling_forward.6} parent=31 // pred_region
        %s884 = smul.u32 8, %s14
      $region36: #{cnn2d_nopooling_forward.6} parent=31 // pred_fallthru
        _
    $region32: #{cnn2d_nopooling_forward.6} parent=5 // pred_fallthru
      _
    %p885 = scmp.le.s32.totalorder 2, %s9
    // Predicated region
    $region37: #{cnn2d_nopooling_forward.6} parent=5 // pred_check
      %p886 = pneg %p885
    $region38: #{cnn2d_nopooling_forward.6} parent=5 // pred_check_branch
      %888 = sbr.rel (%p886) target = $region40
    $region39: #{cnn2d_nopooling_forward.6} parent=5 // pred_region
      %s889 = ssub.s32 %s9, 2
      // Predicated region
      $region41: #{cnn2d_nopooling_forward.6} parent=39 // pred_check
        %p890 = pneg %p106
      $region42: #{cnn2d_nopooling_forward.6} parent=39 // pred_check_branch
        %892 = sbr.rel (%p890) target = $region44
      $region43: #{cnn2d_nopooling_forward.6} parent=39 // pred_region
        %s893 = smul.u32 8, %s15
        %p894 = scmp.lt.s32.totalorder %s893, 15
        %s895 = scalar_select %p894, %s893, 15
        %s896 = smul.addr %s895, 4
        %s897 = scalar_lea.vmem %s3, %s896
      $region44: #{cnn2d_nopooling_forward.6} parent=39 // pred_fallthru
        _
    $region40: #{cnn2d_nopooling_forward.6} parent=5 // pred_fallthru
      _
  $region6: #{cnn2d_nopooling_forward.6} parent=0 // loop_footer
    %s13 = sadd.s32 1, %s9
  $region7: #{cnn2d_nopooling_forward.6} parent=0 // loop_footer_branch
    %8 = sbr.rel target = $region3
  $region8: #{cnn2d_nopooling_forward.6} parent=0 // loop_exit
    _

// kernel: cnn2d_nopooling_forward.7
$region0: #{cnn2d_nopooling_forward.7}
  #allocation0 [shape = 'u32[]', space=smem, size = 0x4, offset = 0x4, fixed_abs, tag = 'smem constant byte address 0x4 - core index']
  #allocation1 [shape = 'u32[144,128]{1,0:T(1,128)}', space=vmem, size = 0x12000, scoped, tag = 'internal scratch']
  %s0 = inlined_call_operand.vmem [shape: bf16[2,8192], index: 0, kind: input, shape index: {}]
  %s1 = inlined_call_operand.vmem [shape: bf16[8192,128], index: 1, kind: input, shape index: {}]
  %s2 = inlined_call_operand.vmem [shape: f32[1,128], index: 2, kind: input, shape index: {}]
  %s3 = inlined_call_operand.hbm [shape: f32[2,128], index: 3, kind: output, shape index: {}]
  %s4 = sld [smem:[#allocation0]]
  $region49: #{cnn2d_nopooling_forward.7} parent=0
    _
  %s6 = ssub.s32 1, %s4
  %s7 = scalar_select 0, %s6, %s4
  $region1: #{cnn2d_nopooling_forward.7} parent=0
    #allocation2 [shape = 'u8[1024]{0}', space=vmem, size = 0x400, scoped, tag = 'output window, operand 0, single buffered']
    #allocation3 [shape = 's32[2]{0}', space=sflag, size = 0x8, scoped, tag = 'scoped memory for cnn2d_nopooling_forward.7']
    %8 = vsyncpa [#allocation3], 0
    loop: start=0, step=1, limit=4
    $region2: #{cnn2d_nopooling_forward.7} parent=1 // loop_pre_header
      _
    $region3: #{cnn2d_nopooling_forward.7} parent=1 // loop_header
      %s10 = sphi 0, %s14
      %p11 = scmp.ge.s32.totalorder %s10, 4
      %s20 = sphi 0, %s22
      %s23 = sphi 0, %s20
      %s24 = sphi 0, %s23
      %s40 = sphi 0, %s24
      %s46 = sphi 0, %s48
      %s49 = sphi 0, %s46
      %s50 = sphi 0, %s49
      %s66 = sphi 0, %s50
      %s70 = sphi 0, %s70
      %s72 = sphi 0, %s70
      %s73 = sphi 0, %s72
      %s87 = sphi 0, %s73
      %s91 = sphi 0, %s91
      %s93 = sphi 0, %s91
      %s94 = sphi 0, %s93
      %s108 = sphi 0, %s94
    $region4: #{cnn2d_nopooling_forward.7} parent=1 // loop_header_branch
      %13 = sbr.rel (%p11) target = $region8
    $region5: #{cnn2d_nopooling_forward.7} parent=1 // loop_body
      %s15 = ssub.s32 %s10, 1
      %s16 = ssub.s32 %s10, 2
      %s17 = sadd.s32 %s10, 1
      %s18 = ssub.s32 %s10, %s17
      %p19 = scmp.eq.s32.totalorder %s18, 0
      %s21 = sadd.s32 %s20, 1
      %s22 = scalar_select %p19, %s20, %s21
      %p25 = pneg %p19
      %p26 = scmp.eq.s32.totalorder %s10, 1
      %p27 = por %p25, %p26
      %p28 = scmp.ne.s32.totalorder %s20, %s23
      %p29 = scmp.eq.s32.totalorder %s10, 0
      %p30 = por %p28, %p29
      %p31 = scmp.ne.s32.totalorder %s20, %s23
      %p32 = scmp.eq.s32.totalorder %s15, 1
      %p33 = por %p31, %p32
      %p34 = scmp.ne.s32.totalorder %s23, %s24
      %p35 = scmp.eq.s32.totalorder %s15, 0
      %p36 = por %p34, %p35
      %p37 = scmp.ne.s32.totalorder %s23, %s24
      %p38 = scmp.eq.s32.totalorder %s16, 1
      %p39 = por %p37, %p38
      %p41 = scmp.ne.s32.totalorder %s24, %s40
      %p42 = scmp.eq.s32.totalorder %s16, 0
      %p43 = por %p41, %p42
      %s44 = ssub.s32 %s10, %s17
      %p45 = scmp.eq.s32.totalorder %s44, 0
      %s47 = sadd.s32 %s46, 1
      %s48 = scalar_select %p45, %s46, %s47
      %p51 = pneg %p45
      %p52 = scmp.eq.s32.totalorder %s10, 1
      %p53 = por %p51, %p52
      %p54 = scmp.ne.s32.totalorder %s46, %s49
      %p55 = scmp.eq.s32.totalorder %s10, 0
      %p56 = por %p54, %p55
      %p57 = scmp.ne.s32.totalorder %s46, %s49
      %p58 = scmp.eq.s32.totalorder %s15, 1
      %p59 = por %p57, %p58
      %p60 = scmp.ne.s32.totalorder %s49, %s50
      %p61 = scmp.eq.s32.totalorder %s15, 0
      %p62 = por %p60, %p61
      %p63 = scmp.ne.s32.totalorder %s49, %s50
      %p64 = scmp.eq.s32.totalorder %s16, 1
      %p65 = por %p63, %p64
      %p67 = scmp.ne.s32.totalorder %s50, %s66
      %p68 = scmp.eq.s32.totalorder %s16, 0
      %p69 = por %p67, %p68
      %s71 = sadd.s32 %s70, 1
      %p74 = scmp.eq.s32.totalorder %s10, 1
      %p75 = scmp.ne.s32.totalorder %s70, %s72
      %p76 = scmp.eq.s32.totalorder %s10, 0
      %p77 = por %p75, %p76
      %p78 = scmp.ne.s32.totalorder %s70, %s72
      %p79 = scmp.eq.s32.totalorder %s15, 1
      %p80 = por %p78, %p79
      %p81 = scmp.ne.s32.totalorder %s72, %s73
      %p82 = scmp.eq.s32.totalorder %s15, 0
      %p83 = por %p81, %p82
      %p84 = scmp.ne.s32.totalorder %s72, %s73
      %p85 = scmp.eq.s32.totalorder %s16, 1
      %p86 = por %p84, %p85
      %p88 = scmp.ne.s32.totalorder %s73, %s87
      %p89 = scmp.eq.s32.totalorder %s16, 0
      %p90 = por %p88, %p89
      %s92 = sadd.s32 %s91, 1
      %p95 = scmp.eq.s32.totalorder %s10, 1
      %p96 = scmp.ne.s32.totalorder %s91, %s93
      %p97 = scmp.eq.s32.totalorder %s10, 0
      %p98 = por %p96, %p97
      %p99 = scmp.ne.s32.totalorder %s91, %s93
      %p100 = scmp.eq.s32.totalorder %s15, 1
      %p101 = por %p99, %p100
      %p102 = scmp.ne.s32.totalorder %s93, %s94
      %p103 = scmp.eq.s32.totalorder %s15, 0
      %p104 = por %p102, %p103
      %p105 = scmp.ne.s32.totalorder %s93, %s94
      %p106 = scmp.eq.s32.totalorder %s16, 1
      %p107 = por %p105, %p106
      %p109 = scmp.ne.s32.totalorder %s94, %s108
      %p110 = scmp.eq.s32.totalorder %s16, 0
      %p111 = por %p109, %p110
      %p112 = scmp.le.s32.totalorder 1, %s10
      %p113 = scmp.lt.s32.totalorder %s10, 3
      %p114 = pnand %p112, %p113
      %p115 = pneg %p114
      // Predicated region
      $region9: #{cnn2d_nopooling_forward.7} parent=5 // pred_check
        _
      $region10: #{cnn2d_nopooling_forward.7} parent=5 // pred_check_branch
        %117 = sbr.rel (%p114) target = $region12
      $region11: #{cnn2d_nopooling_forward.7} parent=5 // pred_region
        %s118 = ssub.s32 %s10, 1
        // Predicated region
        $region13: #{cnn2d_nopooling_forward.7} parent=11 // pred_check
          %p119 = pneg %p83
        $region14: #{cnn2d_nopooling_forward.7} parent=11 // pred_check_branch
          %121 = sbr.rel (%p119) target = $region16
        $region15: #{cnn2d_nopooling_forward.7} parent=11 // pred_region
          _
        $region16: #{cnn2d_nopooling_forward.7} parent=11 // pred_fallthru
          _
      $region12: #{cnn2d_nopooling_forward.7} parent=5 // pred_fallthru
        _
      %p122 = scmp.lt.s32.totalorder %s10, 2
      // Predicated region
      $region17: #{cnn2d_nopooling_forward.7} parent=5 // pred_check
        %p123 = pneg %p122
      $region18: #{cnn2d_nopooling_forward.7} parent=5 // pred_check_branch
        %125 = sbr.rel (%p123) target = $region20
      $region19: #{cnn2d_nopooling_forward.7} parent=5 // pred_region
        // Predicated region
        $region21: #{cnn2d_nopooling_forward.7} parent=19 // pred_check
          %p126 = pneg %p30
        $region22: #{cnn2d_nopooling_forward.7} parent=19 // pred_check_branch
          %128 = sbr.rel (%p126) target = $region24
        $region23: #{cnn2d_nopooling_forward.7} parent=19 // pred_region
          %s129 = smul.u32 32, %s10
          %p130 = scmp.lt.s32.totalorder %s129, 63
          %s131 = scalar_select %p130, %s129, 63
          %s132 = scalar_lea.vmem %s0, %s131
          %s133 = smul.u32 32, %s10
        $region24: #{cnn2d_nopooling_forward.7} parent=19 // pred_fallthru
          _
        // Predicated region
        $region25: #{cnn2d_nopooling_forward.7} parent=19 // pred_check
          %p134 = pneg %p56
        $region26: #{cnn2d_nopooling_forward.7} parent=19 // pred_check_branch
          %136 = sbr.rel (%p134) target = $region28
        $region27: #{cnn2d_nopooling_forward.7} parent=19 // pred_region
          %s137 = smul.u32 512, %s10
          %p138 = scmp.lt.s32.totalorder %s137, 1023
          %s139 = scalar_select %p138, %s137, 1023
          %s140 = smul.addr %s139, 4
          %s141 = scalar_lea.vmem %s1, %s140
          %s142 = smul.u32 512, %s10
        $region28: #{cnn2d_nopooling_forward.7} parent=19 // pred_fallthru
          _
      $region20: #{cnn2d_nopooling_forward.7} parent=5 // pred_fallthru
        _
      %p143 = scmp.le.s32.totalorder 1, %s10
      %p144 = scmp.lt.s32.totalorder %s10, 3
      %p145 = pnand %p143, %p144
      %p146 = pneg %p145
      // Predicated region
      $region29: #{cnn2d_nopooling_forward.7} parent=5 // pred_check
        _
      $region30: #{cnn2d_nopooling_forward.7} parent=5 // pred_check_branch
        %148 = sbr.rel (%p145) target = $region32
      $region31: #{cnn2d_nopooling_forward.7} parent=5 // pred_region
        %s149 = ssub.s32 %s10, 1
        %s150 = smul.u32 32, %s15
        %p151 = scmp.lt.s32.totalorder %s150, 63
        %s152 = scalar_select %p151, %s150, 63
        %s153 = scalar_lea.vmem %s0, %s152
        %p154 = pneg %p36
        %p155 = pneg %p33
        %s156 = smul.u32 512, %s15
        %p157 = scmp.lt.s32.totalorder %s156, 1023
        %s158 = scalar_select %p157, %s156, 1023
        %s159 = smul.addr %s158, 4
        %s160 = scalar_lea.vmem %s1, %s159
        %p161 = pneg %p62
        %p162 = pneg %p59
        %p163 = pneg %p83
        %p164 = pneg %p80
        %p165 = pneg %p104
        %p166 = pneg %p101
        %s167 = smul.u32 32, %s15
        %p168 = scmp.lt.s32.totalorder %s167, 63
        %s169 = scalar_select %p168, %s167, 63
        %s170 = scalar_lea.vmem %s0, %s169
        %s171 = smul.u32 32, %s15
        %s172 = smul.u32 512, %s15
        %p173 = scmp.lt.s32.totalorder %s172, 1023
        %s174 = scalar_select %p173, %s172, 1023
        %s175 = smul.addr %s174, 4
        %s176 = scalar_lea.vmem %s1, %s175
        %s177 = smul.u32 512, %s15
        %p179 = scmp.eq.s32.totalorder %s15, 0
        // Predicated region
        $region33: #{cnn2d_nopooling_forward.7} parent=31 // pred_check
          %p180 = pneg %p179
        $region34: #{cnn2d_nopooling_forward.7} parent=31 // pred_check_branch
          %182 = sbr.rel (%p180) target = $region36
        $region35: #{cnn2d_nopooling_forward.7} parent=31 // pred_region
          %v183 = vld [vmem:[%s2] sm:$0x1]
          %v185 = vlaneseq
          %v186 = vshrl.u32 %v185, 7
          %v187 = vsub.s32 0, %v186
          %v188 = vrot.slane %v183, %v187
          %190 = vst [vmem:[#allocation2] sm:$0x3] %v188
        $region36: #{cnn2d_nopooling_forward.7} parent=31 // pred_fallthru
          _
        %v191 = vld [vmem:[#allocation2] sm:$0x3]
        %v192 = vld [vmem:[%s170] sm:$0xff]
        %v193 = vld [vmem:[%s170 + $0x8] sm:$0xff]
        %v194 = vld [vmem:[%s170 + $0x10] sm:$0xff]
        %v195 = vld [vmem:[%s170 + $0x18] sm:$0xff]
        %v196 = vld [vmem:[%s176] sm:$0xf]
        %v197 = vld [vmem:[%s176 + $0x4] sm:$0xf]
        %v198 = vld [vmem:[%s176 + $0x8] sm:$0xf]
        %v199 = vld [vmem:[%s176 + $0xc] sm:$0xf]
        %v200 = vld [vmem:[%s176 + $0x10] sm:$0xf]
        %v201 = vld [vmem:[%s176 + $0x14] sm:$0xf]
        %v202 = vld [vmem:[%s176 + $0x18] sm:$0xf]
        %v203 = vld [vmem:[%s176 + $0x1c] sm:$0xf]
        %v204 = vld [vmem:[%s176 + $0x20] sm:$0xf]
        %v205 = vld [vmem:[%s176 + $0x24] sm:$0xf]
        %v206 = vld [vmem:[%s176 + $0x28] sm:$0xf]
        %v207 = vld [vmem:[%s176 + $0x2c] sm:$0xf]
        %v208 = vld [vmem:[%s176 + $0x30] sm:$0xf]
        %v209 = vld [vmem:[%s176 + $0x34] sm:$0xf]
        %v210 = vld [vmem:[%s176 + $0x38] sm:$0xf]
        %v211 = vld [vmem:[%s176 + $0x3c] sm:$0xf]
        %v212 = vld [vmem:[%s176 + $0x40] sm:$0xf]
        %v213 = vld [vmem:[%s176 + $0x44] sm:$0xf]
        %v214 = vld [vmem:[%s176 + $0x48] sm:$0xf]
        %v215 = vld [vmem:[%s176 + $0x4c] sm:$0xf]
        %v216 = vld [vmem:[%s176 + $0x50] sm:$0xf]
        %v217 = vld [vmem:[%s176 + $0x54] sm:$0xf]
        %v218 = vld [vmem:[%s176 + $0x58] sm:$0xf]
        %v219 = vld [vmem:[%s176 + $0x5c] sm:$0xf]
        %v220 = vld [vmem:[%s176 + $0x60] sm:$0xf]
        %v221 = vld [vmem:[%s176 + $0x64] sm:$0xf]
        %v222 = vld [vmem:[%s176 + $0x68] sm:$0xf]
        %v223 = vld [vmem:[%s176 + $0x6c] sm:$0xf]
        %v224 = vld [vmem:[%s176 + $0x70] sm:$0xf]
        %v225 = vld [vmem:[%s176 + $0x74] sm:$0xf]
        %v226 = vld [vmem:[%s176 + $0x78] sm:$0xf]
        %v227 = vld [vmem:[%s176 + $0x7c] sm:$0xf]
        %v228 = vld [vmem:[%s176 + $0x80] sm:$0xf]
        %v229 = vld [vmem:[%s176 + $0x84] sm:$0xf]
        %v230 = vld [vmem:[%s176 + $0x88] sm:$0xf]
        %v231 = vld [vmem:[%s176 + $0x8c] sm:$0xf]
        %v232 = vld [vmem:[%s176 + $0x90] sm:$0xf]
        %v233 = vld [vmem:[%s176 + $0x94] sm:$0xf]
        %v234 = vld [vmem:[%s176 + $0x98] sm:$0xf]
        %v235 = vld [vmem:[%s176 + $0x9c] sm:$0xf]
        %v236 = vld [vmem:[%s176 + $0xa0] sm:$0xf]
        %v237 = vld [vmem:[%s176 + $0xa4] sm:$0xf]
        %v238 = vld [vmem:[%s176 + $0xa8] sm:$0xf]
        %v239 = vld [vmem:[%s176 + $0xac] sm:$0xf]
        %v240 = vld [vmem:[%s176 + $0xb0] sm:$0xf]
        %v241 = vld [vmem:[%s176 + $0xb4] sm:$0xf]
        %v242 = vld [vmem:[%s176 + $0xb8] sm:$0xf]
        %v243 = vld [vmem:[%s176 + $0xbc] sm:$0xf]
        %v244 = vld [vmem:[%s176 + $0xc0] sm:$0xf]
        %v245 = vld [vmem:[%s176 + $0xc4] sm:$0xf]
        %v246 = vld [vmem:[%s176 + $0xc8] sm:$0xf]
        %v247 = vld [vmem:[%s176 + $0xcc] sm:$0xf]
        %v248 = vld [vmem:[%s176 + $0xd0] sm:$0xf]
        %v249 = vld [vmem:[%s176 + $0xd4] sm:$0xf]
        %v250 = vld [vmem:[%s176 + $0xd8] sm:$0xf]
        %v251 = vld [vmem:[%s176 + $0xdc] sm:$0xf]
        %v252 = vld [vmem:[%s176 + $0xe0] sm:$0xf]
        %v253 = vld [vmem:[%s176 + $0xe4] sm:$0xf]
        %v254 = vld [vmem:[%s176 + $0xe8] sm:$0xf]
        %v255 = vld [vmem:[%s176 + $0xec] sm:$0xf]
        %v256 = vld [vmem:[%s176 + $0xf0] sm:$0xf]
        %v257 = vld [vmem:[%s176 + $0xf4] sm:$0xf]
        %v258 = vld [vmem:[%s176 + $0xf8] sm:$0xf]
        %v259 = vld [vmem:[%s176 + $0xfc] sm:$0xf]
        %v260 = vld [vmem:[%s176 + $0x100] sm:$0xf]
        %v261 = vld [vmem:[%s176 + $0x104] sm:$0xf]
        %v262 = vld [vmem:[%s176 + $0x108] sm:$0xf]
        %v263 = vld [vmem:[%s176 + $0x10c] sm:$0xf]
        %v264 = vld [vmem:[%s176 + $0x110] sm:$0xf]
        %v265 = vld [vmem:[%s176 + $0x114] sm:$0xf]
        %v266 = vld [vmem:[%s176 + $0x118] sm:$0xf]
        %v267 = vld [vmem:[%s176 + $0x11c] sm:$0xf]
        %v268 = vld [vmem:[%s176 + $0x120] sm:$0xf]
        %v269 = vld [vmem:[%s176 + $0x124] sm:$0xf]
        %v270 = vld [vmem:[%s176 + $0x128] sm:$0xf]
        %v271 = vld [vmem:[%s176 + $0x12c] sm:$0xf]
        %v272 = vld [vmem:[%s176 + $0x130] sm:$0xf]
        %v273 = vld [vmem:[%s176 + $0x134] sm:$0xf]
        %v274 = vld [vmem:[%s176 + $0x138] sm:$0xf]
        %v275 = vld [vmem:[%s176 + $0x13c] sm:$0xf]
        %v276 = vld [vmem:[%s176 + $0x140] sm:$0xf]
        %v277 = vld [vmem:[%s176 + $0x144] sm:$0xf]
        %v278 = vld [vmem:[%s176 + $0x148] sm:$0xf]
        %v279 = vld [vmem:[%s176 + $0x14c] sm:$0xf]
        %v280 = vld [vmem:[%s176 + $0x150] sm:$0xf]
        %v281 = vld [vmem:[%s176 + $0x154] sm:$0xf]
        %v282 = vld [vmem:[%s176 + $0x158] sm:$0xf]
        %v283 = vld [vmem:[%s176 + $0x15c] sm:$0xf]
        %v284 = vld [vmem:[%s176 + $0x160] sm:$0xf]
        %v285 = vld [vmem:[%s176 + $0x164] sm:$0xf]
        %v286 = vld [vmem:[%s176 + $0x168] sm:$0xf]
        %v287 = vld [vmem:[%s176 + $0x16c] sm:$0xf]
        %v288 = vld [vmem:[%s176 + $0x170] sm:$0xf]
        %v289 = vld [vmem:[%s176 + $0x174] sm:$0xf]
        %v290 = vld [vmem:[%s176 + $0x178] sm:$0xf]
        %v291 = vld [vmem:[%s176 + $0x17c] sm:$0xf]
        %v292 = vld [vmem:[%s176 + $0x180] sm:$0xf]
        %v293 = vld [vmem:[%s176 + $0x184] sm:$0xf]
        %v294 = vld [vmem:[%s176 + $0x188] sm:$0xf]
        %v295 = vld [vmem:[%s176 + $0x18c] sm:$0xf]
        %v296 = vld [vmem:[%s176 + $0x190] sm:$0xf]
        %v297 = vld [vmem:[%s176 + $0x194] sm:$0xf]
        %v298 = vld [vmem:[%s176 + $0x198] sm:$0xf]
        %v299 = vld [vmem:[%s176 + $0x19c] sm:$0xf]
        %v300 = vld [vmem:[%s176 + $0x1a0] sm:$0xf]
        %v301 = vld [vmem:[%s176 + $0x1a4] sm:$0xf]
        %v302 = vld [vmem:[%s176 + $0x1a8] sm:$0xf]
        %v303 = vld [vmem:[%s176 + $0x1ac] sm:$0xf]
        %v304 = vld [vmem:[%s176 + $0x1b0] sm:$0xf]
        %v305 = vld [vmem:[%s176 + $0x1b4] sm:$0xf]
        %v306 = vld [vmem:[%s176 + $0x1b8] sm:$0xf]
        %v307 = vld [vmem:[%s176 + $0x1bc] sm:$0xf]
        %v308 = vld [vmem:[%s176 + $0x1c0] sm:$0xf]
        %v309 = vld [vmem:[%s176 + $0x1c4] sm:$0xf]
        %v310 = vld [vmem:[%s176 + $0x1c8] sm:$0xf]
        %v311 = vld [vmem:[%s176 + $0x1cc] sm:$0xf]
        %v312 = vld [vmem:[%s176 + $0x1d0] sm:$0xf]
        %v313 = vld [vmem:[%s176 + $0x1d4] sm:$0xf]
        %v314 = vld [vmem:[%s176 + $0x1d8] sm:$0xf]
        %v315 = vld [vmem:[%s176 + $0x1dc] sm:$0xf]
        %v316 = vld [vmem:[%s176 + $0x1e0] sm:$0xf]
        %v317 = vld [vmem:[%s176 + $0x1e4] sm:$0xf]
        %v318 = vld [vmem:[%s176 + $0x1e8] sm:$0xf]
        %v319 = vld [vmem:[%s176 + $0x1ec] sm:$0xf]
        %v320 = vld [vmem:[%s176 + $0x1f0] sm:$0xf]
        %v321 = vld [vmem:[%s176 + $0x1f4] sm:$0xf]
        %v322 = vld [vmem:[%s176 + $0x1f8] sm:$0xf]
        %v323 = vld [vmem:[%s176 + $0x1fc] sm:$0xf]
        %v324 = vld [vmem:[%s176 + $0x200] sm:$0xf]
        %v325 = vld [vmem:[%s176 + $0x204] sm:$0xf]
        %v326 = vld [vmem:[%s176 + $0x208] sm:$0xf]
        %v327 = vld [vmem:[%s176 + $0x20c] sm:$0xf]
        %v328 = vld [vmem:[%s176 + $0x210] sm:$0xf]
        %v329 = vld [vmem:[%s176 + $0x214] sm:$0xf]
        %v330 = vld [vmem:[%s176 + $0x218] sm:$0xf]
        %v331 = vld [vmem:[%s176 + $0x21c] sm:$0xf]
        %v332 = vld [vmem:[%s176 + $0x220] sm:$0xf]
        %v333 = vld [vmem:[%s176 + $0x224] sm:$0xf]
        %v334 = vld [vmem:[%s176 + $0x228] sm:$0xf]
        %v335 = vld [vmem:[%s176 + $0x22c] sm:$0xf]
        %v336 = vld [vmem:[%s176 + $0x230] sm:$0xf]
        %v337 = vld [vmem:[%s176 + $0x234] sm:$0xf]
        %v338 = vld [vmem:[%s176 + $0x238] sm:$0xf]
        %v339 = vld [vmem:[%s176 + $0x23c] sm:$0xf]
        %v340 = vld [vmem:[%s176 + $0x240] sm:$0xf]
        %v341 = vld [vmem:[%s176 + $0x244] sm:$0xf]
        %v342 = vld [vmem:[%s176 + $0x248] sm:$0xf]
        %v343 = vld [vmem:[%s176 + $0x24c] sm:$0xf]
        %v344 = vld [vmem:[%s176 + $0x250] sm:$0xf]
        %v345 = vld [vmem:[%s176 + $0x254] sm:$0xf]
        %v346 = vld [vmem:[%s176 + $0x258] sm:$0xf]
        %v347 = vld [vmem:[%s176 + $0x25c] sm:$0xf]
        %v348 = vld [vmem:[%s176 + $0x260] sm:$0xf]
        %v349 = vld [vmem:[%s176 + $0x264] sm:$0xf]
        %v350 = vld [vmem:[%s176 + $0x268] sm:$0xf]
        %v351 = vld [vmem:[%s176 + $0x26c] sm:$0xf]
        %v352 = vld [vmem:[%s176 + $0x270] sm:$0xf]
        %v353 = vld [vmem:[%s176 + $0x274] sm:$0xf]
        %v354 = vld [vmem:[%s176 + $0x278] sm:$0xf]
        %v355 = vld [vmem:[%s176 + $0x27c] sm:$0xf]
        %v356 = vld [vmem:[%s176 + $0x280] sm:$0xf]
        %v357 = vld [vmem:[%s176 + $0x284] sm:$0xf]
        %v358 = vld [vmem:[%s176 + $0x288] sm:$0xf]
        %v359 = vld [vmem:[%s176 + $0x28c] sm:$0xf]
        %v360 = vld [vmem:[%s176 + $0x290] sm:$0xf]
        %v361 = vld [vmem:[%s176 + $0x294] sm:$0xf]
        %v362 = vld [vmem:[%s176 + $0x298] sm:$0xf]
        %v363 = vld [vmem:[%s176 + $0x29c] sm:$0xf]
        %v364 = vld [vmem:[%s176 + $0x2a0] sm:$0xf]
        %v365 = vld [vmem:[%s176 + $0x2a4] sm:$0xf]
        %v366 = vld [vmem:[%s176 + $0x2a8] sm:$0xf]
        %v367 = vld [vmem:[%s176 + $0x2ac] sm:$0xf]
        %v368 = vld [vmem:[%s176 + $0x2b0] sm:$0xf]
        %v369 = vld [vmem:[%s176 + $0x2b4] sm:$0xf]
        %v370 = vld [vmem:[%s176 + $0x2b8] sm:$0xf]
        %v371 = vld [vmem:[%s176 + $0x2bc] sm:$0xf]
        %v372 = vld [vmem:[%s176 + $0x2c0] sm:$0xf]
        %v373 = vld [vmem:[%s176 + $0x2c4] sm:$0xf]
        %v374 = vld [vmem:[%s176 + $0x2c8] sm:$0xf]
        %v375 = vld [vmem:[%s176 + $0x2cc] sm:$0xf]
        %v376 = vld [vmem:[%s176 + $0x2d0] sm:$0xf]
        %v377 = vld [vmem:[%s176 + $0x2d4] sm:$0xf]
        %v378 = vld [vmem:[%s176 + $0x2d8] sm:$0xf]
        %v379 = vld [vmem:[%s176 + $0x2dc] sm:$0xf]
        %v380 = vld [vmem:[%s176 + $0x2e0] sm:$0xf]
        %v381 = vld [vmem:[%s176 + $0x2e4] sm:$0xf]
        %v382 = vld [vmem:[%s176 + $0x2e8] sm:$0xf]
        %v383 = vld [vmem:[%s176 + $0x2ec] sm:$0xf]
        %v384 = vld [vmem:[%s176 + $0x2f0] sm:$0xf]
        %v385 = vld [vmem:[%s176 + $0x2f4] sm:$0xf]
        %v386 = vld [vmem:[%s176 + $0x2f8] sm:$0xf]
        %v387 = vld [vmem:[%s176 + $0x2fc] sm:$0xf]
        %v388 = vld [vmem:[%s176 + $0x300] sm:$0xf]
        %v389 = vld [vmem:[%s176 + $0x304] sm:$0xf]
        %v390 = vld [vmem:[%s176 + $0x308] sm:$0xf]
        %v391 = vld [vmem:[%s176 + $0x30c] sm:$0xf]
        %v392 = vld [vmem:[%s176 + $0x310] sm:$0xf]
        %v393 = vld [vmem:[%s176 + $0x314] sm:$0xf]
        %v394 = vld [vmem:[%s176 + $0x318] sm:$0xf]
        %v395 = vld [vmem:[%s176 + $0x31c] sm:$0xf]
        %v396 = vld [vmem:[%s176 + $0x320] sm:$0xf]
        %v397 = vld [vmem:[%s176 + $0x324] sm:$0xf]
        %v398 = vld [vmem:[%s176 + $0x328] sm:$0xf]
        %v399 = vld [vmem:[%s176 + $0x32c] sm:$0xf]
        %v400 = vld [vmem:[%s176 + $0x330] sm:$0xf]
        %v401 = vld [vmem:[%s176 + $0x334] sm:$0xf]
        %v402 = vld [vmem:[%s176 + $0x338] sm:$0xf]
        %v403 = vld [vmem:[%s176 + $0x33c] sm:$0xf]
        %v404 = vld [vmem:[%s176 + $0x340] sm:$0xf]
        %v405 = vld [vmem:[%s176 + $0x344] sm:$0xf]
        %v406 = vld [vmem:[%s176 + $0x348] sm:$0xf]
        %v407 = vld [vmem:[%s176 + $0x34c] sm:$0xf]
        %v408 = vld [vmem:[%s176 + $0x350] sm:$0xf]
        %v409 = vld [vmem:[%s176 + $0x354] sm:$0xf]
        %v410 = vld [vmem:[%s176 + $0x358] sm:$0xf]
        %v411 = vld [vmem:[%s176 + $0x35c] sm:$0xf]
        %v412 = vld [vmem:[%s176 + $0x360] sm:$0xf]
        %v413 = vld [vmem:[%s176 + $0x364] sm:$0xf]
        %v414 = vld [vmem:[%s176 + $0x368] sm:$0xf]
        %v415 = vld [vmem:[%s176 + $0x36c] sm:$0xf]
        %v416 = vld [vmem:[%s176 + $0x370] sm:$0xf]
        %v417 = vld [vmem:[%s176 + $0x374] sm:$0xf]
        %v418 = vld [vmem:[%s176 + $0x378] sm:$0xf]
        %v419 = vld [vmem:[%s176 + $0x37c] sm:$0xf]
        %v420 = vld [vmem:[%s176 + $0x380] sm:$0xf]
        %v421 = vld [vmem:[%s176 + $0x384] sm:$0xf]
        %v422 = vld [vmem:[%s176 + $0x388] sm:$0xf]
        %v423 = vld [vmem:[%s176 + $0x38c] sm:$0xf]
        %v424 = vld [vmem:[%s176 + $0x390] sm:$0xf]
        %v425 = vld [vmem:[%s176 + $0x394] sm:$0xf]
        %v426 = vld [vmem:[%s176 + $0x398] sm:$0xf]
        %v427 = vld [vmem:[%s176 + $0x39c] sm:$0xf]
        %v428 = vld [vmem:[%s176 + $0x3a0] sm:$0xf]
        %v429 = vld [vmem:[%s176 + $0x3a4] sm:$0xf]
        %v430 = vld [vmem:[%s176 + $0x3a8] sm:$0xf]
        %v431 = vld [vmem:[%s176 + $0x3ac] sm:$0xf]
        %v432 = vld [vmem:[%s176 + $0x3b0] sm:$0xf]
        %v433 = vld [vmem:[%s176 + $0x3b4] sm:$0xf]
        %v434 = vld [vmem:[%s176 + $0x3b8] sm:$0xf]
        %v435 = vld [vmem:[%s176 + $0x3bc] sm:$0xf]
        %v436 = vld [vmem:[%s176 + $0x3c0] sm:$0xf]
        %v437 = vld [vmem:[%s176 + $0x3c4] sm:$0xf]
        %v438 = vld [vmem:[%s176 + $0x3c8] sm:$0xf]
        %v439 = vld [vmem:[%s176 + $0x3cc] sm:$0xf]
        %v440 = vld [vmem:[%s176 + $0x3d0] sm:$0xf]
        %v441 = vld [vmem:[%s176 + $0x3d4] sm:$0xf]
        %v442 = vld [vmem:[%s176 + $0x3d8] sm:$0xf]
        %v443 = vld [vmem:[%s176 + $0x3dc] sm:$0xf]
        %v444 = vld [vmem:[%s176 + $0x3e0] sm:$0xf]
        %v445 = vld [vmem:[%s176 + $0x3e4] sm:$0xf]
        %v446 = vld [vmem:[%s176 + $0x3e8] sm:$0xf]
        %v447 = vld [vmem:[%s176 + $0x3ec] sm:$0xf]
        %v448 = vld [vmem:[%s176 + $0x3f0] sm:$0xf]
        %v449 = vld [vmem:[%s176 + $0x3f4] sm:$0xf]
        %v450 = vld [vmem:[%s176 + $0x3f8] sm:$0xf]
        %v451 = vld [vmem:[%s176 + $0x3fc] sm:$0xf]
        %v452 = vld [vmem:[%s176 + $0x400] sm:$0xf]
        %v453 = vld [vmem:[%s176 + $0x404] sm:$0xf]
        %v454 = vld [vmem:[%s176 + $0x408] sm:$0xf]
        %v455 = vld [vmem:[%s176 + $0x40c] sm:$0xf]
        %v456 = vld [vmem:[%s176 + $0x410] sm:$0xf]
        %v457 = vld [vmem:[%s176 + $0x414] sm:$0xf]
        %v458 = vld [vmem:[%s176 + $0x418] sm:$0xf]
        %v459 = vld [vmem:[%s176 + $0x41c] sm:$0xf]
        %v460 = vld [vmem:[%s176 + $0x420] sm:$0xf]
        %v461 = vld [vmem:[%s176 + $0x424] sm:$0xf]
        %v462 = vld [vmem:[%s176 + $0x428] sm:$0xf]
        %v463 = vld [vmem:[%s176 + $0x42c] sm:$0xf]
        %v464 = vld [vmem:[%s176 + $0x430] sm:$0xf]
        %v465 = vld [vmem:[%s176 + $0x434] sm:$0xf]
        %v466 = vld [vmem:[%s176 + $0x438] sm:$0xf]
        %v467 = vld [vmem:[%s176 + $0x43c] sm:$0xf]
        %v468 = vld [vmem:[%s176 + $0x440] sm:$0xf]
        %v469 = vld [vmem:[%s176 + $0x444] sm:$0xf]
        %v470 = vld [vmem:[%s176 + $0x448] sm:$0xf]
        %v471 = vld [vmem:[%s176 + $0x44c] sm:$0xf]
        %v472 = vld [vmem:[%s176 + $0x450] sm:$0xf]
        %v473 = vld [vmem:[%s176 + $0x454] sm:$0xf]
        %v474 = vld [vmem:[%s176 + $0x458] sm:$0xf]
        %v475 = vld [vmem:[%s176 + $0x45c] sm:$0xf]
        %v476 = vld [vmem:[%s176 + $0x460] sm:$0xf]
        %v477 = vld [vmem:[%s176 + $0x464] sm:$0xf]
        %v478 = vld [vmem:[%s176 + $0x468] sm:$0xf]
        %v479 = vld [vmem:[%s176 + $0x46c] sm:$0xf]
        %v480 = vld [vmem:[%s176 + $0x470] sm:$0xf]
        %v481 = vld [vmem:[%s176 + $0x474] sm:$0xf]
        %v482 = vld [vmem:[%s176 + $0x478] sm:$0xf]
        %v483 = vld [vmem:[%s176 + $0x47c] sm:$0xf]
        %v484 = vld [vmem:[%s176 + $0x480] sm:$0xf]
        %v485 = vld [vmem:[%s176 + $0x484] sm:$0xf]
        %v486 = vld [vmem:[%s176 + $0x488] sm:$0xf]
        %v487 = vld [vmem:[%s176 + $0x48c] sm:$0xf]
        %v488 = vld [vmem:[%s176 + $0x490] sm:$0xf]
        %v489 = vld [vmem:[%s176 + $0x494] sm:$0xf]
        %v490 = vld [vmem:[%s176 + $0x498] sm:$0xf]
        %v491 = vld [vmem:[%s176 + $0x49c] sm:$0xf]
        %v492 = vld [vmem:[%s176 + $0x4a0] sm:$0xf]
        %v493 = vld [vmem:[%s176 + $0x4a4] sm:$0xf]
        %v494 = vld [vmem:[%s176 + $0x4a8] sm:$0xf]
        %v495 = vld [vmem:[%s176 + $0x4ac] sm:$0xf]
        %v496 = vld [vmem:[%s176 + $0x4b0] sm:$0xf]
        %v497 = vld [vmem:[%s176 + $0x4b4] sm:$0xf]
        %v498 = vld [vmem:[%s176 + $0x4b8] sm:$0xf]
        %v499 = vld [vmem:[%s176 + $0x4bc] sm:$0xf]
        %v500 = vld [vmem:[%s176 + $0x4c0] sm:$0xf]
        %v501 = vld [vmem:[%s176 + $0x4c4] sm:$0xf]
        %v502 = vld [vmem:[%s176 + $0x4c8] sm:$0xf]
        %v503 = vld [vmem:[%s176 + $0x4cc] sm:$0xf]
        %v504 = vld [vmem:[%s176 + $0x4d0] sm:$0xf]
        %v505 = vld [vmem:[%s176 + $0x4d4] sm:$0xf]
        %v506 = vld [vmem:[%s176 + $0x4d8] sm:$0xf]
        %v507 = vld [vmem:[%s176 + $0x4dc] sm:$0xf]
        %v508 = vld [vmem:[%s176 + $0x4e0] sm:$0xf]
        %v509 = vld [vmem:[%s176 + $0x4e4] sm:$0xf]
        %v510 = vld [vmem:[%s176 + $0x4e8] sm:$0xf]
        %v511 = vld [vmem:[%s176 + $0x4ec] sm:$0xf]
        %v512 = vld [vmem:[%s176 + $0x4f0] sm:$0xf]
        %v513 = vld [vmem:[%s176 + $0x4f4] sm:$0xf]
        %v514 = vld [vmem:[%s176 + $0x4f8] sm:$0xf]
        %v515 = vld [vmem:[%s176 + $0x4fc] sm:$0xf]
        %v516 = vld [vmem:[%s176 + $0x500] sm:$0xf]
        %v517 = vld [vmem:[%s176 + $0x504] sm:$0xf]
        %v518 = vld [vmem:[%s176 + $0x508] sm:$0xf]
        %v519 = vld [vmem:[%s176 + $0x50c] sm:$0xf]
        %v520 = vld [vmem:[%s176 + $0x510] sm:$0xf]
        %v521 = vld [vmem:[%s176 + $0x514] sm:$0xf]
        %v522 = vld [vmem:[%s176 + $0x518] sm:$0xf]
        %v523 = vld [vmem:[%s176 + $0x51c] sm:$0xf]
        %v524 = vld [vmem:[%s176 + $0x520] sm:$0xf]
        %v525 = vld [vmem:[%s176 + $0x524] sm:$0xf]
        %v526 = vld [vmem:[%s176 + $0x528] sm:$0xf]
        %v527 = vld [vmem:[%s176 + $0x52c] sm:$0xf]
        %v528 = vld [vmem:[%s176 + $0x530] sm:$0xf]
        %v529 = vld [vmem:[%s176 + $0x534] sm:$0xf]
        %v530 = vld [vmem:[%s176 + $0x538] sm:$0xf]
        %v531 = vld [vmem:[%s176 + $0x53c] sm:$0xf]
        %v532 = vld [vmem:[%s176 + $0x540] sm:$0xf]
        %v533 = vld [vmem:[%s176 + $0x544] sm:$0xf]
        %v534 = vld [vmem:[%s176 + $0x548] sm:$0xf]
        %v535 = vld [vmem:[%s176 + $0x54c] sm:$0xf]
        %v536 = vld [vmem:[%s176 + $0x550] sm:$0xf]
        %v537 = vld [vmem:[%s176 + $0x554] sm:$0xf]
        %v538 = vld [vmem:[%s176 + $0x558] sm:$0xf]
        %v539 = vld [vmem:[%s176 + $0x55c] sm:$0xf]
        %v540 = vld [vmem:[%s176 + $0x560] sm:$0xf]
        %v541 = vld [vmem:[%s176 + $0x564] sm:$0xf]
        %v542 = vld [vmem:[%s176 + $0x568] sm:$0xf]
        %v543 = vld [vmem:[%s176 + $0x56c] sm:$0xf]
        %v544 = vld [vmem:[%s176 + $0x570] sm:$0xf]
        %v545 = vld [vmem:[%s176 + $0x574] sm:$0xf]
        %v546 = vld [vmem:[%s176 + $0x578] sm:$0xf]
        %v547 = vld [vmem:[%s176 + $0x57c] sm:$0xf]
        %v548 = vld [vmem:[%s176 + $0x580] sm:$0xf]
        %v549 = vld [vmem:[%s176 + $0x584] sm:$0xf]
        %v550 = vld [vmem:[%s176 + $0x588] sm:$0xf]
        %v551 = vld [vmem:[%s176 + $0x58c] sm:$0xf]
        %v552 = vld [vmem:[%s176 + $0x590] sm:$0xf]
        %v553 = vld [vmem:[%s176 + $0x594] sm:$0xf]
        %v554 = vld [vmem:[%s176 + $0x598] sm:$0xf]
        %v555 = vld [vmem:[%s176 + $0x59c] sm:$0xf]
        %v556 = vld [vmem:[%s176 + $0x5a0] sm:$0xf]
        %v557 = vld [vmem:[%s176 + $0x5a4] sm:$0xf]
        %v558 = vld [vmem:[%s176 + $0x5a8] sm:$0xf]
        %v559 = vld [vmem:[%s176 + $0x5ac] sm:$0xf]
        %v560 = vld [vmem:[%s176 + $0x5b0] sm:$0xf]
        %v561 = vld [vmem:[%s176 + $0x5b4] sm:$0xf]
        %v562 = vld [vmem:[%s176 + $0x5b8] sm:$0xf]
        %v563 = vld [vmem:[%s176 + $0x5bc] sm:$0xf]
        %v564 = vld [vmem:[%s176 + $0x5c0] sm:$0xf]
        %v565 = vld [vmem:[%s176 + $0x5c4] sm:$0xf]
        %v566 = vld [vmem:[%s176 + $0x5c8] sm:$0xf]
        %v567 = vld [vmem:[%s176 + $0x5cc] sm:$0xf]
        %v568 = vld [vmem:[%s176 + $0x5d0] sm:$0xf]
        %v569 = vld [vmem:[%s176 + $0x5d4] sm:$0xf]
        %v570 = vld [vmem:[%s176 + $0x5d8] sm:$0xf]
        %v571 = vld [vmem:[%s176 + $0x5dc] sm:$0xf]
        %v572 = vld [vmem:[%s176 + $0x5e0] sm:$0xf]
        %v573 = vld [vmem:[%s176 + $0x5e4] sm:$0xf]
        %v574 = vld [vmem:[%s176 + $0x5e8] sm:$0xf]
        %v575 = vld [vmem:[%s176 + $0x5ec] sm:$0xf]
        %v576 = vld [vmem:[%s176 + $0x5f0] sm:$0xf]
        %v577 = vld [vmem:[%s176 + $0x5f4] sm:$0xf]
        %v578 = vld [vmem:[%s176 + $0x5f8] sm:$0xf]
        %v579 = vld [vmem:[%s176 + $0x5fc] sm:$0xf]
        %v580 = vld [vmem:[%s176 + $0x600] sm:$0xf]
        %v581 = vld [vmem:[%s176 + $0x604] sm:$0xf]
        %v582 = vld [vmem:[%s176 + $0x608] sm:$0xf]
        %v583 = vld [vmem:[%s176 + $0x60c] sm:$0xf]
        %v584 = vld [vmem:[%s176 + $0x610] sm:$0xf]
        %v585 = vld [vmem:[%s176 + $0x614] sm:$0xf]
        %v586 = vld [vmem:[%s176 + $0x618] sm:$0xf]
        %v587 = vld [vmem:[%s176 + $0x61c] sm:$0xf]
        %v588 = vld [vmem:[%s176 + $0x620] sm:$0xf]
        %v589 = vld [vmem:[%s176 + $0x624] sm:$0xf]
        %v590 = vld [vmem:[%s176 + $0x628] sm:$0xf]
        %v591 = vld [vmem:[%s176 + $0x62c] sm:$0xf]
        %v592 = vld [vmem:[%s176 + $0x630] sm:$0xf]
        %v593 = vld [vmem:[%s176 + $0x634] sm:$0xf]
        %v594 = vld [vmem:[%s176 + $0x638] sm:$0xf]
        %v595 = vld [vmem:[%s176 + $0x63c] sm:$0xf]
        %v596 = vld [vmem:[%s176 + $0x640] sm:$0xf]
        %v597 = vld [vmem:[%s176 + $0x644] sm:$0xf]
        %v598 = vld [vmem:[%s176 + $0x648] sm:$0xf]
        %v599 = vld [vmem:[%s176 + $0x64c] sm:$0xf]
        %v600 = vld [vmem:[%s176 + $0x650] sm:$0xf]
        %v601 = vld [vmem:[%s176 + $0x654] sm:$0xf]
        %v602 = vld [vmem:[%s176 + $0x658] sm:$0xf]
        %v603 = vld [vmem:[%s176 + $0x65c] sm:$0xf]
        %v604 = vld [vmem:[%s176 + $0x660] sm:$0xf]
        %v605 = vld [vmem:[%s176 + $0x664] sm:$0xf]
        %v606 = vld [vmem:[%s176 + $0x668] sm:$0xf]
        %v607 = vld [vmem:[%s176 + $0x66c] sm:$0xf]
        %v608 = vld [vmem:[%s176 + $0x670] sm:$0xf]
        %v609 = vld [vmem:[%s176 + $0x674] sm:$0xf]
        %v610 = vld [vmem:[%s176 + $0x678] sm:$0xf]
        %v611 = vld [vmem:[%s176 + $0x67c] sm:$0xf]
        %v612 = vld [vmem:[%s176 + $0x680] sm:$0xf]
        %v613 = vld [vmem:[%s176 + $0x684] sm:$0xf]
        %v614 = vld [vmem:[%s176 + $0x688] sm:$0xf]
        %v615 = vld [vmem:[%s176 + $0x68c] sm:$0xf]
        %v616 = vld [vmem:[%s176 + $0x690] sm:$0xf]
        %v617 = vld [vmem:[%s176 + $0x694] sm:$0xf]
        %v618 = vld [vmem:[%s176 + $0x698] sm:$0xf]
        %v619 = vld [vmem:[%s176 + $0x69c] sm:$0xf]
        %v620 = vld [vmem:[%s176 + $0x6a0] sm:$0xf]
        %v621 = vld [vmem:[%s176 + $0x6a4] sm:$0xf]
        %v622 = vld [vmem:[%s176 + $0x6a8] sm:$0xf]
        %v623 = vld [vmem:[%s176 + $0x6ac] sm:$0xf]
        %v624 = vld [vmem:[%s176 + $0x6b0] sm:$0xf]
        %v625 = vld [vmem:[%s176 + $0x6b4] sm:$0xf]
        %v626 = vld [vmem:[%s176 + $0x6b8] sm:$0xf]
        %v627 = vld [vmem:[%s176 + $0x6bc] sm:$0xf]
        %v628 = vld [vmem:[%s176 + $0x6c0] sm:$0xf]
        %v629 = vld [vmem:[%s176 + $0x6c4] sm:$0xf]
        %v630 = vld [vmem:[%s176 + $0x6c8] sm:$0xf]
        %v631 = vld [vmem:[%s176 + $0x6cc] sm:$0xf]
        %v632 = vld [vmem:[%s176 + $0x6d0] sm:$0xf]
        %v633 = vld [vmem:[%s176 + $0x6d4] sm:$0xf]
        %v634 = vld [vmem:[%s176 + $0x6d8] sm:$0xf]
        %v635 = vld [vmem:[%s176 + $0x6dc] sm:$0xf]
        %v636 = vld [vmem:[%s176 + $0x6e0] sm:$0xf]
        %v637 = vld [vmem:[%s176 + $0x6e4] sm:$0xf]
        %v638 = vld [vmem:[%s176 + $0x6e8] sm:$0xf]
        %v639 = vld [vmem:[%s176 + $0x6ec] sm:$0xf]
        %v640 = vld [vmem:[%s176 + $0x6f0] sm:$0xf]
        %v641 = vld [vmem:[%s176 + $0x6f4] sm:$0xf]
        %v642 = vld [vmem:[%s176 + $0x6f8] sm:$0xf]
        %v643 = vld [vmem:[%s176 + $0x6fc] sm:$0xf]
        %v644 = vld [vmem:[%s176 + $0x700] sm:$0xf]
        %v645 = vld [vmem:[%s176 + $0x704] sm:$0xf]
        %v646 = vld [vmem:[%s176 + $0x708] sm:$0xf]
        %v647 = vld [vmem:[%s176 + $0x70c] sm:$0xf]
        %v648 = vld [vmem:[%s176 + $0x710] sm:$0xf]
        %v649 = vld [vmem:[%s176 + $0x714] sm:$0xf]
        %v650 = vld [vmem:[%s176 + $0x718] sm:$0xf]
        %v651 = vld [vmem:[%s176 + $0x71c] sm:$0xf]
        %v652 = vld [vmem:[%s176 + $0x720] sm:$0xf]
        %v653 = vld [vmem:[%s176 + $0x724] sm:$0xf]
        %v654 = vld [vmem:[%s176 + $0x728] sm:$0xf]
        %v655 = vld [vmem:[%s176 + $0x72c] sm:$0xf]
        %v656 = vld [vmem:[%s176 + $0x730] sm:$0xf]
        %v657 = vld [vmem:[%s176 + $0x734] sm:$0xf]
        %v658 = vld [vmem:[%s176 + $0x738] sm:$0xf]
        %v659 = vld [vmem:[%s176 + $0x73c] sm:$0xf]
        %v660 = vld [vmem:[%s176 + $0x740] sm:$0xf]
        %v661 = vld [vmem:[%s176 + $0x744] sm:$0xf]
        %v662 = vld [vmem:[%s176 + $0x748] sm:$0xf]
        %v663 = vld [vmem:[%s176 + $0x74c] sm:$0xf]
        %v664 = vld [vmem:[%s176 + $0x750] sm:$0xf]
        %v665 = vld [vmem:[%s176 + $0x754] sm:$0xf]
        %v666 = vld [vmem:[%s176 + $0x758] sm:$0xf]
        %v667 = vld [vmem:[%s176 + $0x75c] sm:$0xf]
        %v668 = vld [vmem:[%s176 + $0x760] sm:$0xf]
        %v669 = vld [vmem:[%s176 + $0x764] sm:$0xf]
        %v670 = vld [vmem:[%s176 + $0x768] sm:$0xf]
        %v671 = vld [vmem:[%s176 + $0x76c] sm:$0xf]
        %v672 = vld [vmem:[%s176 + $0x770] sm:$0xf]
        %v673 = vld [vmem:[%s176 + $0x774] sm:$0xf]
        %v674 = vld [vmem:[%s176 + $0x778] sm:$0xf]
        %v675 = vld [vmem:[%s176 + $0x77c] sm:$0xf]
        %v676 = vld [vmem:[%s176 + $0x780] sm:$0xf]
        %v677 = vld [vmem:[%s176 + $0x784] sm:$0xf]
        %v678 = vld [vmem:[%s176 + $0x788] sm:$0xf]
        %v679 = vld [vmem:[%s176 + $0x78c] sm:$0xf]
        %v680 = vld [vmem:[%s176 + $0x790] sm:$0xf]
        %v681 = vld [vmem:[%s176 + $0x794] sm:$0xf]
        %v682 = vld [vmem:[%s176 + $0x798] sm:$0xf]
        %v683 = vld [vmem:[%s176 + $0x79c] sm:$0xf]
        %v684 = vld [vmem:[%s176 + $0x7a0] sm:$0xf]
        %v685 = vld [vmem:[%s176 + $0x7a4] sm:$0xf]
        %v686 = vld [vmem:[%s176 + $0x7a8] sm:$0xf]
        %v687 = vld [vmem:[%s176 + $0x7ac] sm:$0xf]
        %v688 = vld [vmem:[%s176 + $0x7b0] sm:$0xf]
        %v689 = vld [vmem:[%s176 + $0x7b4] sm:$0xf]
        %v690 = vld [vmem:[%s176 + $0x7b8] sm:$0xf]
        %v691 = vld [vmem:[%s176 + $0x7bc] sm:$0xf]
        %v692 = vld [vmem:[%s176 + $0x7c0] sm:$0xf]
        %v693 = vld [vmem:[%s176 + $0x7c4] sm:$0xf]
        %v694 = vld [vmem:[%s176 + $0x7c8] sm:$0xf]
        %v695 = vld [vmem:[%s176 + $0x7cc] sm:$0xf]
        %v696 = vld [vmem:[%s176 + $0x7d0] sm:$0xf]
        %v697 = vld [vmem:[%s176 + $0x7d4] sm:$0xf]
        %v698 = vld [vmem:[%s176 + $0x7d8] sm:$0xf]
        %v699 = vld [vmem:[%s176 + $0x7dc] sm:$0xf]
        %v700 = vld [vmem:[%s176 + $0x7e0] sm:$0xf]
        %v701 = vld [vmem:[%s176 + $0x7e4] sm:$0xf]
        %v702 = vld [vmem:[%s176 + $0x7e8] sm:$0xf]
        %v703 = vld [vmem:[%s176 + $0x7ec] sm:$0xf]
        %v704 = vld [vmem:[%s176 + $0x7f0] sm:$0xf]
        %v705 = vld [vmem:[%s176 + $0x7f4] sm:$0xf]
        %v706 = vld [vmem:[%s176 + $0x7f8] sm:$0xf]
        %v707 = vld [vmem:[%s176 + $0x7fc] sm:$0xf]
        %v712 = vcombine.high %v192, %v192
        %v714 = vunpack.c.l.s4 1966171168
        %v715 = vunpack.c.0.s8 %v714
        %v716 = vlaneseq
        %v717 = vshrl.u32 %v716, 7
        %v718 = vsub.s32 %v715, %v717
        %v719 = vrot.slane %v192, %v718
        %v721 = vunpack.c.l.s4 1966171168
        %v722 = vunpack.c.0.s8 %v721
        %v723 = vlaneseq
        %v724 = vshrl.u32 %v723, 7
        %v725 = vsub.s32 %v722, %v724
        %v726 = vrot.slane %v712, %v725
        %v727 = vcombine.high %v719, %v719
        %v728 = vcombine.high %v726, %v726
        %v730 = vunpack.c.l.s4 1966171168
        %v731 = vunpack.c.0.s8 %v730
        %v732 = vlaneseq
        %v733 = vshrl.u32 %v732, 7
        %v734 = vsub.s32 %v731, %v733
        %v735 = vrot.slane %v719, %v734
        %v737 = vunpack.c.l.s4 1966171168
        %v738 = vunpack.c.0.s8 %v737
        %v739 = vlaneseq
        %v740 = vshrl.u32 %v739, 7
        %v741 = vsub.s32 %v738, %v740
        %v742 = vrot.slane %v726, %v741
        %v744 = vunpack.c.l.s4 1966171168
        %v745 = vunpack.c.0.s8 %v744
        %v746 = vlaneseq
        %v747 = vshrl.u32 %v746, 7
        %v748 = vsub.s32 %v745, %v747
        %v749 = vrot.slane %v727, %v748
        %v751 = vunpack.c.l.s4 1966171168
        %v752 = vunpack.c.0.s8 %v751
        %v753 = vlaneseq
        %v754 = vshrl.u32 %v753, 7
        %v755 = vsub.s32 %v752, %v754
        %v756 = vrot.slane %v728, %v755
        %v757 = vcombine.high %v735, %v735
        %v758 = vcombine.high %v742, %v742
        %v759 = vcombine.high %v749, %v749
        %v760 = vcombine.high %v756, %v756
        %v761 = vcombine.high %v193, %v193
        %v763 = vunpack.c.l.s4 1966171168
        %v764 = vunpack.c.0.s8 %v763
        %v765 = vlaneseq
        %v766 = vshrl.u32 %v765, 7
        %v767 = vsub.s32 %v764, %v766
        %v768 = vrot.slane %v193, %v767
        %v770 = vunpack.c.l.s4 1966171168
        %v771 = vunpack.c.0.s8 %v770
        %v772 = vlaneseq
        %v773 = vshrl.u32 %v772, 7
        %v774 = vsub.s32 %v771, %v773
        %v775 = vrot.slane %v761, %v774
        %v776 = vcombine.high %v768, %v768
        %v777 = vcombine.high %v775, %v775
        %v779 = vunpack.c.l.s4 1966171168
        %v780 = vunpack.c.0.s8 %v779
        %v781 = vlaneseq
        %v782 = vshrl.u32 %v781, 7
        %v783 = vsub.s32 %v780, %v782
        %v784 = vrot.slane %v768, %v783
        %v786 = vunpack.c.l.s4 1966171168
        %v787 = vunpack.c.0.s8 %v786
        %v788 = vlaneseq
        %v789 = vshrl.u32 %v788, 7
        %v790 = vsub.s32 %v787, %v789
        %v791 = vrot.slane %v775, %v790
        %v793 = vunpack.c.l.s4 1966171168
        %v794 = vunpack.c.0.s8 %v793
        %v795 = vlaneseq
        %v796 = vshrl.u32 %v795, 7
        %v797 = vsub.s32 %v794, %v796
        %v798 = vrot.slane %v776, %v797
        %v800 = vunpack.c.l.s4 1966171168
        %v801 = vunpack.c.0.s8 %v800
        %v802 = vlaneseq
        %v803 = vshrl.u32 %v802, 7
        %v804 = vsub.s32 %v801, %v803
        %v805 = vrot.slane %v777, %v804
        %v806 = vcombine.high %v784, %v784
        %v807 = vcombine.high %v791, %v791
        %v808 = vcombine.high %v798, %v798
        %v809 = vcombine.high %v805, %v805
        %v810 = vcombine.high %v194, %v194
        %v812 = vunpack.c.l.s4 1966171168
        %v813 = vunpack.c.0.s8 %v812
        %v814 = vlaneseq
        %v815 = vshrl.u32 %v814, 7
        %v816 = vsub.s32 %v813, %v815
        %v817 = vrot.slane %v194, %v816
        %v819 = vunpack.c.l.s4 1966171168
        %v820 = vunpack.c.0.s8 %v819
        %v821 = vlaneseq
        %v822 = vshrl.u32 %v821, 7
        %v823 = vsub.s32 %v820, %v822
        %v824 = vrot.slane %v810, %v823
        %v825 = vcombine.high %v817, %v817
        %v826 = vcombine.high %v824, %v824
        %v828 = vunpack.c.l.s4 1966171168
        %v829 = vunpack.c.0.s8 %v828
        %v830 = vlaneseq
        %v831 = vshrl.u32 %v830, 7
        %v832 = vsub.s32 %v829, %v831
        %v833 = vrot.slane %v817, %v832
        %v835 = vunpack.c.l.s4 1966171168
        %v836 = vunpack.c.0.s8 %v835
        %v837 = vlaneseq
        %v838 = vshrl.u32 %v837, 7
        %v839 = vsub.s32 %v836, %v838
        %v840 = vrot.slane %v824, %v839
        %v842 = vunpack.c.l.s4 1966171168
        %v843 = vunpack.c.0.s8 %v842
        %v844 = vlaneseq
        %v845 = vshrl.u32 %v844, 7
        %v846 = vsub.s32 %v843, %v845
        %v847 = vrot.slane %v825, %v846
        %v849 = vunpack.c.l.s4 1966171168
        %v850 = vunpack.c.0.s8 %v849
        %v851 = vlaneseq
        %v852 = vshrl.u32 %v851, 7
        %v853 = vsub.s32 %v850, %v852
        %v854 = vrot.slane %v826, %v853
        %v855 = vcombine.high %v833, %v833
        %v856 = vcombine.high %v840, %v840
        %v857 = vcombine.high %v847, %v847
        %v858 = vcombine.high %v854, %v854
        %v859 = vcombine.high %v195, %v195
        %v861 = vunpack.c.l.s4 1966171168
        %v862 = vunpack.c.0.s8 %v861
        %v863 = vlaneseq
        %v864 = vshrl.u32 %v863, 7
        %v865 = vsub.s32 %v862, %v864
        %v866 = vrot.slane %v195, %v865
        %v868 = vunpack.c.l.s4 1966171168
        %v869 = vunpack.c.0.s8 %v868
        %v870 = vlaneseq
        %v871 = vshrl.u32 %v870, 7
        %v872 = vsub.s32 %v869, %v871
        %v873 = vrot.slane %v859, %v872
        %v874 = vcombine.high %v866, %v866
        %v875 = vcombine.high %v873, %v873
        %v877 = vunpack.c.l.s4 1966171168
        %v878 = vunpack.c.0.s8 %v877
        %v879 = vlaneseq
        %v880 = vshrl.u32 %v879, 7
        %v881 = vsub.s32 %v878, %v880
        %v882 = vrot.slane %v866, %v881
        %v884 = vunpack.c.l.s4 1966171168
        %v885 = vunpack.c.0.s8 %v884
        %v886 = vlaneseq
        %v887 = vshrl.u32 %v886, 7
        %v888 = vsub.s32 %v885, %v887
        %v889 = vrot.slane %v873, %v888
        %v891 = vunpack.c.l.s4 1966171168
        %v892 = vunpack.c.0.s8 %v891
        %v893 = vlaneseq
        %v894 = vshrl.u32 %v893, 7
        %v895 = vsub.s32 %v892, %v894
        %v896 = vrot.slane %v874, %v895
        %v898 = vunpack.c.l.s4 1966171168
        %v899 = vunpack.c.0.s8 %v898
        %v900 = vlaneseq
        %v901 = vshrl.u32 %v900, 7
        %v902 = vsub.s32 %v899, %v901
        %v903 = vrot.slane %v875, %v902
        %v904 = vcombine.high %v882, %v882
        %v905 = vcombine.high %v889, %v889
        %v906 = vcombine.high %v896, %v896
        %v907 = vcombine.high %v903, %v903
        %v1452 = vunpack.c.l.b16 %v196
        %v1453 = vunpack.c.l.b16 %v197
        %v1454 = vunpack.c.l.b16 %v198
        %v1455 = vunpack.c.l.b16 %v199
        %v1456 = vunpack.c.l.b16 %v200
        %v1457 = vunpack.c.l.b16 %v201
        %v1458 = vunpack.c.l.b16 %v202
        %v1459 = vunpack.c.l.b16 %v203
        %v1460 = vunpack.c.l.b16 %v204
        %v1461 = vunpack.c.l.b16 %v205
        %v1462 = vunpack.c.l.b16 %v206
        %v1463 = vunpack.c.l.b16 %v207
        %v1464 = vunpack.c.l.b16 %v208
        %v1465 = vunpack.c.l.b16 %v209
        %v1466 = vunpack.c.l.b16 %v210
        %v1467 = vunpack.c.l.b16 %v211
        %v1468 = vunpack.c.l.b16 %v212
        %v1469 = vunpack.c.l.b16 %v213
        %v1470 = vunpack.c.l.b16 %v214
        %v1471 = vunpack.c.l.b16 %v215
        %v1472 = vunpack.c.l.b16 %v216
        %v1473 = vunpack.c.l.b16 %v217
        %v1474 = vunpack.c.l.b16 %v218
        %v1475 = vunpack.c.l.b16 %v219
        %v1476 = vunpack.c.l.b16 %v220
        %v1477 = vunpack.c.l.b16 %v221
        %v1478 = vunpack.c.l.b16 %v222
        %v1479 = vunpack.c.l.b16 %v223
        %v1480 = vunpack.c.l.b16 %v224
        %v1481 = vunpack.c.l.b16 %v225
        %v1482 = vunpack.c.l.b16 %v226
        %v1483 = vunpack.c.l.b16 %v227
        %v1484 = vunpack.c.l.b16 %v228
        %v1485 = vunpack.c.l.b16 %v229
        %v1486 = vunpack.c.l.b16 %v230
        %v1487 = vunpack.c.l.b16 %v231
        %v1488 = vunpack.c.l.b16 %v232
        %v1489 = vunpack.c.l.b16 %v233
        %v1490 = vunpack.c.l.b16 %v234
        %v1491 = vunpack.c.l.b16 %v235
        %v1492 = vunpack.c.l.b16 %v236
        %v1493 = vunpack.c.l.b16 %v237
        %v1494 = vunpack.c.l.b16 %v238
        %v1495 = vunpack.c.l.b16 %v239
        %v1496 = vunpack.c.l.b16 %v240
        %v1497 = vunpack.c.l.b16 %v241
        %v1498 = vunpack.c.l.b16 %v242
        %v1499 = vunpack.c.l.b16 %v243
        %v1500 = vunpack.c.l.b16 %v244
        %v1501 = vunpack.c.l.b16 %v245
        %v1502 = vunpack.c.l.b16 %v246
        %v1503 = vunpack.c.l.b16 %v247
        %v1504 = vunpack.c.l.b16 %v248
        %v1505 = vunpack.c.l.b16 %v249
        %v1506 = vunpack.c.l.b16 %v250
        %v1507 = vunpack.c.l.b16 %v251
        %v1508 = vunpack.c.l.b16 %v252
        %v1509 = vunpack.c.l.b16 %v253
        %v1510 = vunpack.c.l.b16 %v254
        %v1511 = vunpack.c.l.b16 %v255
        %v1512 = vunpack.c.l.b16 %v256
        %v1513 = vunpack.c.l.b16 %v257
        %v1514 = vunpack.c.l.b16 %v258
        %v1515 = vunpack.c.l.b16 %v259
        %v1516 = vunpack.c.l.b16 %v260
        %v1517 = vunpack.c.l.b16 %v261
        %v1518 = vunpack.c.l.b16 %v262
        %v1519 = vunpack.c.l.b16 %v263
        %v1520 = vunpack.c.l.b16 %v264
        %v1521 = vunpack.c.l.b16 %v265
        %v1522 = vunpack.c.l.b16 %v266
        %v1523 = vunpack.c.l.b16 %v267
        %v1524 = vunpack.c.l.b16 %v268
        %v1525 = vunpack.c.l.b16 %v269
        %v1526 = vunpack.c.l.b16 %v270
        %v1527 = vunpack.c.l.b16 %v271
        %v1528 = vunpack.c.l.b16 %v272
        %v1529 = vunpack.c.l.b16 %v273
        %v1530 = vunpack.c.l.b16 %v274
        %v1531 = vunpack.c.l.b16 %v275
        %v1532 = vunpack.c.l.b16 %v276
        %v1533 = vunpack.c.l.b16 %v277
        %v1534 = vunpack.c.l.b16 %v278
        %v1535 = vunpack.c.l.b16 %v279
        %v1536 = vunpack.c.l.b16 %v280
        %v1537 = vunpack.c.l.b16 %v281
        %v1538 = vunpack.c.l.b16 %v282
        %v1539 = vunpack.c.l.b16 %v283
        %v1540 = vunpack.c.l.b16 %v284
        %v1541 = vunpack.c.l.b16 %v285
        %v1542 = vunpack.c.l.b16 %v286
        %v1543 = vunpack.c.l.b16 %v287
        %v1544 = vunpack.c.l.b16 %v288
        %v1545 = vunpack.c.l.b16 %v289
        %v1546 = vunpack.c.l.b16 %v290
        %v1547 = vunpack.c.l.b16 %v291
        %v1548 = vunpack.c.l.b16 %v292
        %v1549 = vunpack.c.l.b16 %v293
        %v1550 = vunpack.c.l.b16 %v294
        %v1551 = vunpack.c.l.b16 %v295
        %v1552 = vunpack.c.l.b16 %v296
        %v1553 = vunpack.c.l.b16 %v297
        %v1554 = vunpack.c.l.b16 %v298
        %v1555 = vunpack.c.l.b16 %v299
        %v1556 = vunpack.c.l.b16 %v300
        %v1557 = vunpack.c.l.b16 %v301
        %v1558 = vunpack.c.l.b16 %v302
        %v1559 = vunpack.c.l.b16 %v303
        %v1560 = vunpack.c.l.b16 %v304
        %v1561 = vunpack.c.l.b16 %v305
        %v1562 = vunpack.c.l.b16 %v306
        %v1563 = vunpack.c.l.b16 %v307
        %v1564 = vunpack.c.l.b16 %v308
        %v1565 = vunpack.c.l.b16 %v309
        %v1566 = vunpack.c.l.b16 %v310
        %v1567 = vunpack.c.l.b16 %v311
        %v1568 = vunpack.c.l.b16 %v312
        %v1569 = vunpack.c.l.b16 %v313
        %v1570 = vunpack.c.l.b16 %v314
        %v1571 = vunpack.c.l.b16 %v315
        %v1572 = vunpack.c.l.b16 %v316
        %v1573 = vunpack.c.l.b16 %v317
        %v1574 = vunpack.c.l.b16 %v318
        %v1575 = vunpack.c.l.b16 %v319
        %v1576 = vunpack.c.l.b16 %v320
        %v1577 = vunpack.c.l.b16 %v321
        %v1578 = vunpack.c.l.b16 %v322
        %v1579 = vunpack.c.l.b16 %v323
        %v1580 = vunpack.c.l.b16 %v324
        %v1581 = vunpack.c.l.b16 %v325
        %v1582 = vunpack.c.l.b16 %v326
        %v1583 = vunpack.c.l.b16 %v327
        %v1584 = vunpack.c.l.b16 %v328
        %v1585 = vunpack.c.l.b16 %v329
        %v1586 = vunpack.c.l.b16 %v330
        %v1587 = vunpack.c.l.b16 %v331
        %v1588 = vunpack.c.l.b16 %v332
        %v1589 = vunpack.c.l.b16 %v333
        %v1590 = vunpack.c.l.b16 %v334
        %v1591 = vunpack.c.l.b16 %v335
        %v1592 = vunpack.c.l.b16 %v336
        %v1593 = vunpack.c.l.b16 %v337
        %v1594 = vunpack.c.l.b16 %v338
        %v1595 = vunpack.c.l.b16 %v339
        %v1596 = vunpack.c.l.b16 %v340
        %v1597 = vunpack.c.l.b16 %v341
        %v1598 = vunpack.c.l.b16 %v342
        %v1599 = vunpack.c.l.b16 %v343
        %v1600 = vunpack.c.l.b16 %v344
        %v1601 = vunpack.c.l.b16 %v345
        %v1602 = vunpack.c.l.b16 %v346
        %v1603 = vunpack.c.l.b16 %v347
        %v1604 = vunpack.c.l.b16 %v348
        %v1605 = vunpack.c.l.b16 %v349
        %v1606 = vunpack.c.l.b16 %v350
        %v1607 = vunpack.c.l.b16 %v351
        %v1608 = vunpack.c.l.b16 %v352
        %v1609 = vunpack.c.l.b16 %v353
        %v1610 = vunpack.c.l.b16 %v354
        %v1611 = vunpack.c.l.b16 %v355
        %v1612 = vunpack.c.l.b16 %v356
        %v1613 = vunpack.c.l.b16 %v357
        %v1614 = vunpack.c.l.b16 %v358
        %v1615 = vunpack.c.l.b16 %v359
        %v1616 = vunpack.c.l.b16 %v360
        %v1617 = vunpack.c.l.b16 %v361
        %v1618 = vunpack.c.l.b16 %v362
        %v1619 = vunpack.c.l.b16 %v363
        %v1620 = vunpack.c.l.b16 %v364
        %v1621 = vunpack.c.l.b16 %v365
        %v1622 = vunpack.c.l.b16 %v366
        %v1623 = vunpack.c.l.b16 %v367
        %v1624 = vunpack.c.l.b16 %v368
        %v1625 = vunpack.c.l.b16 %v369
        %v1626 = vunpack.c.l.b16 %v370
        %v1627 = vunpack.c.l.b16 %v371
        %v1628 = vunpack.c.l.b16 %v372
        %v1629 = vunpack.c.l.b16 %v373
        %v1630 = vunpack.c.l.b16 %v374
        %v1631 = vunpack.c.l.b16 %v375
        %v1632 = vunpack.c.l.b16 %v376
        %v1633 = vunpack.c.l.b16 %v377
        %v1634 = vunpack.c.l.b16 %v378
        %v1635 = vunpack.c.l.b16 %v379
        %v1636 = vunpack.c.l.b16 %v380
        %v1637 = vunpack.c.l.b16 %v381
        %v1638 = vunpack.c.l.b16 %v382
        %v1639 = vunpack.c.l.b16 %v383
        %v1640 = vunpack.c.l.b16 %v384
        %v1641 = vunpack.c.l.b16 %v385
        %v1642 = vunpack.c.l.b16 %v386
        %v1643 = vunpack.c.l.b16 %v387
        %v1644 = vunpack.c.l.b16 %v388
        %v1645 = vunpack.c.l.b16 %v389
        %v1646 = vunpack.c.l.b16 %v390
        %v1647 = vunpack.c.l.b16 %v391
        %v1648 = vunpack.c.l.b16 %v392
        %v1649 = vunpack.c.l.b16 %v393
        %v1650 = vunpack.c.l.b16 %v394
        %v1651 = vunpack.c.l.b16 %v395
        %v1652 = vunpack.c.l.b16 %v396
        %v1653 = vunpack.c.l.b16 %v397
        %v1654 = vunpack.c.l.b16 %v398
        %v1655 = vunpack.c.l.b16 %v399
        %v1656 = vunpack.c.l.b16 %v400
        %v1657 = vunpack.c.l.b16 %v401
        %v1658 = vunpack.c.l.b16 %v402
        %v1659 = vunpack.c.l.b16 %v403
        %v1660 = vunpack.c.l.b16 %v404
        %v1661 = vunpack.c.l.b16 %v405
        %v1662 = vunpack.c.l.b16 %v406
        %v1663 = vunpack.c.l.b16 %v407
        %v1664 = vunpack.c.l.b16 %v408
        %v1665 = vunpack.c.l.b16 %v409
        %v1666 = vunpack.c.l.b16 %v410
        %v1667 = vunpack.c.l.b16 %v411
        %v1668 = vunpack.c.l.b16 %v412
        %v1669 = vunpack.c.l.b16 %v413
        %v1670 = vunpack.c.l.b16 %v414
        %v1671 = vunpack.c.l.b16 %v415
        %v1672 = vunpack.c.l.b16 %v416
        %v1673 = vunpack.c.l.b16 %v417
        %v1674 = vunpack.c.l.b16 %v418
        %v1675 = vunpack.c.l.b16 %v419
        %v1676 = vunpack.c.l.b16 %v420
        %v1677 = vunpack.c.l.b16 %v421
        %v1678 = vunpack.c.l.b16 %v422
        %v1679 = vunpack.c.l.b16 %v423
        %v1680 = vunpack.c.l.b16 %v424
        %v1681 = vunpack.c.l.b16 %v425
        %v1682 = vunpack.c.l.b16 %v426
        %v1683 = vunpack.c.l.b16 %v427
        %v1684 = vunpack.c.l.b16 %v428
        %v1685 = vunpack.c.l.b16 %v429
        %v1686 = vunpack.c.l.b16 %v430
        %v1687 = vunpack.c.l.b16 %v431
        %v1688 = vunpack.c.l.b16 %v432
        %v1689 = vunpack.c.l.b16 %v433
        %v1690 = vunpack.c.l.b16 %v434
        %v1691 = vunpack.c.l.b16 %v435
        %v1692 = vunpack.c.l.b16 %v436
        %v1693 = vunpack.c.l.b16 %v437
        %v1694 = vunpack.c.l.b16 %v438
        %v1695 = vunpack.c.l.b16 %v439
        %v1696 = vunpack.c.l.b16 %v440
        %v1697 = vunpack.c.l.b16 %v441
        %v1698 = vunpack.c.l.b16 %v442
        %v1699 = vunpack.c.l.b16 %v443
        %v1700 = vunpack.c.l.b16 %v444
        %v1701 = vunpack.c.l.b16 %v445
        %v1702 = vunpack.c.l.b16 %v446
        %v1703 = vunpack.c.l.b16 %v447
        %v1704 = vunpack.c.l.b16 %v448
        %v1705 = vunpack.c.l.b16 %v449
        %v1706 = vunpack.c.l.b16 %v450
        %v1707 = vunpack.c.l.b16 %v451
        %v1708 = vunpack.c.l.b16 %v452
        %v1709 = vunpack.c.l.b16 %v453
        %v1710 = vunpack.c.l.b16 %v454
        %v1711 = vunpack.c.l.b16 %v455
        %v1712 = vunpack.c.l.b16 %v456
        %v1713 = vunpack.c.l.b16 %v457
        %v1714 = vunpack.c.l.b16 %v458
        %v1715 = vunpack.c.l.b16 %v459
        %v1716 = vunpack.c.l.b16 %v460
        %v1717 = vunpack.c.l.b16 %v461
        %v1718 = vunpack.c.l.b16 %v462
        %v1719 = vunpack.c.l.b16 %v463
        %v1720 = vunpack.c.l.b16 %v464
        %v1721 = vunpack.c.l.b16 %v465
        %v1722 = vunpack.c.l.b16 %v466
        %v1723 = vunpack.c.l.b16 %v467
        %v1724 = vunpack.c.l.b16 %v468
        %v1725 = vunpack.c.l.b16 %v469
        %v1726 = vunpack.c.l.b16 %v470
        %v1727 = vunpack.c.l.b16 %v471
        %v1728 = vunpack.c.l.b16 %v472
        %v1729 = vunpack.c.l.b16 %v473
        %v1730 = vunpack.c.l.b16 %v474
        %v1731 = vunpack.c.l.b16 %v475
        %v1732 = vunpack.c.l.b16 %v476
        %v1733 = vunpack.c.l.b16 %v477
        %v1734 = vunpack.c.l.b16 %v478
        %v1735 = vunpack.c.l.b16 %v479
        %v1736 = vunpack.c.l.b16 %v480
        %v1737 = vunpack.c.l.b16 %v481
        %v1738 = vunpack.c.l.b16 %v482
        %v1739 = vunpack.c.l.b16 %v483
        %v1740 = vunpack.c.l.b16 %v484
        %v1741 = vunpack.c.l.b16 %v485
        %v1742 = vunpack.c.l.b16 %v486
        %v1743 = vunpack.c.l.b16 %v487
        %v1744 = vunpack.c.l.b16 %v488
        %v1745 = vunpack.c.l.b16 %v489
        %v1746 = vunpack.c.l.b16 %v490
        %v1747 = vunpack.c.l.b16 %v491
        %v1748 = vunpack.c.l.b16 %v492
        %v1749 = vunpack.c.l.b16 %v493
        %v1750 = vunpack.c.l.b16 %v494
        %v1751 = vunpack.c.l.b16 %v495
        %v1752 = vunpack.c.l.b16 %v496
        %v1753 = vunpack.c.l.b16 %v497
        %v1754 = vunpack.c.l.b16 %v498
        %v1755 = vunpack.c.l.b16 %v499
        %v1756 = vunpack.c.l.b16 %v500
        %v1757 = vunpack.c.l.b16 %v501
        %v1758 = vunpack.c.l.b16 %v502
        %v1759 = vunpack.c.l.b16 %v503
        %v1760 = vunpack.c.l.b16 %v504
        %v1761 = vunpack.c.l.b16 %v505
        %v1762 = vunpack.c.l.b16 %v506
        %v1763 = vunpack.c.l.b16 %v507
        %v1764 = vunpack.c.l.b16 %v508
        %v1765 = vunpack.c.l.b16 %v509
        %v1766 = vunpack.c.l.b16 %v510
        %v1767 = vunpack.c.l.b16 %v511
        %v1768 = vunpack.c.l.b16 %v512
        %v1769 = vunpack.c.l.b16 %v513
        %v1770 = vunpack.c.l.b16 %v514
        %v1771 = vunpack.c.l.b16 %v515
        %v1772 = vunpack.c.l.b16 %v516
        %v1773 = vunpack.c.l.b16 %v517
        %v1774 = vunpack.c.l.b16 %v518
        %v1775 = vunpack.c.l.b16 %v519
        %v1776 = vunpack.c.l.b16 %v520
        %v1777 = vunpack.c.l.b16 %v521
        %v1778 = vunpack.c.l.b16 %v522
        %v1779 = vunpack.c.l.b16 %v523
        %v1780 = vunpack.c.l.b16 %v524
        %v1781 = vunpack.c.l.b16 %v525
        %v1782 = vunpack.c.l.b16 %v526
        %v1783 = vunpack.c.l.b16 %v527
        %v1784 = vunpack.c.l.b16 %v528
        %v1785 = vunpack.c.l.b16 %v529
        %v1786 = vunpack.c.l.b16 %v530
        %v1787 = vunpack.c.l.b16 %v531
        %v1788 = vunpack.c.l.b16 %v532
        %v1789 = vunpack.c.l.b16 %v533
        %v1790 = vunpack.c.l.b16 %v534
        %v1791 = vunpack.c.l.b16 %v535
        %v1792 = vunpack.c.l.b16 %v536
        %v1793 = vunpack.c.l.b16 %v537
        %v1794 = vunpack.c.l.b16 %v538
        %v1795 = vunpack.c.l.b16 %v539
        %v1796 = vunpack.c.l.b16 %v540
        %v1797 = vunpack.c.l.b16 %v541
        %v1798 = vunpack.c.l.b16 %v542
        %v1799 = vunpack.c.l.b16 %v543
        %v1800 = vunpack.c.l.b16 %v544
        %v1801 = vunpack.c.l.b16 %v545
        %v1802 = vunpack.c.l.b16 %v546
        %v1803 = vunpack.c.l.b16 %v547
        %v1804 = vunpack.c.l.b16 %v548
        %v1805 = vunpack.c.l.b16 %v549
        %v1806 = vunpack.c.l.b16 %v550
        %v1807 = vunpack.c.l.b16 %v551
        %v1808 = vunpack.c.l.b16 %v552
        %v1809 = vunpack.c.l.b16 %v553
        %v1810 = vunpack.c.l.b16 %v554
        %v1811 = vunpack.c.l.b16 %v555
        %v1812 = vunpack.c.l.b16 %v556
        %v1813 = vunpack.c.l.b16 %v557
        %v1814 = vunpack.c.l.b16 %v558
        %v1815 = vunpack.c.l.b16 %v559
        %v1816 = vunpack.c.l.b16 %v560
        %v1817 = vunpack.c.l.b16 %v561
        %v1818 = vunpack.c.l.b16 %v562
        %v1819 = vunpack.c.l.b16 %v563
        %v1820 = vunpack.c.l.b16 %v564
        %v1821 = vunpack.c.l.b16 %v565
        %v1822 = vunpack.c.l.b16 %v566
        %v1823 = vunpack.c.l.b16 %v567
        %v1824 = vunpack.c.l.b16 %v568
        %v1825 = vunpack.c.l.b16 %v569
        %v1826 = vunpack.c.l.b16 %v570
        %v1827 = vunpack.c.l.b16 %v571
        %v1828 = vunpack.c.l.b16 %v572
        %v1829 = vunpack.c.l.b16 %v573
        %v1830 = vunpack.c.l.b16 %v574
        %v1831 = vunpack.c.l.b16 %v575
        %v1832 = vunpack.c.l.b16 %v576
        %v1833 = vunpack.c.l.b16 %v577
        %v1834 = vunpack.c.l.b16 %v578
        %v1835 = vunpack.c.l.b16 %v579
        %v1836 = vunpack.c.l.b16 %v580
        %v1837 = vunpack.c.l.b16 %v581
        %v1838 = vunpack.c.l.b16 %v582
        %v1839 = vunpack.c.l.b16 %v583
        %v1840 = vunpack.c.l.b16 %v584
        %v1841 = vunpack.c.l.b16 %v585
        %v1842 = vunpack.c.l.b16 %v586
        %v1843 = vunpack.c.l.b16 %v587
        %v1844 = vunpack.c.l.b16 %v588
        %v1845 = vunpack.c.l.b16 %v589
        %v1846 = vunpack.c.l.b16 %v590
        %v1847 = vunpack.c.l.b16 %v591
        %v1848 = vunpack.c.l.b16 %v592
        %v1849 = vunpack.c.l.b16 %v593
        %v1850 = vunpack.c.l.b16 %v594
        %v1851 = vunpack.c.l.b16 %v595
        %v1852 = vunpack.c.l.b16 %v596
        %v1853 = vunpack.c.l.b16 %v597
        %v1854 = vunpack.c.l.b16 %v598
        %v1855 = vunpack.c.l.b16 %v599
        %v1856 = vunpack.c.l.b16 %v600
        %v1857 = vunpack.c.l.b16 %v601
        %v1858 = vunpack.c.l.b16 %v602
        %v1859 = vunpack.c.l.b16 %v603
        %v1860 = vunpack.c.l.b16 %v604
        %v1861 = vunpack.c.l.b16 %v605
        %v1862 = vunpack.c.l.b16 %v606
        %v1863 = vunpack.c.l.b16 %v607
        %v1864 = vunpack.c.l.b16 %v608
        %v1865 = vunpack.c.l.b16 %v609
        %v1866 = vunpack.c.l.b16 %v610
        %v1867 = vunpack.c.l.b16 %v611
        %v1868 = vunpack.c.l.b16 %v612
        %v1869 = vunpack.c.l.b16 %v613
        %v1870 = vunpack.c.l.b16 %v614
        %v1871 = vunpack.c.l.b16 %v615
        %v1872 = vunpack.c.l.b16 %v616
        %v1873 = vunpack.c.l.b16 %v617
        %v1874 = vunpack.c.l.b16 %v618
        %v1875 = vunpack.c.l.b16 %v619
        %v1876 = vunpack.c.l.b16 %v620
        %v1877 = vunpack.c.l.b16 %v621
        %v1878 = vunpack.c.l.b16 %v622
        %v1879 = vunpack.c.l.b16 %v623
        %v1880 = vunpack.c.l.b16 %v624
        %v1881 = vunpack.c.l.b16 %v625
        %v1882 = vunpack.c.l.b16 %v626
        %v1883 = vunpack.c.l.b16 %v627
        %v1884 = vunpack.c.l.b16 %v628
        %v1885 = vunpack.c.l.b16 %v629
        %v1886 = vunpack.c.l.b16 %v630
        %v1887 = vunpack.c.l.b16 %v631
        %v1888 = vunpack.c.l.b16 %v632
        %v1889 = vunpack.c.l.b16 %v633
        %v1890 = vunpack.c.l.b16 %v634
        %v1891 = vunpack.c.l.b16 %v635
        %v1892 = vunpack.c.l.b16 %v636
        %v1893 = vunpack.c.l.b16 %v637
        %v1894 = vunpack.c.l.b16 %v638
        %v1895 = vunpack.c.l.b16 %v639
        %v1896 = vunpack.c.l.b16 %v640
        %v1897 = vunpack.c.l.b16 %v641
        %v1898 = vunpack.c.l.b16 %v642
        %v1899 = vunpack.c.l.b16 %v643
        %v1900 = vunpack.c.l.b16 %v644
        %v1901 = vunpack.c.l.b16 %v645
        %v1902 = vunpack.c.l.b16 %v646
        %v1903 = vunpack.c.l.b16 %v647
        %v1904 = vunpack.c.l.b16 %v648
        %v1905 = vunpack.c.l.b16 %v649
        %v1906 = vunpack.c.l.b16 %v650
        %v1907 = vunpack.c.l.b16 %v651
        %v1908 = vunpack.c.l.b16 %v652
        %v1909 = vunpack.c.l.b16 %v653
        %v1910 = vunpack.c.l.b16 %v654
        %v1911 = vunpack.c.l.b16 %v655
        %v1912 = vunpack.c.l.b16 %v656
        %v1913 = vunpack.c.l.b16 %v657
        %v1914 = vunpack.c.l.b16 %v658
        %v1915 = vunpack.c.l.b16 %v659
        %v1916 = vunpack.c.l.b16 %v660
        %v1917 = vunpack.c.l.b16 %v661
        %v1918 = vunpack.c.l.b16 %v662
        %v1919 = vunpack.c.l.b16 %v663
        %v1920 = vunpack.c.l.b16 %v664
        %v1921 = vunpack.c.l.b16 %v665
        %v1922 = vunpack.c.l.b16 %v666
        %v1923 = vunpack.c.l.b16 %v667
        %v1924 = vunpack.c.l.b16 %v668
        %v1925 = vunpack.c.l.b16 %v669
        %v1926 = vunpack.c.l.b16 %v670
        %v1927 = vunpack.c.l.b16 %v671
        %v1928 = vunpack.c.l.b16 %v672
        %v1929 = vunpack.c.l.b16 %v673
        %v1930 = vunpack.c.l.b16 %v674
        %v1931 = vunpack.c.l.b16 %v675
        %v1932 = vunpack.c.l.b16 %v676
        %v1933 = vunpack.c.l.b16 %v677
        %v1934 = vunpack.c.l.b16 %v678
        %v1935 = vunpack.c.l.b16 %v679
        %v1936 = vunpack.c.l.b16 %v680
        %v1937 = vunpack.c.l.b16 %v681
        %v1938 = vunpack.c.l.b16 %v682
        %v1939 = vunpack.c.l.b16 %v683
        %v1940 = vunpack.c.l.b16 %v684
        %v1941 = vunpack.c.l.b16 %v685
        %v1942 = vunpack.c.l.b16 %v686
        %v1943 = vunpack.c.l.b16 %v687
        %v1944 = vunpack.c.l.b16 %v688
        %v1945 = vunpack.c.l.b16 %v689
        %v1946 = vunpack.c.l.b16 %v690
        %v1947 = vunpack.c.l.b16 %v691
        %v1948 = vunpack.c.l.b16 %v692
        %v1949 = vunpack.c.l.b16 %v693
        %v1950 = vunpack.c.l.b16 %v694
        %v1951 = vunpack.c.l.b16 %v695
        %v1952 = vunpack.c.l.b16 %v696
        %v1953 = vunpack.c.l.b16 %v697
        %v1954 = vunpack.c.l.b16 %v698
        %v1955 = vunpack.c.l.b16 %v699
        %v1956 = vunpack.c.l.b16 %v700
        %v1957 = vunpack.c.l.b16 %v701
        %v1958 = vunpack.c.l.b16 %v702
        %v1959 = vunpack.c.l.b16 %v703
        %v1960 = vunpack.c.l.b16 %v704
        %v1961 = vunpack.c.l.b16 %v705
        %v1962 = vunpack.c.l.b16 %v706
        %v1963 = vunpack.c.l.b16 %v707
        %v1964 = vpack.c.b16 %v1453, %v1452
        %v1965 = vpack.c.b16 %v1455, %v1454
        %v1966 = vpack.c.b16 %v1457, %v1456
        %v1967 = vpack.c.b16 %v1459, %v1458
        %v1968 = vpack.c.b16 %v1461, %v1460
        %v1969 = vpack.c.b16 %v1463, %v1462
        %v1970 = vpack.c.b16 %v1465, %v1464
        %v1971 = vpack.c.b16 %v1467, %v1466
        %v1972 = vpack.c.b16 %v1469, %v1468
        %v1973 = vpack.c.b16 %v1471, %v1470
        %v1974 = vpack.c.b16 %v1473, %v1472
        %v1975 = vpack.c.b16 %v1475, %v1474
        %v1976 = vpack.c.b16 %v1477, %v1476
        %v1977 = vpack.c.b16 %v1479, %v1478
        %v1978 = vpack.c.b16 %v1481, %v1480
        %v1979 = vpack.c.b16 %v1483, %v1482
        %v1980 = vpack.c.b16 %v1485, %v1484
        %v1981 = vpack.c.b16 %v1487, %v1486
        %v1982 = vpack.c.b16 %v1489, %v1488
        %v1983 = vpack.c.b16 %v1491, %v1490
        %v1984 = vpack.c.b16 %v1493, %v1492
        %v1985 = vpack.c.b16 %v1495, %v1494
        %v1986 = vpack.c.b16 %v1497, %v1496
        %v1987 = vpack.c.b16 %v1499, %v1498
        %v1988 = vpack.c.b16 %v1501, %v1500
        %v1989 = vpack.c.b16 %v1503, %v1502
        %v1990 = vpack.c.b16 %v1505, %v1504
        %v1991 = vpack.c.b16 %v1507, %v1506
        %v1992 = vpack.c.b16 %v1509, %v1508
        %v1993 = vpack.c.b16 %v1511, %v1510
        %v1994 = vpack.c.b16 %v1513, %v1512
        %v1995 = vpack.c.b16 %v1515, %v1514
        %v1996 = vpack.c.b16 %v1517, %v1516
        %v1997 = vpack.c.b16 %v1519, %v1518
        %v1998 = vpack.c.b16 %v1521, %v1520
        %v1999 = vpack.c.b16 %v1523, %v1522
        %v2000 = vpack.c.b16 %v1525, %v1524
        %v2001 = vpack.c.b16 %v1527, %v1526
        %v2002 = vpack.c.b16 %v1529, %v1528
        %v2003 = vpack.c.b16 %v1531, %v1530
        %v2004 = vpack.c.b16 %v1533, %v1532
        %v2005 = vpack.c.b16 %v1535, %v1534
        %v2006 = vpack.c.b16 %v1537, %v1536
        %v2007 = vpack.c.b16 %v1539, %v1538
        %v2008 = vpack.c.b16 %v1541, %v1540
        %v2009 = vpack.c.b16 %v1543, %v1542
        %v2010 = vpack.c.b16 %v1545, %v1544
        %v2011 = vpack.c.b16 %v1547, %v1546
        %v2012 = vpack.c.b16 %v1549, %v1548
        %v2013 = vpack.c.b16 %v1551, %v1550
        %v2014 = vpack.c.b16 %v1553, %v1552
        %v2015 = vpack.c.b16 %v1555, %v1554
        %v2016 = vpack.c.b16 %v1557, %v1556
        %v2017 = vpack.c.b16 %v1559, %v1558
        %v2018 = vpack.c.b16 %v1561, %v1560
        %v2019 = vpack.c.b16 %v1563, %v1562
        %v2020 = vpack.c.b16 %v1565, %v1564
        %v2021 = vpack.c.b16 %v1567, %v1566
        %v2022 = vpack.c.b16 %v1569, %v1568
        %v2023 = vpack.c.b16 %v1571, %v1570
        %v2024 = vpack.c.b16 %v1573, %v1572
        %v2025 = vpack.c.b16 %v1575, %v1574
        %v2026 = vpack.c.b16 %v1577, %v1576
        %v2027 = vpack.c.b16 %v1579, %v1578
        %v2028 = vpack.c.b16 %v1581, %v1580
        %v2029 = vpack.c.b16 %v1583, %v1582
        %v2030 = vpack.c.b16 %v1585, %v1584
        %v2031 = vpack.c.b16 %v1587, %v1586
        %v2032 = vpack.c.b16 %v1589, %v1588
        %v2033 = vpack.c.b16 %v1591, %v1590
        %v2034 = vpack.c.b16 %v1593, %v1592
        %v2035 = vpack.c.b16 %v1595, %v1594
        %v2036 = vpack.c.b16 %v1597, %v1596
        %v2037 = vpack.c.b16 %v1599, %v1598
        %v2038 = vpack.c.b16 %v1601, %v1600
        %v2039 = vpack.c.b16 %v1603, %v1602
        %v2040 = vpack.c.b16 %v1605, %v1604
        %v2041 = vpack.c.b16 %v1607, %v1606
        %v2042 = vpack.c.b16 %v1609, %v1608
        %v2043 = vpack.c.b16 %v1611, %v1610
        %v2044 = vpack.c.b16 %v1613, %v1612
        %v2045 = vpack.c.b16 %v1615, %v1614
        %v2046 = vpack.c.b16 %v1617, %v1616
        %v2047 = vpack.c.b16 %v1619, %v1618
        %v2048 = vpack.c.b16 %v1621, %v1620
        %v2049 = vpack.c.b16 %v1623, %v1622
        %v2050 = vpack.c.b16 %v1625, %v1624
        %v2051 = vpack.c.b16 %v1627, %v1626
        %v2052 = vpack.c.b16 %v1629, %v1628
        %v2053 = vpack.c.b16 %v1631, %v1630
        %v2054 = vpack.c.b16 %v1633, %v1632
        %v2055 = vpack.c.b16 %v1635, %v1634
        %v2056 = vpack.c.b16 %v1637, %v1636
        %v2057 = vpack.c.b16 %v1639, %v1638
        %v2058 = vpack.c.b16 %v1641, %v1640
        %v2059 = vpack.c.b16 %v1643, %v1642
        %v2060 = vpack.c.b16 %v1645, %v1644
        %v2061 = vpack.c.b16 %v1647, %v1646
        %v2062 = vpack.c.b16 %v1649, %v1648
        %v2063 = vpack.c.b16 %v1651, %v1650
        %v2064 = vpack.c.b16 %v1653, %v1652
        %v2065 = vpack.c.b16 %v1655, %v1654
        %v2066 = vpack.c.b16 %v1657, %v1656
        %v2067 = vpack.c.b16 %v1659, %v1658
        %v2068 = vpack.c.b16 %v1661, %v1660
        %v2069 = vpack.c.b16 %v1663, %v1662
        %v2070 = vpack.c.b16 %v1665, %v1664
        %v2071 = vpack.c.b16 %v1667, %v1666
        %v2072 = vpack.c.b16 %v1669, %v1668
        %v2073 = vpack.c.b16 %v1671, %v1670
        %v2074 = vpack.c.b16 %v1673, %v1672
        %v2075 = vpack.c.b16 %v1675, %v1674
        %v2076 = vpack.c.b16 %v1677, %v1676
        %v2077 = vpack.c.b16 %v1679, %v1678
        %v2078 = vpack.c.b16 %v1681, %v1680
        %v2079 = vpack.c.b16 %v1683, %v1682
        %v2080 = vpack.c.b16 %v1685, %v1684
        %v2081 = vpack.c.b16 %v1687, %v1686
        %v2082 = vpack.c.b16 %v1689, %v1688
        %v2083 = vpack.c.b16 %v1691, %v1690
        %v2084 = vpack.c.b16 %v1693, %v1692
        %v2085 = vpack.c.b16 %v1695, %v1694
        %v2086 = vpack.c.b16 %v1697, %v1696
        %v2087 = vpack.c.b16 %v1699, %v1698
        %v2088 = vpack.c.b16 %v1701, %v1700
        %v2089 = vpack.c.b16 %v1703, %v1702
        %v2090 = vpack.c.b16 %v1705, %v1704
        %v2091 = vpack.c.b16 %v1707, %v1706
        %v2092 = vpack.c.b16 %v1709, %v1708
        %v2093 = vpack.c.b16 %v1711, %v1710
        %v2094 = vpack.c.b16 %v1713, %v1712
        %v2095 = vpack.c.b16 %v1715, %v1714
        %v2096 = vpack.c.b16 %v1717, %v1716
        %v2097 = vpack.c.b16 %v1719, %v1718
        %v2098 = vpack.c.b16 %v1721, %v1720
        %v2099 = vpack.c.b16 %v1723, %v1722
        %v2100 = vpack.c.b16 %v1725, %v1724
        %v2101 = vpack.c.b16 %v1727, %v1726
        %v2102 = vpack.c.b16 %v1729, %v1728
        %v2103 = vpack.c.b16 %v1731, %v1730
        %v2104 = vpack.c.b16 %v1733, %v1732
        %v2105 = vpack.c.b16 %v1735, %v1734
        %v2106 = vpack.c.b16 %v1737, %v1736
        %v2107 = vpack.c.b16 %v1739, %v1738
        %v2108 = vpack.c.b16 %v1741, %v1740
        %v2109 = vpack.c.b16 %v1743, %v1742
        %v2110 = vpack.c.b16 %v1745, %v1744
        %v2111 = vpack.c.b16 %v1747, %v1746
        %v2112 = vpack.c.b16 %v1749, %v1748
        %v2113 = vpack.c.b16 %v1751, %v1750
        %v2114 = vpack.c.b16 %v1753, %v1752
        %v2115 = vpack.c.b16 %v1755, %v1754
        %v2116 = vpack.c.b16 %v1757, %v1756
        %v2117 = vpack.c.b16 %v1759, %v1758
        %v2118 = vpack.c.b16 %v1761, %v1760
        %v2119 = vpack.c.b16 %v1763, %v1762
        %v2120 = vpack.c.b16 %v1765, %v1764
        %v2121 = vpack.c.b16 %v1767, %v1766
        %v2122 = vpack.c.b16 %v1769, %v1768
        %v2123 = vpack.c.b16 %v1771, %v1770
        %v2124 = vpack.c.b16 %v1773, %v1772
        %v2125 = vpack.c.b16 %v1775, %v1774
        %v2126 = vpack.c.b16 %v1777, %v1776
        %v2127 = vpack.c.b16 %v1779, %v1778
        %v2128 = vpack.c.b16 %v1781, %v1780
        %v2129 = vpack.c.b16 %v1783, %v1782
        %v2130 = vpack.c.b16 %v1785, %v1784
        %v2131 = vpack.c.b16 %v1787, %v1786
        %v2132 = vpack.c.b16 %v1789, %v1788
        %v2133 = vpack.c.b16 %v1791, %v1790
        %v2134 = vpack.c.b16 %v1793, %v1792
        %v2135 = vpack.c.b16 %v1795, %v1794
        %v2136 = vpack.c.b16 %v1797, %v1796
        %v2137 = vpack.c.b16 %v1799, %v1798
        %v2138 = vpack.c.b16 %v1801, %v1800
        %v2139 = vpack.c.b16 %v1803, %v1802
        %v2140 = vpack.c.b16 %v1805, %v1804
        %v2141 = vpack.c.b16 %v1807, %v1806
        %v2142 = vpack.c.b16 %v1809, %v1808
        %v2143 = vpack.c.b16 %v1811, %v1810
        %v2144 = vpack.c.b16 %v1813, %v1812
        %v2145 = vpack.c.b16 %v1815, %v1814
        %v2146 = vpack.c.b16 %v1817, %v1816
        %v2147 = vpack.c.b16 %v1819, %v1818
        %v2148 = vpack.c.b16 %v1821, %v1820
        %v2149 = vpack.c.b16 %v1823, %v1822
        %v2150 = vpack.c.b16 %v1825, %v1824
        %v2151 = vpack.c.b16 %v1827, %v1826
        %v2152 = vpack.c.b16 %v1829, %v1828
        %v2153 = vpack.c.b16 %v1831, %v1830
        %v2154 = vpack.c.b16 %v1833, %v1832
        %v2155 = vpack.c.b16 %v1835, %v1834
        %v2156 = vpack.c.b16 %v1837, %v1836
        %v2157 = vpack.c.b16 %v1839, %v1838
        %v2158 = vpack.c.b16 %v1841, %v1840
        %v2159 = vpack.c.b16 %v1843, %v1842
        %v2160 = vpack.c.b16 %v1845, %v1844
        %v2161 = vpack.c.b16 %v1847, %v1846
        %v2162 = vpack.c.b16 %v1849, %v1848
        %v2163 = vpack.c.b16 %v1851, %v1850
        %v2164 = vpack.c.b16 %v1853, %v1852
        %v2165 = vpack.c.b16 %v1855, %v1854
        %v2166 = vpack.c.b16 %v1857, %v1856
        %v2167 = vpack.c.b16 %v1859, %v1858
        %v2168 = vpack.c.b16 %v1861, %v1860
        %v2169 = vpack.c.b16 %v1863, %v1862
        %v2170 = vpack.c.b16 %v1865, %v1864
        %v2171 = vpack.c.b16 %v1867, %v1866
        %v2172 = vpack.c.b16 %v1869, %v1868
        %v2173 = vpack.c.b16 %v1871, %v1870
        %v2174 = vpack.c.b16 %v1873, %v1872
        %v2175 = vpack.c.b16 %v1875, %v1874
        %v2176 = vpack.c.b16 %v1877, %v1876
        %v2177 = vpack.c.b16 %v1879, %v1878
        %v2178 = vpack.c.b16 %v1881, %v1880
        %v2179 = vpack.c.b16 %v1883, %v1882
        %v2180 = vpack.c.b16 %v1885, %v1884
        %v2181 = vpack.c.b16 %v1887, %v1886
        %v2182 = vpack.c.b16 %v1889, %v1888
        %v2183 = vpack.c.b16 %v1891, %v1890
        %v2184 = vpack.c.b16 %v1893, %v1892
        %v2185 = vpack.c.b16 %v1895, %v1894
        %v2186 = vpack.c.b16 %v1897, %v1896
        %v2187 = vpack.c.b16 %v1899, %v1898
        %v2188 = vpack.c.b16 %v1901, %v1900
        %v2189 = vpack.c.b16 %v1903, %v1902
        %v2190 = vpack.c.b16 %v1905, %v1904
        %v2191 = vpack.c.b16 %v1907, %v1906
        %v2192 = vpack.c.b16 %v1909, %v1908
        %v2193 = vpack.c.b16 %v1911, %v1910
        %v2194 = vpack.c.b16 %v1913, %v1912
        %v2195 = vpack.c.b16 %v1915, %v1914
        %v2196 = vpack.c.b16 %v1917, %v1916
        %v2197 = vpack.c.b16 %v1919, %v1918
        %v2198 = vpack.c.b16 %v1921, %v1920
        %v2199 = vpack.c.b16 %v1923, %v1922
        %v2200 = vpack.c.b16 %v1925, %v1924
        %v2201 = vpack.c.b16 %v1927, %v1926
        %v2202 = vpack.c.b16 %v1929, %v1928
        %v2203 = vpack.c.b16 %v1931, %v1930
        %v2204 = vpack.c.b16 %v1933, %v1932
        %v2205 = vpack.c.b16 %v1935, %v1934
        %v2206 = vpack.c.b16 %v1937, %v1936
        %v2207 = vpack.c.b16 %v1939, %v1938
        %v2208 = vpack.c.b16 %v1941, %v1940
        %v2209 = vpack.c.b16 %v1943, %v1942
        %v2210 = vpack.c.b16 %v1945, %v1944
        %v2211 = vpack.c.b16 %v1947, %v1946
        %v2212 = vpack.c.b16 %v1949, %v1948
        %v2213 = vpack.c.b16 %v1951, %v1950
        %v2214 = vpack.c.b16 %v1953, %v1952
        %v2215 = vpack.c.b16 %v1955, %v1954
        %v2216 = vpack.c.b16 %v1957, %v1956
        %v2217 = vpack.c.b16 %v1959, %v1958
        %v2218 = vpack.c.b16 %v1961, %v1960
        %v2219 = vpack.c.b16 %v1963, %v1962
        %2476 = vmatprep.subr.bf16.mxu0 0
        %2477 = vmatpush1.bf16.msra.mxu0 %v1964
        %2478 = vmatprep.subr.bf16.mxu0 0
        %2479 = vmatpush1.bf16.msra.mxu0 %v1965
        %2480 = vmatprep.subr.bf16.mxu0 0
        %2481 = vmatpush1.bf16.msra.mxu0 %v1966
        %2482 = vmatprep.subr.bf16.mxu0 0
        %2483 = vmatpush1.bf16.msra.mxu0 %v1967
        %2484 = vmatprep.subr.bf16.mxu0 0
        %2485 = vmatpush1.bf16.msra.mxu0 %v1968
        %2486 = vmatprep.subr.bf16.mxu0 0
        %2487 = vmatpush1.bf16.msra.mxu0 %v1969
        %2488 = vmatprep.subr.bf16.mxu0 0
        %2489 = vmatpush1.bf16.msra.mxu0 %v1970
        %2490 = vmatprep.subr.bf16.mxu0 0
        %2491 = vmatpush1.bf16.msra.mxu0 %v1971
        %2492 = vmatprep.subr.bf16.mxu0 0
        %2493 = vmatpush1.bf16.msra.mxu0 %v1972
        %2494 = vmatprep.subr.bf16.mxu0 0
        %2495 = vmatpush1.bf16.msra.mxu0 %v1973
        %2496 = vmatprep.subr.bf16.mxu0 0
        %2497 = vmatpush1.bf16.msra.mxu0 %v1974
        %2498 = vmatprep.subr.bf16.mxu0 0
        %2499 = vmatpush1.bf16.msra.mxu0 %v1975
        %2500 = vmatprep.subr.bf16.mxu0 0
        %2501 = vmatpush1.bf16.msra.mxu0 %v1976
        %2502 = vmatprep.subr.bf16.mxu0 0
        %2503 = vmatpush1.bf16.msra.mxu0 %v1977
        %2504 = vmatprep.subr.bf16.mxu0 0
        %2505 = vmatpush1.bf16.msra.mxu0 %v1978
        %2506 = vmatprep.subr.bf16.mxu0 0
        %2507 = vmatpush1.bf16.msra.mxu0 %v1979
        %2508 = vmatprep.mubr.bf16.mxu0 %v749
        %2509 = vmatmul.mubr.bf16.gmra.mrb[0].mxu0 %v735
        %v2510 = vpop.f32.mrb[0].mxu0
        %v2511 = vadd.f32 0.0, %v2510
        %v2512 = vpop.f32.mrb[0].mxu0
        %v2513 = vpop.f32.mrb[0].mxu0
        %v2514 = vpop.f32.mrb[0].mxu0
        %2515 = vdwg.mxu0
        %2516 = vmatprep.subr.bf16.mxu0 0
        %2517 = vmatpush1.bf16.msra.mxu0 %v1980
        %2518 = vmatprep.subr.bf16.mxu0 0
        %2519 = vmatpush1.bf16.msra.mxu0 %v1981
        %2520 = vmatprep.subr.bf16.mxu0 0
        %2521 = vmatpush1.bf16.msra.mxu0 %v1982
        %2522 = vmatprep.subr.bf16.mxu0 0
        %2523 = vmatpush1.bf16.msra.mxu0 %v1983
        %2524 = vmatprep.subr.bf16.mxu0 0
        %2525 = vmatpush1.bf16.msra.mxu0 %v1984
        %2526 = vmatprep.subr.bf16.mxu0 0
        %2527 = vmatpush1.bf16.msra.mxu0 %v1985
        %2528 = vmatprep.subr.bf16.mxu0 0
        %2529 = vmatpush1.bf16.msra.mxu0 %v1986
        %2530 = vmatprep.subr.bf16.mxu0 0
        %2531 = vmatpush1.bf16.msra.mxu0 %v1987
        %2532 = vmatprep.subr.bf16.mxu0 0
        %2533 = vmatpush1.bf16.msra.mxu0 %v1988
        %2534 = vmatprep.subr.bf16.mxu0 0
        %2535 = vmatpush1.bf16.msra.mxu0 %v1989
        %2536 = vmatprep.subr.bf16.mxu0 0
        %2537 = vmatpush1.bf16.msra.mxu0 %v1990
        %2538 = vmatprep.subr.bf16.mxu0 0
        %2539 = vmatpush1.bf16.msra.mxu0 %v1991
        %2540 = vmatprep.subr.bf16.mxu0 0
        %2541 = vmatpush1.bf16.msra.mxu0 %v1992
        %2542 = vmatprep.subr.bf16.mxu0 0
        %2543 = vmatpush1.bf16.msra.mxu0 %v1993
        %2544 = vmatprep.subr.bf16.mxu0 0
        %2545 = vmatpush1.bf16.msra.mxu0 %v1994
        %2546 = vmatprep.subr.bf16.mxu0 0
        %2547 = vmatpush1.bf16.msra.mxu0 %v1995
        %2548 = vmatprep.mubr.bf16.mxu0 %v759
        %2549 = vmatmul.mubr.bf16.gmra.mrb[0].mxu0 %v757
        %v2550 = vpop.f32.mrb[0].mxu0
        %v2551 = vadd.f32 %v2511, %v2550
        %v2552 = vpop.f32.mrb[0].mxu0
        %v2553 = vpop.f32.mrb[0].mxu0
        %v2554 = vpop.f32.mrb[0].mxu0
        %2555 = vdwg.mxu0
        %2556 = vmatprep.subr.bf16.mxu0 0
        %2557 = vmatpush1.bf16.msra.mxu0 %v1996
        %2558 = vmatprep.subr.bf16.mxu0 0
        %2559 = vmatpush1.bf16.msra.mxu0 %v1997
        %2560 = vmatprep.subr.bf16.mxu0 0
        %2561 = vmatpush1.bf16.msra.mxu0 %v1998
        %2562 = vmatprep.subr.bf16.mxu0 0
        %2563 = vmatpush1.bf16.msra.mxu0 %v1999
        %2564 = vmatprep.subr.bf16.mxu0 0
        %2565 = vmatpush1.bf16.msra.mxu0 %v2000
        %2566 = vmatprep.subr.bf16.mxu0 0
        %2567 = vmatpush1.bf16.msra.mxu0 %v2001
        %2568 = vmatprep.subr.bf16.mxu0 0
        %2569 = vmatpush1.bf16.msra.mxu0 %v2002
        %2570 = vmatprep.subr.bf16.mxu0 0
        %2571 = vmatpush1.bf16.msra.mxu0 %v2003
        %2572 = vmatprep.subr.bf16.mxu0 0
        %2573 = vmatpush1.bf16.msra.mxu0 %v2004
        %2574 = vmatprep.subr.bf16.mxu0 0
        %2575 = vmatpush1.bf16.msra.mxu0 %v2005
        %2576 = vmatprep.subr.bf16.mxu0 0
        %2577 = vmatpush1.bf16.msra.mxu0 %v2006
        %2578 = vmatprep.subr.bf16.mxu0 0
        %2579 = vmatpush1.bf16.msra.mxu0 %v2007
        %2580 = vmatprep.subr.bf16.mxu0 0
        %2581 = vmatpush1.bf16.msra.mxu0 %v2008
        %2582 = vmatprep.subr.bf16.mxu0 0
        %2583 = vmatpush1.bf16.msra.mxu0 %v2009
        %2584 = vmatprep.subr.bf16.mxu0 0
        %2585 = vmatpush1.bf16.msra.mxu0 %v2010
        %2586 = vmatprep.subr.bf16.mxu0 0
        %2587 = vmatpush1.bf16.msra.mxu0 %v2011
        %2588 = vmatprep.mubr.bf16.mxu0 %v756
        %2589 = vmatmul.mubr.bf16.gmra.mrb[0].mxu0 %v742
        %v2590 = vpop.f32.mrb[0].mxu0
        %v2591 = vadd.f32 %v2551, %v2590
        %v2592 = vpop.f32.mrb[0].mxu0
        %v2593 = vpop.f32.mrb[0].mxu0
        %v2594 = vpop.f32.mrb[0].mxu0
        %2595 = vdwg.mxu0
        %2596 = vmatprep.subr.bf16.mxu0 0
        %2597 = vmatpush1.bf16.msra.mxu0 %v2012
        %2598 = vmatprep.subr.bf16.mxu0 0
        %2599 = vmatpush1.bf16.msra.mxu0 %v2013
        %2600 = vmatprep.subr.bf16.mxu0 0
        %2601 = vmatpush1.bf16.msra.mxu0 %v2014
        %2602 = vmatprep.subr.bf16.mxu0 0
        %2603 = vmatpush1.bf16.msra.mxu0 %v2015
        %2604 = vmatprep.subr.bf16.mxu0 0
        %2605 = vmatpush1.bf16.msra.mxu0 %v2016
        %2606 = vmatprep.subr.bf16.mxu0 0
        %2607 = vmatpush1.bf16.msra.mxu0 %v2017
        %2608 = vmatprep.subr.bf16.mxu0 0
        %2609 = vmatpush1.bf16.msra.mxu0 %v2018
        %2610 = vmatprep.subr.bf16.mxu0 0
        %2611 = vmatpush1.bf16.msra.mxu0 %v2019
        %2612 = vmatprep.subr.bf16.mxu0 0
        %2613 = vmatpush1.bf16.msra.mxu0 %v2020
        %2614 = vmatprep.subr.bf16.mxu0 0
        %2615 = vmatpush1.bf16.msra.mxu0 %v2021
        %2616 = vmatprep.subr.bf16.mxu0 0
        %2617 = vmatpush1.bf16.msra.mxu0 %v2022
        %2618 = vmatprep.subr.bf16.mxu0 0
        %2619 = vmatpush1.bf16.msra.mxu0 %v2023
        %2620 = vmatprep.subr.bf16.mxu0 0
        %2621 = vmatpush1.bf16.msra.mxu0 %v2024
        %2622 = vmatprep.subr.bf16.mxu0 0
        %2623 = vmatpush1.bf16.msra.mxu0 %v2025
        %2624 = vmatprep.subr.bf16.mxu0 0
        %2625 = vmatpush1.bf16.msra.mxu0 %v2026
        %2626 = vmatprep.subr.bf16.mxu0 0
        %2627 = vmatpush1.bf16.msra.mxu0 %v2027
        %2628 = vmatprep.mubr.bf16.mxu0 %v760
        %2629 = vmatmul.mubr.bf16.gmra.mrb[0].mxu0 %v758
        %v2630 = vpop.f32.mrb[0].mxu0
        %v2631 = vadd.f32 %v2591, %v2630
        %v2632 = vpop.f32.mrb[0].mxu0
        %v2633 = vpop.f32.mrb[0].mxu0
        %v2634 = vpop.f32.mrb[0].mxu0
        %2635 = vdwg.mxu0
        %2636 = vmatprep.subr.bf16.mxu0 0
        %2637 = vmatpush1.bf16.msra.mxu0 %v2028
        %2638 = vmatprep.subr.bf16.mxu0 0
        %2639 = vmatpush1.bf16.msra.mxu0 %v2029
        %2640 = vmatprep.subr.bf16.mxu0 0
        %2641 = vmatpush1.bf16.msra.mxu0 %v2030
        %2642 = vmatprep.subr.bf16.mxu0 0
        %2643 = vmatpush1.bf16.msra.mxu0 %v2031
        %2644 = vmatprep.subr.bf16.mxu0 0
        %2645 = vmatpush1.bf16.msra.mxu0 %v2032
        %2646 = vmatprep.subr.bf16.mxu0 0
        %2647 = vmatpush1.bf16.msra.mxu0 %v2033
        %2648 = vmatprep.subr.bf16.mxu0 0
        %2649 = vmatpush1.bf16.msra.mxu0 %v2034
        %2650 = vmatprep.subr.bf16.mxu0 0
        %2651 = vmatpush1.bf16.msra.mxu0 %v2035
        %2652 = vmatprep.subr.bf16.mxu0 0
        %2653 = vmatpush1.bf16.msra.mxu0 %v2036
        %2654 = vmatprep.subr.bf16.mxu0 0
        %2655 = vmatpush1.bf16.msra.mxu0 %v2037
        %2656 = vmatprep.subr.bf16.mxu0 0
        %2657 = vmatpush1.bf16.msra.mxu0 %v2038
        %2658 = vmatprep.subr.bf16.mxu0 0
        %2659 = vmatpush1.bf16.msra.mxu0 %v2039
        %2660 = vmatprep.subr.bf16.mxu0 0
        %2661 = vmatpush1.bf16.msra.mxu0 %v2040
        %2662 = vmatprep.subr.bf16.mxu0 0
        %2663 = vmatpush1.bf16.msra.mxu0 %v2041
        %2664 = vmatprep.subr.bf16.mxu0 0
        %2665 = vmatpush1.bf16.msra.mxu0 %v2042
        %2666 = vmatprep.subr.bf16.mxu0 0
        %2667 = vmatpush1.bf16.msra.mxu0 %v2043
        %2668 = vmatprep.mubr.bf16.mxu0 %v798
        %2669 = vmatmul.mubr.bf16.gmra.mrb[0].mxu0 %v784
        %v2670 = vpop.f32.mrb[0].mxu0
        %v2671 = vadd.f32 %v2631, %v2670
        %v2672 = vpop.f32.mrb[0].mxu0
        %v2673 = vpop.f32.mrb[0].mxu0
        %v2674 = vpop.f32.mrb[0].mxu0
        %2675 = vdwg.mxu0
        %2676 = vmatprep.subr.bf16.mxu0 0
        %2677 = vmatpush1.bf16.msra.mxu0 %v2044
        %2678 = vmatprep.subr.bf16.mxu0 0
        %2679 = vmatpush1.bf16.msra.mxu0 %v2045
        %2680 = vmatprep.subr.bf16.mxu0 0
        %2681 = vmatpush1.bf16.msra.mxu0 %v2046
        %2682 = vmatprep.subr.bf16.mxu0 0
        %2683 = vmatpush1.bf16.msra.mxu0 %v2047
        %2684 = vmatprep.subr.bf16.mxu0 0
        %2685 = vmatpush1.bf16.msra.mxu0 %v2048
        %2686 = vmatprep.subr.bf16.mxu0 0
        %2687 = vmatpush1.bf16.msra.mxu0 %v2049
        %2688 = vmatprep.subr.bf16.mxu0 0
        %2689 = vmatpush1.bf16.msra.mxu0 %v2050
        %2690 = vmatprep.subr.bf16.mxu0 0
        %2691 = vmatpush1.bf16.msra.mxu0 %v2051
        %2692 = vmatprep.subr.bf16.mxu0 0
        %2693 = vmatpush1.bf16.msra.mxu0 %v2052
        %2694 = vmatprep.subr.bf16.mxu0 0
        %2695 = vmatpush1.bf16.msra.mxu0 %v2053
        %2696 = vmatprep.subr.bf16.mxu0 0
        %2697 = vmatpush1.bf16.msra.mxu0 %v2054
        %2698 = vmatprep.subr.bf16.mxu0 0
        %2699 = vmatpush1.bf16.msra.mxu0 %v2055
        %2700 = vmatprep.subr.bf16.mxu0 0
        %2701 = vmatpush1.bf16.msra.mxu0 %v2056
        %2702 = vmatprep.subr.bf16.mxu0 0
        %2703 = vmatpush1.bf16.msra.mxu0 %v2057
        %2704 = vmatprep.subr.bf16.mxu0 0
        %2705 = vmatpush1.bf16.msra.mxu0 %v2058
        %2706 = vmatprep.subr.bf16.mxu0 0
        %2707 = vmatpush1.bf16.msra.mxu0 %v2059
        %2708 = vmatprep.mubr.bf16.mxu0 %v808
        %2709 = vmatmul.mubr.bf16.gmra.mrb[0].mxu0 %v806
        %v2710 = vpop.f32.mrb[0].mxu0
        %v2711 = vadd.f32 %v2671, %v2710
        %v2712 = vpop.f32.mrb[0].mxu0
        %v2713 = vpop.f32.mrb[0].mxu0
        %v2714 = vpop.f32.mrb[0].mxu0
        %2715 = vdwg.mxu0
        %2716 = vmatprep.subr.bf16.mxu0 0
        %2717 = vmatpush1.bf16.msra.mxu0 %v2060
        %2718 = vmatprep.subr.bf16.mxu0 0
        %2719 = vmatpush1.bf16.msra.mxu0 %v2061
        %2720 = vmatprep.subr.bf16.mxu0 0
        %2721 = vmatpush1.bf16.msra.mxu0 %v2062
        %2722 = vmatprep.subr.bf16.mxu0 0
        %2723 = vmatpush1.bf16.msra.mxu0 %v2063
        %2724 = vmatprep.subr.bf16.mxu0 0
        %2725 = vmatpush1.bf16.msra.mxu0 %v2064
        %2726 = vmatprep.subr.bf16.mxu0 0
        %2727 = vmatpush1.bf16.msra.mxu0 %v2065
        %2728 = vmatprep.subr.bf16.mxu0 0
        %2729 = vmatpush1.bf16.msra.mxu0 %v2066
        %2730 = vmatprep.subr.bf16.mxu0 0
        %2731 = vmatpush1.bf16.msra.mxu0 %v2067
        %2732 = vmatprep.subr.bf16.mxu0 0
        %2733 = vmatpush1.bf16.msra.mxu0 %v2068
        %2734 = vmatprep.subr.bf16.mxu0 0
        %2735 = vmatpush1.bf16.msra.mxu0 %v2069
        %2736 = vmatprep.subr.bf16.mxu0 0
        %2737 = vmatpush1.bf16.msra.mxu0 %v2070
        %2738 = vmatprep.subr.bf16.mxu0 0
        %2739 = vmatpush1.bf16.msra.mxu0 %v2071
        %2740 = vmatprep.subr.bf16.mxu0 0
        %2741 = vmatpush1.bf16.msra.mxu0 %v2072
        %2742 = vmatprep.subr.bf16.mxu0 0
        %2743 = vmatpush1.bf16.msra.mxu0 %v2073
        %2744 = vmatprep.subr.bf16.mxu0 0
        %2745 = vmatpush1.bf16.msra.mxu0 %v2074
        %2746 = vmatprep.subr.bf16.mxu0 0
        %2747 = vmatpush1.bf16.msra.mxu0 %v2075
        %2748 = vmatprep.mubr.bf16.mxu0 %v805
        %2749 = vmatmul.mubr.bf16.gmra.mrb[0].mxu0 %v791
        %v2750 = vpop.f32.mrb[0].mxu0
        %v2751 = vadd.f32 %v2711, %v2750
        %v2752 = vpop.f32.mrb[0].mxu0
        %v2753 = vpop.f32.mrb[0].mxu0
        %v2754 = vpop.f32.mrb[0].mxu0
        %2755 = vdwg.mxu0
        %2756 = vmatprep.subr.bf16.mxu0 0
        %2757 = vmatpush1.bf16.msra.mxu0 %v2076
        %2758 = vmatprep.subr.bf16.mxu0 0
        %2759 = vmatpush1.bf16.msra.mxu0 %v2077
        %2760 = vmatprep.subr.bf16.mxu0 0
        %2761 = vmatpush1.bf16.msra.mxu0 %v2078
        %2762 = vmatprep.subr.bf16.mxu0 0
        %2763 = vmatpush1.bf16.msra.mxu0 %v2079
        %2764 = vmatprep.subr.bf16.mxu0 0
        %2765 = vmatpush1.bf16.msra.mxu0 %v2080
        %2766 = vmatprep.subr.bf16.mxu0 0
        %2767 = vmatpush1.bf16.msra.mxu0 %v2081
        %2768 = vmatprep.subr.bf16.mxu0 0
        %2769 = vmatpush1.bf16.msra.mxu0 %v2082
        %2770 = vmatprep.subr.bf16.mxu0 0
        %2771 = vmatpush1.bf16.msra.mxu0 %v2083
        %2772 = vmatprep.subr.bf16.mxu0 0
        %2773 = vmatpush1.bf16.msra.mxu0 %v2084
        %2774 = vmatprep.subr.bf16.mxu0 0
        %2775 = vmatpush1.bf16.msra.mxu0 %v2085
        %2776 = vmatprep.subr.bf16.mxu0 0
        %2777 = vmatpush1.bf16.msra.mxu0 %v2086
        %2778 = vmatprep.subr.bf16.mxu0 0
        %2779 = vmatpush1.bf16.msra.mxu0 %v2087
        %2780 = vmatprep.subr.bf16.mxu0 0
        %2781 = vmatpush1.bf16.msra.mxu0 %v2088
        %2782 = vmatprep.subr.bf16.mxu0 0
        %2783 = vmatpush1.bf16.msra.mxu0 %v2089
        %2784 = vmatprep.subr.bf16.mxu0 0
        %2785 = vmatpush1.bf16.msra.mxu0 %v2090
        %2786 = vmatprep.subr.bf16.mxu0 0
        %2787 = vmatpush1.bf16.msra.mxu0 %v2091
        %2788 = vmatprep.mubr.bf16.mxu0 %v809
        %2789 = vmatmul.mubr.bf16.gmra.mrb[0].mxu0 %v807
        %v2790 = vpop.f32.mrb[0].mxu0
        %v2791 = vadd.f32 %v2751, %v2790
        %v2792 = vpop.f32.mrb[0].mxu0
        %v2793 = vpop.f32.mrb[0].mxu0
        %v2794 = vpop.f32.mrb[0].mxu0
        %2795 = vdwg.mxu0
        %2796 = vmatprep.subr.bf16.mxu0 0
        %2797 = vmatpush1.bf16.msra.mxu0 %v2092
        %2798 = vmatprep.subr.bf16.mxu0 0
        %2799 = vmatpush1.bf16.msra.mxu0 %v2093
        %2800 = vmatprep.subr.bf16.mxu0 0
        %2801 = vmatpush1.bf16.msra.mxu0 %v2094
        %2802 = vmatprep.subr.bf16.mxu0 0
        %2803 = vmatpush1.bf16.msra.mxu0 %v2095
        %2804 = vmatprep.subr.bf16.mxu0 0
        %2805 = vmatpush1.bf16.msra.mxu0 %v2096
        %2806 = vmatprep.subr.bf16.mxu0 0
        %2807 = vmatpush1.bf16.msra.mxu0 %v2097
        %2808 = vmatprep.subr.bf16.mxu0 0
        %2809 = vmatpush1.bf16.msra.mxu0 %v2098
        %2810 = vmatprep.subr.bf16.mxu0 0
        %2811 = vmatpush1.bf16.msra.mxu0 %v2099
        %2812 = vmatprep.subr.bf16.mxu0 0
        %2813 = vmatpush1.bf16.msra.mxu0 %v2100
        %2814 = vmatprep.subr.bf16.mxu0 0
        %2815 = vmatpush1.bf16.msra.mxu0 %v2101
        %2816 = vmatprep.subr.bf16.mxu0 0
        %2817 = vmatpush1.bf16.msra.mxu0 %v2102
        %2818 = vmatprep.subr.bf16.mxu0 0
        %2819 = vmatpush1.bf16.msra.mxu0 %v2103
        %2820 = vmatprep.subr.bf16.mxu0 0
        %2821 = vmatpush1.bf16.msra.mxu0 %v2104
        %2822 = vmatprep.subr.bf16.mxu0 0
        %2823 = vmatpush1.bf16.msra.mxu0 %v2105
        %2824 = vmatprep.subr.bf16.mxu0 0
        %2825 = vmatpush1.bf16.msra.mxu0 %v2106
        %2826 = vmatprep.subr.bf16.mxu0 0
        %2827 = vmatpush1.bf16.msra.mxu0 %v2107
        %2828 = vmatprep.mubr.bf16.mxu0 %v847
        %2829 = vmatmul.mubr.bf16.gmra.mrb[0].mxu0 %v833
        %v2830 = vpop.f32.mrb[0].mxu0
        %v2831 = vadd.f32 %v2791, %v2830
        %v2832 = vpop.f32.mrb[0].mxu0
        %v2833 = vpop.f32.mrb[0].mxu0
        %v2834 = vpop.f32.mrb[0].mxu0
        %2835 = vdwg.mxu0
        %2836 = vmatprep.subr.bf16.mxu0 0
        %2837 = vmatpush1.bf16.msra.mxu0 %v2108
        %2838 = vmatprep.subr.bf16.mxu0 0
        %2839 = vmatpush1.bf16.msra.mxu0 %v2109
        %2840 = vmatprep.subr.bf16.mxu0 0
        %2841 = vmatpush1.bf16.msra.mxu0 %v2110
        %2842 = vmatprep.subr.bf16.mxu0 0
        %2843 = vmatpush1.bf16.msra.mxu0 %v2111
        %2844 = vmatprep.subr.bf16.mxu0 0
        %2845 = vmatpush1.bf16.msra.mxu0 %v2112
        %2846 = vmatprep.subr.bf16.mxu0 0
        %2847 = vmatpush1.bf16.msra.mxu0 %v2113
        %2848 = vmatprep.subr.bf16.mxu0 0
        %2849 = vmatpush1.bf16.msra.mxu0 %v2114
        %2850 = vmatprep.subr.bf16.mxu0 0
        %2851 = vmatpush1.bf16.msra.mxu0 %v2115
        %2852 = vmatprep.subr.bf16.mxu0 0
        %2853 = vmatpush1.bf16.msra.mxu0 %v2116
        %2854 = vmatprep.subr.bf16.mxu0 0
        %2855 = vmatpush1.bf16.msra.mxu0 %v2117
        %2856 = vmatprep.subr.bf16.mxu0 0
        %2857 = vmatpush1.bf16.msra.mxu0 %v2118
        %2858 = vmatprep.subr.bf16.mxu0 0
        %2859 = vmatpush1.bf16.msra.mxu0 %v2119
        %2860 = vmatprep.subr.bf16.mxu0 0
        %2861 = vmatpush1.bf16.msra.mxu0 %v2120
        %2862 = vmatprep.subr.bf16.mxu0 0
        %2863 = vmatpush1.bf16.msra.mxu0 %v2121
        %2864 = vmatprep.subr.bf16.mxu0 0
        %2865 = vmatpush1.bf16.msra.mxu0 %v2122
        %2866 = vmatprep.subr.bf16.mxu0 0
        %2867 = vmatpush1.bf16.msra.mxu0 %v2123
        %2868 = vmatprep.mubr.bf16.mxu0 %v857
        %2869 = vmatmul.mubr.bf16.gmra.mrb[0].mxu0 %v855
        %v2870 = vpop.f32.mrb[0].mxu0
        %v2871 = vadd.f32 %v2831, %v2870
        %v2872 = vpop.f32.mrb[0].mxu0
        %v2873 = vpop.f32.mrb[0].mxu0
        %v2874 = vpop.f32.mrb[0].mxu0
        %2875 = vdwg.mxu0
        %2876 = vmatprep.subr.bf16.mxu0 0
        %2877 = vmatpush1.bf16.msra.mxu0 %v2124
        %2878 = vmatprep.subr.bf16.mxu0 0
        %2879 = vmatpush1.bf16.msra.mxu0 %v2125
        %2880 = vmatprep.subr.bf16.mxu0 0
        %2881 = vmatpush1.bf16.msra.mxu0 %v2126
        %2882 = vmatprep.subr.bf16.mxu0 0
        %2883 = vmatpush1.bf16.msra.mxu0 %v2127
        %2884 = vmatprep.subr.bf16.mxu0 0
        %2885 = vmatpush1.bf16.msra.mxu0 %v2128
        %2886 = vmatprep.subr.bf16.mxu0 0
        %2887 = vmatpush1.bf16.msra.mxu0 %v2129
        %2888 = vmatprep.subr.bf16.mxu0 0
        %2889 = vmatpush1.bf16.msra.mxu0 %v2130
        %2890 = vmatprep.subr.bf16.mxu0 0
        %2891 = vmatpush1.bf16.msra.mxu0 %v2131
        %2892 = vmatprep.subr.bf16.mxu0 0
        %2893 = vmatpush1.bf16.msra.mxu0 %v2132
        %2894 = vmatprep.subr.bf16.mxu0 0
        %2895 = vmatpush1.bf16.msra.mxu0 %v2133
        %2896 = vmatprep.subr.bf16.mxu0 0
        %2897 = vmatpush1.bf16.msra.mxu0 %v2134
        %2898 = vmatprep.subr.bf16.mxu0 0
        %2899 = vmatpush1.bf16.msra.mxu0 %v2135
        %2900 = vmatprep.subr.bf16.mxu0 0
        %2901 = vmatpush1.bf16.msra.mxu0 %v2136
        %2902 = vmatprep.subr.bf16.mxu0 0
        %2903 = vmatpush1.bf16.msra.mxu0 %v2137
        %2904 = vmatprep.subr.bf16.mxu0 0
        %2905 = vmatpush1.bf16.msra.mxu0 %v2138
        %2906 = vmatprep.subr.bf16.mxu0 0
        %2907 = vmatpush1.bf16.msra.mxu0 %v2139
        %2908 = vmatprep.mubr.bf16.mxu0 %v854
        %2909 = vmatmul.mubr.bf16.gmra.mrb[0].mxu0 %v840
        %v2910 = vpop.f32.mrb[0].mxu0
        %v2911 = vadd.f32 %v2871, %v2910
        %v2912 = vpop.f32.mrb[0].mxu0
        %v2913 = vpop.f32.mrb[0].mxu0
        %v2914 = vpop.f32.mrb[0].mxu0
        %2915 = vdwg.mxu0
        %2916 = vmatprep.subr.bf16.mxu0 0
        %2917 = vmatpush1.bf16.msra.mxu0 %v2140
        %2918 = vmatprep.subr.bf16.mxu0 0
        %2919 = vmatpush1.bf16.msra.mxu0 %v2141
        %2920 = vmatprep.subr.bf16.mxu0 0
        %2921 = vmatpush1.bf16.msra.mxu0 %v2142
        %2922 = vmatprep.subr.bf16.mxu0 0
        %2923 = vmatpush1.bf16.msra.mxu0 %v2143
        %2924 = vmatprep.subr.bf16.mxu0 0
        %2925 = vmatpush1.bf16.msra.mxu0 %v2144
        %2926 = vmatprep.subr.bf16.mxu0 0
        %2927 = vmatpush1.bf16.msra.mxu0 %v2145
        %2928 = vmatprep.subr.bf16.mxu0 0
        %2929 = vmatpush1.bf16.msra.mxu0 %v2146
        %2930 = vmatprep.subr.bf16.mxu0 0
        %2931 = vmatpush1.bf16.msra.mxu0 %v2147
        %2932 = vmatprep.subr.bf16.mxu0 0
        %2933 = vmatpush1.bf16.msra.mxu0 %v2148
        %2934 = vmatprep.subr.bf16.mxu0 0
        %2935 = vmatpush1.bf16.msra.mxu0 %v2149
        %2936 = vmatprep.subr.bf16.mxu0 0
        %2937 = vmatpush1.bf16.msra.mxu0 %v2150
        %2938 = vmatprep.subr.bf16.mxu0 0
        %2939 = vmatpush1.bf16.msra.mxu0 %v2151
        %2940 = vmatprep.subr.bf16.mxu0 0
        %2941 = vmatpush1.bf16.msra.mxu0 %v2152
        %2942 = vmatprep.subr.bf16.mxu0 0
        %2943 = vmatpush1.bf16.msra.mxu0 %v2153
        %2944 = vmatprep.subr.bf16.mxu0 0
        %2945 = vmatpush1.bf16.msra.mxu0 %v2154
        %2946 = vmatprep.subr.bf16.mxu0 0
        %2947 = vmatpush1.bf16.msra.mxu0 %v2155
        %2948 = vmatprep.mubr.bf16.mxu0 %v858
        %2949 = vmatmul.mubr.bf16.gmra.mrb[0].mxu0 %v856
        %v2950 = vpop.f32.mrb[0].mxu0
        %v2951 = vadd.f32 %v2911, %v2950
        %v2952 = vpop.f32.mrb[0].mxu0
        %v2953 = vpop.f32.mrb[0].mxu0
        %v2954 = vpop.f32.mrb[0].mxu0
        %2955 = vdwg.mxu0
        %2956 = vmatprep.subr.bf16.mxu0 0
        %2957 = vmatpush1.bf16.msra.mxu0 %v2156
        %2958 = vmatprep.subr.bf16.mxu0 0
        %2959 = vmatpush1.bf16.msra.mxu0 %v2157
        %2960 = vmatprep.subr.bf16.mxu0 0
        %2961 = vmatpush1.bf16.msra.mxu0 %v2158
        %2962 = vmatprep.subr.bf16.mxu0 0
        %2963 = vmatpush1.bf16.msra.mxu0 %v2159
        %2964 = vmatprep.subr.bf16.mxu0 0
        %2965 = vmatpush1.bf16.msra.mxu0 %v2160
        %2966 = vmatprep.subr.bf16.mxu0 0
        %2967 = vmatpush1.bf16.msra.mxu0 %v2161
        %2968 = vmatprep.subr.bf16.mxu0 0
        %2969 = vmatpush1.bf16.msra.mxu0 %v2162
        %2970 = vmatprep.subr.bf16.mxu0 0
        %2971 = vmatpush1.bf16.msra.mxu0 %v2163
        %2972 = vmatprep.subr.bf16.mxu0 0
        %2973 = vmatpush1.bf16.msra.mxu0 %v2164
        %2974 = vmatprep.subr.bf16.mxu0 0
        %2975 = vmatpush1.bf16.msra.mxu0 %v2165
        %2976 = vmatprep.subr.bf16.mxu0 0
        %2977 = vmatpush1.bf16.msra.mxu0 %v2166
        %2978 = vmatprep.subr.bf16.mxu0 0
        %2979 = vmatpush1.bf16.msra.mxu0 %v2167
        %2980 = vmatprep.subr.bf16.mxu0 0
        %2981 = vmatpush1.bf16.msra.mxu0 %v2168
        %2982 = vmatprep.subr.bf16.mxu0 0
        %2983 = vmatpush1.bf16.msra.mxu0 %v2169
        %2984 = vmatprep.subr.bf16.mxu0 0
        %2985 = vmatpush1.bf16.msra.mxu0 %v2170
        %2986 = vmatprep.subr.bf16.mxu0 0
        %2987 = vmatpush1.bf16.msra.mxu0 %v2171
        %2988 = vmatprep.mubr.bf16.mxu0 %v896
        %2989 = vmatmul.mubr.bf16.gmra.mrb[0].mxu0 %v882
        %v2990 = vpop.f32.mrb[0].mxu0
        %v2991 = vadd.f32 %v2951, %v2990
        %v2992 = vpop.f32.mrb[0].mxu0
        %v2993 = vpop.f32.mrb[0].mxu0
        %v2994 = vpop.f32.mrb[0].mxu0
        %2995 = vdwg.mxu0
        %2996 = vmatprep.subr.bf16.mxu0 0
        %2997 = vmatpush1.bf16.msra.mxu0 %v2172
        %2998 = vmatprep.subr.bf16.mxu0 0
        %2999 = vmatpush1.bf16.msra.mxu0 %v2173
        %3000 = vmatprep.subr.bf16.mxu0 0
        %3001 = vmatpush1.bf16.msra.mxu0 %v2174
        %3002 = vmatprep.subr.bf16.mxu0 0
        %3003 = vmatpush1.bf16.msra.mxu0 %v2175
        %3004 = vmatprep.subr.bf16.mxu0 0
        %3005 = vmatpush1.bf16.msra.mxu0 %v2176
        %3006 = vmatprep.subr.bf16.mxu0 0
        %3007 = vmatpush1.bf16.msra.mxu0 %v2177
        %3008 = vmatprep.subr.bf16.mxu0 0
        %3009 = vmatpush1.bf16.msra.mxu0 %v2178
        %3010 = vmatprep.subr.bf16.mxu0 0
        %3011 = vmatpush1.bf16.msra.mxu0 %v2179
        %3012 = vmatprep.subr.bf16.mxu0 0
        %3013 = vmatpush1.bf16.msra.mxu0 %v2180
        %3014 = vmatprep.subr.bf16.mxu0 0
        %3015 = vmatpush1.bf16.msra.mxu0 %v2181
        %3016 = vmatprep.subr.bf16.mxu0 0
        %3017 = vmatpush1.bf16.msra.mxu0 %v2182
        %3018 = vmatprep.subr.bf16.mxu0 0
        %3019 = vmatpush1.bf16.msra.mxu0 %v2183
        %3020 = vmatprep.subr.bf16.mxu0 0
        %3021 = vmatpush1.bf16.msra.mxu0 %v2184
        %3022 = vmatprep.subr.bf16.mxu0 0
        %3023 = vmatpush1.bf16.msra.mxu0 %v2185
        %3024 = vmatprep.subr.bf16.mxu0 0
        %3025 = vmatpush1.bf16.msra.mxu0 %v2186
        %3026 = vmatprep.subr.bf16.mxu0 0
        %3027 = vmatpush1.bf16.msra.mxu0 %v2187
        %3028 = vmatprep.mubr.bf16.mxu0 %v906
        %3029 = vmatmul.mubr.bf16.gmra.mrb[0].mxu0 %v904
        %v3030 = vpop.f32.mrb[0].mxu0
        %v3031 = vadd.f32 %v2991, %v3030
        %v3032 = vpop.f32.mrb[0].mxu0
        %v3033 = vpop.f32.mrb[0].mxu0
        %v3034 = vpop.f32.mrb[0].mxu0
        %3035 = vdwg.mxu0
        %3036 = vmatprep.subr.bf16.mxu0 0
        %3037 = vmatpush1.bf16.msra.mxu0 %v2188
        %3038 = vmatprep.subr.bf16.mxu0 0
        %3039 = vmatpush1.bf16.msra.mxu0 %v2189
        %3040 = vmatprep.subr.bf16.mxu0 0
        %3041 = vmatpush1.bf16.msra.mxu0 %v2190
        %3042 = vmatprep.subr.bf16.mxu0 0
        %3043 = vmatpush1.bf16.msra.mxu0 %v2191
        %3044 = vmatprep.subr.bf16.mxu0 0
        %3045 = vmatpush1.bf16.msra.mxu0 %v2192
        %3046 = vmatprep.subr.bf16.mxu0 0
        %3047 = vmatpush1.bf16.msra.mxu0 %v2193
        %3048 = vmatprep.subr.bf16.mxu0 0
        %3049 = vmatpush1.bf16.msra.mxu0 %v2194
        %3050 = vmatprep.subr.bf16.mxu0 0
        %3051 = vmatpush1.bf16.msra.mxu0 %v2195
        %3052 = vmatprep.subr.bf16.mxu0 0
        %3053 = vmatpush1.bf16.msra.mxu0 %v2196
        %3054 = vmatprep.subr.bf16.mxu0 0
        %3055 = vmatpush1.bf16.msra.mxu0 %v2197
        %3056 = vmatprep.subr.bf16.mxu0 0
        %3057 = vmatpush1.bf16.msra.mxu0 %v2198
        %3058 = vmatprep.subr.bf16.mxu0 0
        %3059 = vmatpush1.bf16.msra.mxu0 %v2199
        %3060 = vmatprep.subr.bf16.mxu0 0
        %3061 = vmatpush1.bf16.msra.mxu0 %v2200
        %3062 = vmatprep.subr.bf16.mxu0 0
        %3063 = vmatpush1.bf16.msra.mxu0 %v2201
        %3064 = vmatprep.subr.bf16.mxu0 0
        %3065 = vmatpush1.bf16.msra.mxu0 %v2202
        %3066 = vmatprep.subr.bf16.mxu0 0
        %3067 = vmatpush1.bf16.msra.mxu0 %v2203
        %3068 = vmatprep.mubr.bf16.mxu0 %v903
        %3069 = vmatmul.mubr.bf16.gmra.mrb[0].mxu0 %v889
        %v3070 = vpop.f32.mrb[0].mxu0
        %v3071 = vadd.f32 %v3031, %v3070
        %v3072 = vpop.f32.mrb[0].mxu0
        %v3073 = vpop.f32.mrb[0].mxu0
        %v3074 = vpop.f32.mrb[0].mxu0
        %3075 = vdwg.mxu0
        %3076 = vmatprep.subr.bf16.mxu0 0
        %3077 = vmatpush1.bf16.msra.mxu0 %v2204
        %3078 = vmatprep.subr.bf16.mxu0 0
        %3079 = vmatpush1.bf16.msra.mxu0 %v2205
        %3080 = vmatprep.subr.bf16.mxu0 0
        %3081 = vmatpush1.bf16.msra.mxu0 %v2206
        %3082 = vmatprep.subr.bf16.mxu0 0
        %3083 = vmatpush1.bf16.msra.mxu0 %v2207
        %3084 = vmatprep.subr.bf16.mxu0 0
        %3085 = vmatpush1.bf16.msra.mxu0 %v2208
        %3086 = vmatprep.subr.bf16.mxu0 0
        %3087 = vmatpush1.bf16.msra.mxu0 %v2209
        %3088 = vmatprep.subr.bf16.mxu0 0
        %3089 = vmatpush1.bf16.msra.mxu0 %v2210
        %3090 = vmatprep.subr.bf16.mxu0 0
        %3091 = vmatpush1.bf16.msra.mxu0 %v2211
        %3092 = vmatprep.subr.bf16.mxu0 0
        %3093 = vmatpush1.bf16.msra.mxu0 %v2212
        %3094 = vmatprep.subr.bf16.mxu0 0
        %3095 = vmatpush1.bf16.msra.mxu0 %v2213
        %3096 = vmatprep.subr.bf16.mxu0 0
        %3097 = vmatpush1.bf16.msra.mxu0 %v2214
        %3098 = vmatprep.subr.bf16.mxu0 0
        %3099 = vmatpush1.bf16.msra.mxu0 %v2215
        %3100 = vmatprep.subr.bf16.mxu0 0
        %3101 = vmatpush1.bf16.msra.mxu0 %v2216
        %3102 = vmatprep.subr.bf16.mxu0 0
        %3103 = vmatpush1.bf16.msra.mxu0 %v2217
        %3104 = vmatprep.subr.bf16.mxu0 0
        %3105 = vmatpush1.bf16.msra.mxu0 %v2218
        %3106 = vmatprep.subr.bf16.mxu0 0
        %3107 = vmatpush1.bf16.msra.mxu0 %v2219
        %3108 = vmatprep.mubr.bf16.mxu0 %v907
        %3109 = vmatmul.mubr.bf16.gmra.mrb[0].mxu0 %v905
        %v3110 = vpop.f32.mrb[0].mxu0
        %v3111 = vadd.f32 %v3071, %v3110
        %v3112 = vpop.f32.mrb[0].mxu0
        %v3113 = vpop.f32.mrb[0].mxu0
        %v3114 = vpop.f32.mrb[0].mxu0
        %3115 = vdwg.mxu0
        %v3116 = vadd.f32 %v191, %v3111
        %3117 = vst [vmem:[#allocation2] sm:$0x3] %v3116
        // Predicated region
        $region37: #{cnn2d_nopooling_forward.7} parent=31 // pred_check
          %p3118 = pneg %p101
        $region38: #{cnn2d_nopooling_forward.7} parent=31 // pred_check_branch
          %3120 = sbr.rel (%p3118) target = $region40
        $region39: #{cnn2d_nopooling_forward.7} parent=31 // pred_region
          %s3122 = ssub.s32 32, 32
          %3123 = vsyncadd [#allocation3], %s3122
          %s3125 = sshll.u32 [#allocation2], 4
          %s3126 = int_to_ptr.vmem [resolvable:$true] %s3125
          %3128 = dma.vmem_to_hbm [thread:$0]  %s3126, 32, %s3, [#allocation3]
        $region40: #{cnn2d_nopooling_forward.7} parent=31 // pred_fallthru
          _
        // Predicated region
        $region41: #{cnn2d_nopooling_forward.7} parent=31 // pred_check
          %p3129 = pneg %p101
        $region42: #{cnn2d_nopooling_forward.7} parent=31 // pred_check_branch
          %3131 = sbr.rel (%p3129) target = $region44
        $region43: #{cnn2d_nopooling_forward.7} parent=31 // pred_region
          %3132 = dma.done [#allocation3], 32
        $region44: #{cnn2d_nopooling_forward.7} parent=31 // pred_fallthru
          _
      $region32: #{cnn2d_nopooling_forward.7} parent=5 // pred_fallthru
        _
      %p3133 = scmp.le.s32.totalorder 2, %s10
      // Predicated region
      $region45: #{cnn2d_nopooling_forward.7} parent=5 // pred_check
        %p3134 = pneg %p3133
      $region46: #{cnn2d_nopooling_forward.7} parent=5 // pred_check_branch
        %3136 = sbr.rel (%p3134) target = $region48
      $region47: #{cnn2d_nopooling_forward.7} parent=5 // pred_region
        %s3137 = ssub.s32 %s10, 2
      $region48: #{cnn2d_nopooling_forward.7} parent=5 // pred_fallthru
        _
    $region6: #{cnn2d_nopooling_forward.7} parent=1 // loop_footer
      %s14 = sadd.s32 1, %s10
    $region7: #{cnn2d_nopooling_forward.7} parent=1 // loop_footer_branch
      %9 = sbr.rel target = $region3
    $region8: #{cnn2d_nopooling_forward.7} parent=1 // loop_exit
      _
    %3138 = vsyncpa [#allocation3], 1
    %s3139 = scalar_lea.sflag [#allocation3], 1
    %3140 = vsyncpa %s3139, 1

</llo_original>
